<compile_context>
chip_gen: v7x
topology: tpu7x:2x2x1
jax: 0.10.0
libtpu: 0.0.40
codegen_flags: <defaults>
</compile_context>

<pallas_src>
import jax
import jax.numpy as jnp
from jax.experimental import pallas as pl
from jax.experimental.pallas import tpu as pltpu

# --- hyperparameters consistent with the PyTorch module ---
N_EMBED = 256          # n_embed (module value; lane-dense: multiple of 128)
N_HEADS = 4            # n_heads
HEAD_SIZE = N_EMBED // N_HEADS
SEQ_LEN = 8            # T  (<= block_size, so the causal tril mask is just T x T)
BATCH = 2
LN_EPS = 1e-5          # torch.nn.LayerNorm default


def _layer_norm(v, w, b):
    # w, b are (1, C) rows; broadcast over (T, C).
    mu = jnp.mean(v, axis=-1, keepdims=True)
    var = jnp.mean((v - mu) ** 2, axis=-1, keepdims=True)
    return (v - mu) * jax.lax.rsqrt(var + LN_EPS) * w + b


def block_kernel(x_ref,
                 ln1w_ref, ln1b_ref,
                 wqkv_ref,
                 wo_ref, bo_ref,
                 ln2w_ref, ln2b_ref,
                 w1_ref, b1_ref, w2_ref, b2_ref,
                 out_ref):
    # One grid step == one batch element.  x_ref block is (1, T, C).
    x = x_ref[0]                                   # (T, C)
    T, C = x.shape
    hs = C // N_HEADS

    # ---- ln1 + multi-head causal self-attention ----
    y = _layer_norm(x, ln1w_ref[...], ln1b_ref[...])

    # Fused QKV: one (T, C) @ (C, 3C) MXU pass.  Wq already carries hs**-0.5.
    qkv = jnp.dot(y, wqkv_ref[...], preferred_element_type=jnp.float32)   # (T, 3C)

    # Causal additive bias, built once per invocation (no per-head where/select).
    row = jax.lax.broadcasted_iota(jnp.int32, (T, T), 0)
    col = jax.lax.broadcasted_iota(jnp.int32, (T, T), 1)
    mask_bias = jnp.where(row >= col, 0.0, -1e30).astype(jnp.float32)     # (T, T)

    wo = wo_ref[...]                               # (C, C)
    attn = jnp.zeros((T, C), jnp.float32)
    for h in range(N_HEADS):                       # static unroll over heads
        qh = qkv[:, h * hs:(h + 1) * hs]                       # pre-scaled q
        kh = qkv[:, C + h * hs:C + (h + 1) * hs]
        vh = qkv[:, 2 * C + h * hs:2 * C + (h + 1) * hs]
        att = jnp.dot(qh, kh.T, preferred_element_type=jnp.float32) + mask_bias
        att = att - jnp.max(att, axis=-1, keepdims=True)
        p = jnp.exp(att)
        p = p * pl.reciprocal(jnp.sum(p, axis=-1, keepdims=True), approx=True)
        # dropout on attention probs: identity in eval mode
        head_out = jnp.dot(p, vh, preferred_element_type=jnp.float32)     # (T, hs)
        # Accumulate through the output projection -> no head concatenate.
        attn = attn + jnp.dot(head_out, wo[h * hs:(h + 1) * hs, :],
                              preferred_element_type=jnp.float32)
    attn = attn + bo_ref[...]
    # proj dropout: identity in eval mode
    x1 = x + attn                                  # residual 1

    # ---- ln2 + feed-forward ----
    z = _layer_norm(x1, ln2w_ref[...], ln2b_ref[...])
    h1 = jnp.dot(z, w1_ref[...], preferred_element_type=jnp.float32) + b1_ref[...]
    h1 = jnp.maximum(h1, 0.0)                      # ReLU
    ffn = jnp.dot(h1, w2_ref[...], preferred_element_type=jnp.float32) + b2_ref[...]
    # ffd dropout: identity in eval mode
    out_ref[0] = x1 + ffn                          # residual 2
    # TODO(synk): training-mode dropout (stochastic) not implemented; eval-mode identity only.


def gpt_block(x, params):
    B, T, C = x.shape
    H = 4 * C
    hs = C // N_HEADS

    # Fuse QKV into one (C, 3C) weight; fold the 1/sqrt(head_size) scale into Wq.
    wqkv = jnp.concatenate(
        [params["wq"] * (hs ** -0.5), params["wk"], params["wv"]], axis=1)

    row2d = lambda v: v.reshape(1, -1)             # 1-D params -> (1, N) rows

    def const_spec(shape):
        return pl.BlockSpec(shape, lambda b: tuple(0 for _ in shape))

    in_specs = [
        pl.BlockSpec((1, T, C), lambda b: (b, 0, 0)),  # x
        const_spec((1, C)), const_spec((1, C)),        # ln1 w, b
        const_spec((C, 3 * C)),                        # fused wqkv
        const_spec((C, C)), const_spec((1, C)),        # attn out proj w, b
        const_spec((1, C)), const_spec((1, C)),        # ln2 w, b
        const_spec((C, H)), const_spec((1, H)),        # ffn w1, b1
        const_spec((H, C)), const_spec((1, C)),        # ffn w2, b2
    ]

    return pl.pallas_call(
        block_kernel,
        out_shape=jax.ShapeDtypeStruct((B, T, C), jnp.float32),
        grid_spec=pltpu.PrefetchScalarGridSpec(
            num_scalar_prefetch=0,
            grid=(B,),
            in_specs=in_specs,
            out_specs=pl.BlockSpec((1, T, C), lambda b: (b, 0, 0)),
        ),
        compiler_params=pltpu.CompilerParams(
            dimension_semantics=("parallel",)),
    )(x,
      row2d(params["ln1_w"]), row2d(params["ln1_b"]),
      wqkv,
      params["wo"], row2d(params["bo"]),
      row2d(params["ln2_w"]), row2d(params["ln2_b"]),
      params["w1"], row2d(params["b1"]),
      params["w2"], row2d(params["b2"]))


def make_params(key, C=N_EMBED):
    H = 4 * C
    ks = jax.random.split(key, 10)
    scale = 0.02
    return {
        "ln1_w": jnp.ones((C,), jnp.float32),
        "ln1_b": jnp.zeros((C,), jnp.float32),
        # per-head Wq/Wk/Wv concatenated along output dim, pre-transposed: (C, C)
        "wq": scale * jax.random.normal(ks[0], (C, C), jnp.float32),
        "wk": scale * jax.random.normal(ks[1], (C, C), jnp.float32),
        "wv": scale * jax.random.normal(ks[2], (C, C), jnp.float32),
        "wo": scale * jax.random.normal(ks[3], (C, C), jnp.float32),
        "bo": scale * jax.random.normal(ks[4], (C,), jnp.float32),
        "ln2_w": jnp.ones((C,), jnp.float32),
        "ln2_b": jnp.zeros((C,), jnp.float32),
        "w1": scale * jax.random.normal(ks[5], (C, H), jnp.float32),
        "b1": scale * jax.random.normal(ks[6], (H,), jnp.float32),
        "w2": scale * jax.random.normal(ks[7], (H, C), jnp.float32),
        "b2": scale * jax.random.normal(ks[8], (C,), jnp.float32),
    }


def reference_block(x, p):
    """Pure-JAX reference mirroring the PyTorch forward (eval mode)."""
    def ln(v, w, b):
        mu = v.mean(-1, keepdims=True)
        var = ((v - mu) ** 2).mean(-1, keepdims=True)
        return (v - mu) / jnp.sqrt(var + LN_EPS) * w + b

    B, T, C = x.shape
    hs = C // N_HEADS
    y = ln(x, p["ln1_w"], p["ln1_b"])
    q = y @ p["wq"]; k = y @ p["wk"]; v = y @ p["wv"]
    mask = jnp.tril(jnp.ones((T, T), bool))
    outs = []
    for h in range(N_HEADS):
        qh, kh, vh = (a[..., h * hs:(h + 1) * hs] for a in (q, k, v))
        att = (qh @ jnp.swapaxes(kh, -1, -2)) * hs ** -0.5
        att = jnp.where(mask, att, -jnp.inf)
        att = jax.nn.softmax(att, axis=-1)
        outs.append(att @ vh)
    attn = jnp.concatenate(outs, -1) @ p["wo"] + p["bo"]
    x1 = x + attn
    z = ln(x1, p["ln2_w"], p["ln2_b"])
    ffn = jnp.maximum(z @ p["w1"] + p["b1"], 0.0) @ p["w2"] + p["b2"]
    return x1 + ffn


if __name__ == "__main__":
    key = jax.random.PRNGKey(0)
    kx, kp = jax.random.split(key)
    x = jax.random.normal(kx, (BATCH, SEQ_LEN, N_EMBED), jnp.float32)
    params = make_params(kp)

    out = jax.block_until_ready(gpt_block(x, params))
    ref = reference_block(x, params)

    assert out.shape == (BATCH, SEQ_LEN, N_EMBED)
    max_err = float(jnp.max(jnp.abs(out - ref)))
    # approx=True reciprocal has ~2^-12 relative error -> tolerance loosened vs 1e-4.
    assert jnp.allclose(out, ref, atol=2e-3, rtol=2e-3), max_err
    print("KERNEL_OK")
</pallas_src>

<mosaic_0001>
module attributes {stable_mosaic.version = 11 : i64} {
  func.func @block_kernel(%arg0: i32, %arg1: memref<1x8x256xf32, #tpu.memory_space<vmem>>, %arg2: memref<1x256xf32, #tpu.memory_space<vmem>>, %arg3: memref<1x256xf32, #tpu.memory_space<vmem>>, %arg4: memref<256x768xf32, #tpu.memory_space<vmem>>, %arg5: memref<256x256xf32, #tpu.memory_space<vmem>>, %arg6: memref<1x256xf32, #tpu.memory_space<vmem>>, %arg7: memref<1x256xf32, #tpu.memory_space<vmem>>, %arg8: memref<1x256xf32, #tpu.memory_space<vmem>>, %arg9: memref<256x1024xf32, #tpu.memory_space<vmem>>, %arg10: memref<1x1024xf32, #tpu.memory_space<vmem>>, %arg11: memref<1024x256xf32, #tpu.memory_space<vmem>>, %arg12: memref<1x256xf32, #tpu.memory_space<vmem>>, %arg13: memref<1x8x256xf32, #tpu.memory_space<vmem>>) attributes {dimension_semantics = [#tpu.dimension_semantics<parallel>], iteration_bounds = array<i64: 2>, scalar_prefetch = 0 : i64, scratch_operands = 0 : i64, tpu.core_type = #tpu.core_type<tc>, window_params = [{transform_indices = @transform_0, window_bounds = array<i64: 1, 8, 256>}, {pipeline_mode = #tpu.pipeline_mode<synchronous>, transform_indices = @transform_1, window_bounds = array<i64: 1, 256>}, {pipeline_mode = #tpu.pipeline_mode<synchronous>, transform_indices = @transform_2, window_bounds = array<i64: 1, 256>}, {pipeline_mode = #tpu.pipeline_mode<synchronous>, transform_indices = @transform_3, window_bounds = array<i64: 256, 768>}, {pipeline_mode = #tpu.pipeline_mode<synchronous>, transform_indices = @transform_4, window_bounds = array<i64: 256, 256>}, {pipeline_mode = #tpu.pipeline_mode<synchronous>, transform_indices = @transform_5, window_bounds = array<i64: 1, 256>}, {pipeline_mode = #tpu.pipeline_mode<synchronous>, transform_indices = @transform_6, window_bounds = array<i64: 1, 256>}, {pipeline_mode = #tpu.pipeline_mode<synchronous>, transform_indices = @transform_7, window_bounds = array<i64: 1, 256>}, {pipeline_mode = #tpu.pipeline_mode<synchronous>, transform_indices = @transform_8, window_bounds = array<i64: 256, 1024>}, {pipeline_mode = #tpu.pipeline_mode<synchronous>, transform_indices = @transform_9, window_bounds = array<i64: 1, 1024>}, {pipeline_mode = #tpu.pipeline_mode<synchronous>, transform_indices = @transform_10, window_bounds = array<i64: 1024, 256>}, {pipeline_mode = #tpu.pipeline_mode<synchronous>, transform_indices = @transform_11, window_bounds = array<i64: 1, 256>}, {transform_indices = @transform_12, window_bounds = array<i64: 1, 8, 256>}]} {
    %c0 = arith.constant 0 : index
    %c0_0 = arith.constant 0 : index
    %c0_1 = arith.constant 0 : index
    %0 = vector.load %arg1[%c0, %c0_0, %c0_1] : memref<1x8x256xf32, #tpu.memory_space<vmem>>, vector<1x8x256xf32>
    %1 = vector.shape_cast %0 : vector<1x8x256xf32> to vector<8x256xf32>
    %c0_2 = arith.constant 0 : index
    %c0_3 = arith.constant 0 : index
    %2 = vector.load %arg2[%c0_2, %c0_3] : memref<1x256xf32, #tpu.memory_space<vmem>>, vector<1x256xf32>
    %c0_4 = arith.constant 0 : index
    %c0_5 = arith.constant 0 : index
    %3 = vector.load %arg3[%c0_4, %c0_5] : memref<1x256xf32, #tpu.memory_space<vmem>>, vector<1x256xf32>
    %cst = arith.constant dense<0.000000e+00> : vector<8xf32>
    %4 = vector.multi_reduction <add>, %1, %cst [1] : vector<8x256xf32> to vector<8xf32>
    %5 = vector.shape_cast %4 : vector<8xf32> to vector<8x1xf32>
    %cst_6 = arith.constant 2.560000e+02 : f32
    %6 = vector.broadcast %cst_6 : f32 to vector<8x1xf32>
    %7 = arith.divf %5, %6 : vector<8x1xf32>
    %8 = vector.broadcast %7 : vector<8x1xf32> to vector<8x256xf32>
    %9 = arith.subf %1, %8 : vector<8x256xf32>
    %10 = arith.mulf %9, %9 : vector<8x256xf32>
    %cst_7 = arith.constant dense<0.000000e+00> : vector<8xf32>
    %11 = vector.multi_reduction <add>, %10, %cst_7 [1] : vector<8x256xf32> to vector<8xf32>
    %12 = vector.shape_cast %11 : vector<8xf32> to vector<8x1xf32>
    %cst_8 = arith.constant 2.560000e+02 : f32
    %13 = vector.broadcast %cst_8 : f32 to vector<8x1xf32>
    %14 = arith.divf %12, %13 : vector<8x1xf32>
    %15 = vector.broadcast %7 : vector<8x1xf32> to vector<8x256xf32>
    %16 = arith.subf %1, %15 : vector<8x256xf32>
    %cst_9 = arith.constant 9.99999974E-6 : f32
    %17 = vector.broadcast %cst_9 : f32 to vector<8x1xf32>
    %18 = arith.addf %14, %17 : vector<8x1xf32>
    %19 = math.rsqrt %18 : vector<8x1xf32>
    %20 = vector.broadcast %19 : vector<8x1xf32> to vector<8x256xf32>
    %21 = arith.mulf %16, %20 : vector<8x256xf32>
    %22 = vector.broadcast %2 : vector<1x256xf32> to vector<8x256xf32>
    %23 = arith.mulf %21, %22 : vector<8x256xf32>
    %24 = vector.broadcast %3 : vector<1x256xf32> to vector<8x256xf32>
    %25 = arith.addf %23, %24 : vector<8x256xf32>
    %c0_10 = arith.constant 0 : index
    %c0_11 = arith.constant 0 : index
    %26 = vector.load %arg4[%c0_10, %c0_11] : memref<256x768xf32, #tpu.memory_space<vmem>>, vector<256x768xf32>
    %cst_12 = arith.constant dense<0.000000e+00> : vector<8x768xf32>
    %27 = tpu.matmul %25, %26, %cst_12 {dimension_numbers = #tpu.dot_dimension_numbers<[1], [0], [0], [1], [0, 0, 1, 1], [], []>} : vector<8x256xf32>, vector<256x768xf32>, vector<8x768xf32> -> vector<8x768xf32>
    %28 = tpu.iota {dimensions = array<i32: 0>} : vector<8x8xi32>
    %29 = tpu.iota {dimensions = array<i32: 1>} : vector<8x8xi32>
    %30 = arith.cmpi sge, %28, %29 : vector<8x8xi32>
    %cst_13 = arith.constant 0.000000e+00 : f32
    %cst_14 = arith.constant -1.000000e+30 : f32
    %31 = vector.broadcast %cst_13 : f32 to vector<8x8xf32>
    %32 = vector.broadcast %cst_14 : f32 to vector<8x8xf32>
    %33 = arith.select %30, %31, %32 : vector<8x8xi1>, vector<8x8xf32>
    %c0_15 = arith.constant 0 : index
    %c0_16 = arith.constant 0 : index
    %34 = vector.load %arg5[%c0_15, %c0_16] : memref<256x256xf32, #tpu.memory_space<vmem>>, vector<256x256xf32>
    %cst_17 = arith.constant 0.000000e+00 : f32
    %35 = vector.broadcast %cst_17 : f32 to vector<8x256xf32>
    %36 = vector.extract_strided_slice %27 {offsets = [0, 0], sizes = [8, 64], strides = [1, 1]} : vector<8x768xf32> to vector<8x64xf32>
    %37 = vector.extract_strided_slice %27 {offsets = [0, 256], sizes = [8, 64], strides = [1, 1]} : vector<8x768xf32> to vector<8x64xf32>
    %38 = vector.extract_strided_slice %27 {offsets = [0, 512], sizes = [8, 64], strides = [1, 1]} : vector<8x768xf32> to vector<8x64xf32>
    %39 = tpu.transpose %37, [1, 0] : vector<8x64xf32> -> vector<64x8xf32>
    %cst_18 = arith.constant dense<0.000000e+00> : vector<8x8xf32>
    %40 = tpu.matmul %36, %39, %cst_18 {dimension_numbers = #tpu.dot_dimension_numbers<[1], [0], [0], [1], [0, 0, 1, 1], [], []>} : vector<8x64xf32>, vector<64x8xf32>, vector<8x8xf32> -> vector<8x8xf32>
    %41 = arith.addf %40, %33 : vector<8x8xf32>
    %cst_19 = arith.constant dense<0xFF800000> : vector<8xf32>
    %42 = vector.multi_reduction <maximumf>, %41, %cst_19 [1] : vector<8x8xf32> to vector<8xf32>
    %43 = vector.shape_cast %42 : vector<8xf32> to vector<8x1xf32>
    %44 = vector.broadcast %43 : vector<8x1xf32> to vector<8x8xf32>
    %45 = arith.subf %41, %44 : vector<8x8xf32>
    %46 = math.exp %45 : vector<8x8xf32>
    %cst_20 = arith.constant dense<0.000000e+00> : vector<8xf32>
    %47 = vector.multi_reduction <add>, %46, %cst_20 [1] : vector<8x8xf32> to vector<8xf32>
    %48 = vector.shape_cast %47 : vector<8xf32> to vector<8x1xf32>
    %49 = tpu.reciprocal %48 {approx = true} : vector<8x1xf32> -> vector<8x1xf32>
    %50 = vector.broadcast %49 : vector<8x1xf32> to vector<8x8xf32>
    %51 = arith.mulf %46, %50 : vector<8x8xf32>
    %cst_21 = arith.constant dense<0.000000e+00> : vector<8x64xf32>
    %52 = tpu.matmul %51, %38, %cst_21 {dimension_numbers = #tpu.dot_dimension_numbers<[1], [0], [0], [1], [0, 0, 1, 1], [], []>} : vector<8x8xf32>, vector<8x64xf32>, vector<8x64xf32> -> vector<8x64xf32>
    %53 = vector.extract_strided_slice %34 {offsets = [0, 0], sizes = [64, 256], strides = [1, 1]} : vector<256x256xf32> to vector<64x256xf32>
    %cst_22 = arith.constant dense<0.000000e+00> : vector<8x256xf32>
    %54 = tpu.matmul %52, %53, %cst_22 {dimension_numbers = #tpu.dot_dimension_numbers<[1], [0], [0], [1], [0, 0, 1, 1], [], []>} : vector<8x64xf32>, vector<64x256xf32>, vector<8x256xf32> -> vector<8x256xf32>
    %55 = arith.addf %35, %54 : vector<8x256xf32>
    %56 = vector.extract_strided_slice %27 {offsets = [0, 64], sizes = [8, 64], strides = [1, 1]} : vector<8x768xf32> to vector<8x64xf32>
    %57 = vector.extract_strided_slice %27 {offsets = [0, 320], sizes = [8, 64], strides = [1, 1]} : vector<8x768xf32> to vector<8x64xf32>
    %58 = vector.extract_strided_slice %27 {offsets = [0, 576], sizes = [8, 64], strides = [1, 1]} : vector<8x768xf32> to vector<8x64xf32>
    %59 = tpu.transpose %57, [1, 0] : vector<8x64xf32> -> vector<64x8xf32>
    %cst_23 = arith.constant dense<0.000000e+00> : vector<8x8xf32>
    %60 = tpu.matmul %56, %59, %cst_23 {dimension_numbers = #tpu.dot_dimension_numbers<[1], [0], [0], [1], [0, 0, 1, 1], [], []>} : vector<8x64xf32>, vector<64x8xf32>, vector<8x8xf32> -> vector<8x8xf32>
    %61 = arith.addf %60, %33 : vector<8x8xf32>
    %cst_24 = arith.constant dense<0xFF800000> : vector<8xf32>
    %62 = vector.multi_reduction <maximumf>, %61, %cst_24 [1] : vector<8x8xf32> to vector<8xf32>
    %63 = vector.shape_cast %62 : vector<8xf32> to vector<8x1xf32>
    %64 = vector.broadcast %63 : vector<8x1xf32> to vector<8x8xf32>
    %65 = arith.subf %61, %64 : vector<8x8xf32>
    %66 = math.exp %65 : vector<8x8xf32>
    %cst_25 = arith.constant dense<0.000000e+00> : vector<8xf32>
    %67 = vector.multi_reduction <add>, %66, %cst_25 [1] : vector<8x8xf32> to vector<8xf32>
    %68 = vector.shape_cast %67 : vector<8xf32> to vector<8x1xf32>
    %69 = tpu.reciprocal %68 {approx = true} : vector<8x1xf32> -> vector<8x1xf32>
    %70 = vector.broadcast %69 : vector<8x1xf32> to vector<8x8xf32>
    %71 = arith.mulf %66, %70 : vector<8x8xf32>
    %cst_26 = arith.constant dense<0.000000e+00> : vector<8x64xf32>
    %72 = tpu.matmul %71, %58, %cst_26 {dimension_numbers = #tpu.dot_dimension_numbers<[1], [0], [0], [1], [0, 0, 1, 1], [], []>} : vector<8x8xf32>, vector<8x64xf32>, vector<8x64xf32> -> vector<8x64xf32>
    %73 = vector.extract_strided_slice %34 {offsets = [64, 0], sizes = [64, 256], strides = [1, 1]} : vector<256x256xf32> to vector<64x256xf32>
    %cst_27 = arith.constant dense<0.000000e+00> : vector<8x256xf32>
    %74 = tpu.matmul %72, %73, %cst_27 {dimension_numbers = #tpu.dot_dimension_numbers<[1], [0], [0], [1], [0, 0, 1, 1], [], []>} : vector<8x64xf32>, vector<64x256xf32>, vector<8x256xf32> -> vector<8x256xf32>
    %75 = arith.addf %55, %74 : vector<8x256xf32>
    %76 = vector.extract_strided_slice %27 {offsets = [0, 128], sizes = [8, 64], strides = [1, 1]} : vector<8x768xf32> to vector<8x64xf32>
    %77 = vector.extract_strided_slice %27 {offsets = [0, 384], sizes = [8, 64], strides = [1, 1]} : vector<8x768xf32> to vector<8x64xf32>
    %78 = vector.extract_strided_slice %27 {offsets = [0, 640], sizes = [8, 64], strides = [1, 1]} : vector<8x768xf32> to vector<8x64xf32>
    %79 = tpu.transpose %77, [1, 0] : vector<8x64xf32> -> vector<64x8xf32>
    %cst_28 = arith.constant dense<0.000000e+00> : vector<8x8xf32>
    %80 = tpu.matmul %76, %79, %cst_28 {dimension_numbers = #tpu.dot_dimension_numbers<[1], [0], [0], [1], [0, 0, 1, 1], [], []>} : vector<8x64xf32>, vector<64x8xf32>, vector<8x8xf32> -> vector<8x8xf32>
    %81 = arith.addf %80, %33 : vector<8x8xf32>
    %cst_29 = arith.constant dense<0xFF800000> : vector<8xf32>
    %82 = vector.multi_reduction <maximumf>, %81, %cst_29 [1] : vector<8x8xf32> to vector<8xf32>
    %83 = vector.shape_cast %82 : vector<8xf32> to vector<8x1xf32>
    %84 = vector.broadcast %83 : vector<8x1xf32> to vector<8x8xf32>
    %85 = arith.subf %81, %84 : vector<8x8xf32>
    %86 = math.exp %85 : vector<8x8xf32>
    %cst_30 = arith.constant dense<0.000000e+00> : vector<8xf32>
    %87 = vector.multi_reduction <add>, %86, %cst_30 [1] : vector<8x8xf32> to vector<8xf32>
    %88 = vector.shape_cast %87 : vector<8xf32> to vector<8x1xf32>
    %89 = tpu.reciprocal %88 {approx = true} : vector<8x1xf32> -> vector<8x1xf32>
    %90 = vector.broadcast %89 : vector<8x1xf32> to vector<8x8xf32>
    %91 = arith.mulf %86, %90 : vector<8x8xf32>
    %cst_31 = arith.constant dense<0.000000e+00> : vector<8x64xf32>
    %92 = tpu.matmul %91, %78, %cst_31 {dimension_numbers = #tpu.dot_dimension_numbers<[1], [0], [0], [1], [0, 0, 1, 1], [], []>} : vector<8x8xf32>, vector<8x64xf32>, vector<8x64xf32> -> vector<8x64xf32>
    %93 = vector.extract_strided_slice %34 {offsets = [128, 0], sizes = [64, 256], strides = [1, 1]} : vector<256x256xf32> to vector<64x256xf32>
    %cst_32 = arith.constant dense<0.000000e+00> : vector<8x256xf32>
    %94 = tpu.matmul %92, %93, %cst_32 {dimension_numbers = #tpu.dot_dimension_numbers<[1], [0], [0], [1], [0, 0, 1, 1], [], []>} : vector<8x64xf32>, vector<64x256xf32>, vector<8x256xf32> -> vector<8x256xf32>
    %95 = arith.addf %75, %94 : vector<8x256xf32>
    %96 = vector.extract_strided_slice %27 {offsets = [0, 192], sizes = [8, 64], strides = [1, 1]} : vector<8x768xf32> to vector<8x64xf32>
    %97 = vector.extract_strided_slice %27 {offsets = [0, 448], sizes = [8, 64], strides = [1, 1]} : vector<8x768xf32> to vector<8x64xf32>
    %98 = vector.extract_strided_slice %27 {offsets = [0, 704], sizes = [8, 64], strides = [1, 1]} : vector<8x768xf32> to vector<8x64xf32>
    %99 = tpu.transpose %97, [1, 0] : vector<8x64xf32> -> vector<64x8xf32>
    %cst_33 = arith.constant dense<0.000000e+00> : vector<8x8xf32>
    %100 = tpu.matmul %96, %99, %cst_33 {dimension_numbers = #tpu.dot_dimension_numbers<[1], [0], [0], [1], [0, 0, 1, 1], [], []>} : vector<8x64xf32>, vector<64x8xf32>, vector<8x8xf32> -> vector<8x8xf32>
    %101 = arith.addf %100, %33 : vector<8x8xf32>
    %cst_34 = arith.constant dense<0xFF800000> : vector<8xf32>
    %102 = vector.multi_reduction <maximumf>, %101, %cst_34 [1] : vector<8x8xf32> to vector<8xf32>
    %103 = vector.shape_cast %102 : vector<8xf32> to vector<8x1xf32>
    %104 = vector.broadcast %103 : vector<8x1xf32> to vector<8x8xf32>
    %105 = arith.subf %101, %104 : vector<8x8xf32>
    %106 = math.exp %105 : vector<8x8xf32>
    %cst_35 = arith.constant dense<0.000000e+00> : vector<8xf32>
    %107 = vector.multi_reduction <add>, %106, %cst_35 [1] : vector<8x8xf32> to vector<8xf32>
    %108 = vector.shape_cast %107 : vector<8xf32> to vector<8x1xf32>
    %109 = tpu.reciprocal %108 {approx = true} : vector<8x1xf32> -> vector<8x1xf32>
    %110 = vector.broadcast %109 : vector<8x1xf32> to vector<8x8xf32>
    %111 = arith.mulf %106, %110 : vector<8x8xf32>
    %cst_36 = arith.constant dense<0.000000e+00> : vector<8x64xf32>
    %112 = tpu.matmul %111, %98, %cst_36 {dimension_numbers = #tpu.dot_dimension_numbers<[1], [0], [0], [1], [0, 0, 1, 1], [], []>} : vector<8x8xf32>, vector<8x64xf32>, vector<8x64xf32> -> vector<8x64xf32>
    %113 = vector.extract_strided_slice %34 {offsets = [192, 0], sizes = [64, 256], strides = [1, 1]} : vector<256x256xf32> to vector<64x256xf32>
    %cst_37 = arith.constant dense<0.000000e+00> : vector<8x256xf32>
    %114 = tpu.matmul %112, %113, %cst_37 {dimension_numbers = #tpu.dot_dimension_numbers<[1], [0], [0], [1], [0, 0, 1, 1], [], []>} : vector<8x64xf32>, vector<64x256xf32>, vector<8x256xf32> -> vector<8x256xf32>
    %115 = arith.addf %95, %114 : vector<8x256xf32>
    %c0_38 = arith.constant 0 : index
    %c0_39 = arith.constant 0 : index
    %116 = vector.load %arg6[%c0_38, %c0_39] : memref<1x256xf32, #tpu.memory_space<vmem>>, vector<1x256xf32>
    %117 = vector.broadcast %116 : vector<1x256xf32> to vector<8x256xf32>
    %118 = arith.addf %115, %117 : vector<8x256xf32>
    %119 = arith.addf %1, %118 : vector<8x256xf32>
    %c0_40 = arith.constant 0 : index
    %c0_41 = arith.constant 0 : index
    %120 = vector.load %arg7[%c0_40, %c0_41] : memref<1x256xf32, #tpu.memory_space<vmem>>, vector<1x256xf32>
    %c0_42 = arith.constant 0 : index
    %c0_43 = arith.constant 0 : index
    %121 = vector.load %arg8[%c0_42, %c0_43] : memref<1x256xf32, #tpu.memory_space<vmem>>, vector<1x256xf32>
    %cst_44 = arith.constant dense<0.000000e+00> : vector<8xf32>
    %122 = vector.multi_reduction <add>, %119, %cst_44 [1] : vector<8x256xf32> to vector<8xf32>
    %123 = vector.shape_cast %122 : vector<8xf32> to vector<8x1xf32>
    %cst_45 = arith.constant 2.560000e+02 : f32
    %124 = vector.broadcast %cst_45 : f32 to vector<8x1xf32>
    %125 = arith.divf %123, %124 : vector<8x1xf32>
    %126 = vector.broadcast %125 : vector<8x1xf32> to vector<8x256xf32>
    %127 = arith.subf %119, %126 : vector<8x256xf32>
    %128 = arith.mulf %127, %127 : vector<8x256xf32>
    %cst_46 = arith.constant dense<0.000000e+00> : vector<8xf32>
    %129 = vector.multi_reduction <add>, %128, %cst_46 [1] : vector<8x256xf32> to vector<8xf32>
    %130 = vector.shape_cast %129 : vector<8xf32> to vector<8x1xf32>
    %cst_47 = arith.constant 2.560000e+02 : f32
    %131 = vector.broadcast %cst_47 : f32 to vector<8x1xf32>
    %132 = arith.divf %130, %131 : vector<8x1xf32>
    %133 = vector.broadcast %125 : vector<8x1xf32> to vector<8x256xf32>
    %134 = arith.subf %119, %133 : vector<8x256xf32>
    %cst_48 = arith.constant 9.99999974E-6 : f32
    %135 = vector.broadcast %cst_48 : f32 to vector<8x1xf32>
    %136 = arith.addf %132, %135 : vector<8x1xf32>
    %137 = math.rsqrt %136 : vector<8x1xf32>
    %138 = vector.broadcast %137 : vector<8x1xf32> to vector<8x256xf32>
    %139 = arith.mulf %134, %138 : vector<8x256xf32>
    %140 = vector.broadcast %120 : vector<1x256xf32> to vector<8x256xf32>
    %141 = arith.mulf %139, %140 : vector<8x256xf32>
    %142 = vector.broadcast %121 : vector<1x256xf32> to vector<8x256xf32>
    %143 = arith.addf %141, %142 : vector<8x256xf32>
    %c0_49 = arith.constant 0 : index
    %c0_50 = arith.constant 0 : index
    %144 = vector.load %arg9[%c0_49, %c0_50] : memref<256x1024xf32, #tpu.memory_space<vmem>>, vector<256x1024xf32>
    %cst_51 = arith.constant dense<0.000000e+00> : vector<8x1024xf32>
    %145 = tpu.matmul %143, %144, %cst_51 {dimension_numbers = #tpu.dot_dimension_numbers<[1], [0], [0], [1], [0, 0, 1, 1], [], []>} : vector<8x256xf32>, vector<256x1024xf32>, vector<8x1024xf32> -> vector<8x1024xf32>
    %c0_52 = arith.constant 0 : index
    %c0_53 = arith.constant 0 : index
    %146 = vector.load %arg10[%c0_52, %c0_53] : memref<1x1024xf32, #tpu.memory_space<vmem>>, vector<1x1024xf32>
    %147 = vector.broadcast %146 : vector<1x1024xf32> to vector<8x1024xf32>
    %148 = arith.addf %145, %147 : vector<8x1024xf32>
    %cst_54 = arith.constant 0.000000e+00 : f32
    %149 = vector.broadcast %cst_54 : f32 to vector<8x1024xf32>
    %150 = arith.maximumf %148, %149 : vector<8x1024xf32>
    %c0_55 = arith.constant 0 : index
    %c0_56 = arith.constant 0 : index
    %151 = vector.load %arg11[%c0_55, %c0_56] : memref<1024x256xf32, #tpu.memory_space<vmem>>, vector<1024x256xf32>
    %cst_57 = arith.constant dense<0.000000e+00> : vector<8x256xf32>
    %152 = tpu.matmul %150, %151, %cst_57 {dimension_numbers = #tpu.dot_dimension_numbers<[1], [0], [0], [1], [0, 0, 1, 1], [], []>} : vector<8x1024xf32>, vector<1024x256xf32>, vector<8x256xf32> -> vector<8x256xf32>
    %c0_58 = arith.constant 0 : index
    %c0_59 = arith.constant 0 : index
    %153 = vector.load %arg12[%c0_58, %c0_59] : memref<1x256xf32, #tpu.memory_space<vmem>>, vector<1x256xf32>
    %154 = vector.broadcast %153 : vector<1x256xf32> to vector<8x256xf32>
    %155 = arith.addf %152, %154 : vector<8x256xf32>
    %156 = arith.addf %119, %155 : vector<8x256xf32>
    %c0_60 = arith.constant 0 : index
    %c0_61 = arith.constant 0 : index
    %c0_62 = arith.constant 0 : index
    %157 = vector.load %arg13[%c0_60, %c0_61, %c0_62] : memref<1x8x256xf32, #tpu.memory_space<vmem>>, vector<1x8x256xf32>
    %158 = vector.shape_cast %157 : vector<1x8x256xf32> to vector<8x256xf32>
    %159 = vector.shape_cast %156 : vector<8x256xf32> to vector<1x8x256xf32>
    tpu.vector_store %arg13[%c0_60, %c0_61, %c0_62], %159 {strides = array<i32>} : memref<1x8x256xf32, #tpu.memory_space<vmem>>, vector<1x8x256xf32>,
    return
  }
  func.func @transform_0(%arg0: i32) -> (i32, i32, i32) {
    %c0_i32 = arith.constant 0 : i32
    %c0_i32_0 = arith.constant 0 : i32
    %c0_i32_1 = arith.constant 0 : i32
    return %arg0, %c0_i32, %c0_i32_0 : i32, i32, i32
  }
  func.func @transform_1(%arg0: i32) -> (i32, i32) {
    %c0_i32 = arith.constant 0 : i32
    %c0_i32_0 = arith.constant 0 : i32
    %c0_i32_1 = arith.constant 0 : i32
    return %c0_i32, %c0_i32_0 : i32, i32
  }
  func.func @transform_2(%arg0: i32) -> (i32, i32) {
    %c0_i32 = arith.constant 0 : i32
    %c0_i32_0 = arith.constant 0 : i32
    %c0_i32_1 = arith.constant 0 : i32
    return %c0_i32, %c0_i32_0 : i32, i32
  }
  func.func @transform_3(%arg0: i32) -> (i32, i32) {
    %c0_i32 = arith.constant 0 : i32
    %c0_i32_0 = arith.constant 0 : i32
    %c0_i32_1 = arith.constant 0 : i32
    return %c0_i32, %c0_i32_0 : i32, i32
  }
  func.func @transform_4(%arg0: i32) -> (i32, i32) {
    %c0_i32 = arith.constant 0 : i32
    %c0_i32_0 = arith.constant 0 : i32
    %c0_i32_1 = arith.constant 0 : i32
    return %c0_i32, %c0_i32_0 : i32, i32
  }
  func.func @transform_5(%arg0: i32) -> (i32, i32) {
    %c0_i32 = arith.constant 0 : i32
    %c0_i32_0 = arith.constant 0 : i32
    %c0_i32_1 = arith.constant 0 : i32
    return %c0_i32, %c0_i32_0 : i32, i32
  }
  func.func @transform_6(%arg0: i32) -> (i32, i32) {
    %c0_i32 = arith.constant 0 : i32
    %c0_i32_0 = arith.constant 0 : i32
    %c0_i32_1 = arith.constant 0 : i32
    return %c0_i32, %c0_i32_0 : i32, i32
  }
  func.func @transform_7(%arg0: i32) -> (i32, i32) {
    %c0_i32 = arith.constant 0 : i32
    %c0_i32_0 = arith.constant 0 : i32
    %c0_i32_1 = arith.constant 0 : i32
    return %c0_i32, %c0_i32_0 : i32, i32
  }
  func.func @transform_8(%arg0: i32) -> (i32, i32) {
    %c0_i32 = arith.constant 0 : i32
    %c0_i32_0 = arith.constant 0 : i32
    %c0_i32_1 = arith.constant 0 : i32
    return %c0_i32, %c0_i32_0 : i32, i32
  }
  func.func @transform_9(%arg0: i32) -> (i32, i32) {
    %c0_i32 = arith.constant 0 : i32
    %c0_i32_0 = arith.constant 0 : i32
    %c0_i32_1 = arith.constant 0 : i32
    return %c0_i32, %c0_i32_0 : i32, i32
  }
  func.func @transform_10(%arg0: i32) -> (i32, i32) {
    %c0_i32 = arith.constant 0 : i32
    %c0_i32_0 = arith.constant 0 : i32
    %c0_i32_1 = arith.constant 0 : i32
    return %c0_i32, %c0_i32_0 : i32, i32
  }
  func.func @transform_11(%arg0: i32) -> (i32, i32) {
    %c0_i32 = arith.constant 0 : i32
    %c0_i32_0 = arith.constant 0 : i32
    %c0_i32_1 = arith.constant 0 : i32
    return %c0_i32, %c0_i32_0 : i32, i32
  }
  func.func @transform_12(%arg0: i32) -> (i32, i32, i32) {
    %c0_i32 = arith.constant 0 : i32
    %c0_i32_0 = arith.constant 0 : i32
    %c0_i32_1 = arith.constant 0 : i32
    return %arg0, %c0_i32, %c0_i32_0 : i32, i32, i32
  }
}

</mosaic_0001>

<llo_original>
// kernel: tpu_custom_call.1
$region0: #{tpu_custom_call.1}
  #allocation0 [shape = 'u32[]', space=smem, size = 0x4, offset = 0x4, fixed_abs, tag = 'smem constant byte address 0x4 - core index']
  #allocation1 [shape = 'u32[144,128]{1,0:T(1,128)}', space=vmem, size = 0x12000, scoped, tag = 'internal scratch']
  %s0 = inlined_call_operand.hbm [shape: f32[2,8,256], index: 0, kind: input, shape index: {}]
  %s1 = inlined_call_operand.vmem [shape: f32[1,256], index: 1, kind: input, shape index: {}]
  %s2 = inlined_call_operand.vmem [shape: f32[1,256], index: 2, kind: input, shape index: {}]
  %s3 = inlined_call_operand.hbm [shape: f32[256,768], index: 3, kind: input, shape index: {}]
  %s4 = inlined_call_operand.hbm [shape: f32[256,256], index: 4, kind: input, shape index: {}]
  %s5 = inlined_call_operand.vmem [shape: f32[1,256], index: 5, kind: input, shape index: {}]
  %s6 = inlined_call_operand.vmem [shape: f32[1,256], index: 6, kind: input, shape index: {}]
  %s7 = inlined_call_operand.vmem [shape: f32[1,256], index: 7, kind: input, shape index: {}]
  %s8 = inlined_call_operand.hbm [shape: f32[256,1024], index: 8, kind: input, shape index: {}]
  %s9 = inlined_call_operand.vmem [shape: f32[1,1024], index: 9, kind: input, shape index: {}]
  %s10 = inlined_call_operand.hbm [shape: f32[1024,256], index: 10, kind: input, shape index: {}]
  %s11 = inlined_call_operand.vmem [shape: f32[1,256], index: 11, kind: input, shape index: {}]
  %s12 = inlined_call_operand.hbm [shape: f32[2,8,256], index: 12, kind: output, shape index: {}]
  %s13 = sld [smem:[#allocation0]]
  $region101: #{tpu_custom_call.1} parent=0
    _
  %s15 = ssub.s32 1, %s13
  %s16 = scalar_select 0, %s15, %s13
  $region1: #{tpu_custom_call.1} parent=0
    #allocation2 [shape = 'u8[16384]{0}', space=vmem, size = 0x4000, scoped, tag = 'input window, operand 0']
    #allocation3 [shape = 's32[2]{0}', space=sflag, size = 0x8, scoped, tag = 'scoped memory for tpu_custom_call.1']
    #allocation4 [shape = 's32[2]{0}', space=sflag, size = 0x8, scoped, tag = 'scoped memory for tpu_custom_call.1']
    #allocation5 [shape = 'u8[786432]{0}', space=vmem, size = 0xc0000, scoped, tag = 'input window, operand 3, single buffered']
    #allocation6 [shape = 's32[1]{0}', space=sflag, size = 0x4, scoped, tag = 'scoped memory for tpu_custom_call.1']
    #allocation7 [shape = 'u8[262144]{0}', space=vmem, size = 0x40000, scoped, tag = 'input window, operand 4, single buffered']
    #allocation8 [shape = 'u8[1048576]{0}', space=vmem, size = 0x100000, scoped, tag = 'input window, operand 8, single buffered']
    #allocation9 [shape = 's32[1]{0}', space=sflag, size = 0x4, scoped, tag = 'scoped memory for tpu_custom_call.1']
    #allocation10 [shape = 'u8[1048576]{0}', space=vmem, size = 0x100000, scoped, tag = 'input window, operand 10, single buffered']
    #allocation11 [shape = 'u8[16384]{0}', space=vmem, size = 0x4000, scoped, tag = 'output window, operand 0']
    %17 = vsyncpa [#allocation3], 0
    %s18 = scalar_lea.sflag [#allocation3], 1
    %19 = vsyncpa %s18, 0
    %20 = vsyncpa [#allocation6], 0
    %21 = vsyncpa [#allocation9], 0
    %22 = vsyncpa [#allocation4], 0
    %s23 = scalar_lea.sflag [#allocation4], 1
    %24 = vsyncpa %s23, 0
    loop: start=0, step=1, limit=4
    $region2: #{tpu_custom_call.1} parent=1 // loop_pre_header
      _
    $region3: #{tpu_custom_call.1} parent=1 // loop_header
      %s26 = sphi 0, %s30
      %p27 = scmp.ge.s32.totalorder %s26, 4
      %s36 = sphi 0, %s38
      %s39 = sphi 0, %s36
      %s40 = sphi 0, %s39
      %s56 = sphi 0, %s40
      %s60 = sphi 0, %s60
      %s62 = sphi 0, %s60
      %s63 = sphi 0, %s62
      %s77 = sphi 0, %s63
      %s81 = sphi 0, %s81
      %s83 = sphi 0, %s81
      %s84 = sphi 0, %s83
      %s98 = sphi 0, %s84
      %s102 = sphi 0, %s102
      %s104 = sphi 0, %s102
      %s105 = sphi 0, %s104
      %s119 = sphi 0, %s105
      %s123 = sphi 0, %s123
      %s125 = sphi 0, %s123
      %s126 = sphi 0, %s125
      %s140 = sphi 0, %s126
      %s144 = sphi 0, %s144
      %s146 = sphi 0, %s144
      %s147 = sphi 0, %s146
      %s161 = sphi 0, %s147
      %s165 = sphi 0, %s165
      %s167 = sphi 0, %s165
      %s168 = sphi 0, %s167
      %s182 = sphi 0, %s168
      %s186 = sphi 0, %s186
      %s188 = sphi 0, %s186
      %s189 = sphi 0, %s188
      %s203 = sphi 0, %s189
      %s207 = sphi 0, %s207
      %s209 = sphi 0, %s207
      %s210 = sphi 0, %s209
      %s224 = sphi 0, %s210
      %s228 = sphi 0, %s228
      %s230 = sphi 0, %s228
      %s231 = sphi 0, %s230
      %s245 = sphi 0, %s231
      %s249 = sphi 0, %s249
      %s251 = sphi 0, %s249
      %s252 = sphi 0, %s251
      %s266 = sphi 0, %s252
      %s270 = sphi 0, %s270
      %s272 = sphi 0, %s270
      %s273 = sphi 0, %s272
      %s287 = sphi 0, %s273
      %s293 = sphi 0, %s295
      %s296 = sphi 0, %s293
      %s297 = sphi 0, %s296
      %s313 = sphi 0, %s297
    $region4: #{tpu_custom_call.1} parent=1 // loop_header_branch
      %29 = sbr.rel (%p27) target = $region8
    $region5: #{tpu_custom_call.1} parent=1 // loop_body
      %s31 = ssub.s32 %s26, 1
      %s32 = ssub.s32 %s26, 2
      %s33 = sadd.s32 %s26, 1
      %s34 = ssub.s32 %s26, %s33
      %p35 = scmp.eq.s32.totalorder %s34, 0
      %s37 = sadd.s32 %s36, 1
      %s38 = scalar_select %p35, %s36, %s37
      %p41 = pneg %p35
      %p42 = scmp.eq.s32.totalorder %s26, 1
      %p43 = por %p41, %p42
      %p44 = scmp.ne.s32.totalorder %s36, %s39
      %p45 = scmp.eq.s32.totalorder %s26, 0
      %p46 = por %p44, %p45
      %p47 = scmp.ne.s32.totalorder %s36, %s39
      %p48 = scmp.eq.s32.totalorder %s31, 1
      %p49 = por %p47, %p48
      %p50 = scmp.ne.s32.totalorder %s39, %s40
      %p51 = scmp.eq.s32.totalorder %s31, 0
      %p52 = por %p50, %p51
      %p53 = scmp.ne.s32.totalorder %s39, %s40
      %p54 = scmp.eq.s32.totalorder %s32, 1
      %p55 = por %p53, %p54
      %p57 = scmp.ne.s32.totalorder %s40, %s56
      %p58 = scmp.eq.s32.totalorder %s32, 0
      %p59 = por %p57, %p58
      %s61 = sadd.s32 %s60, 1
      %p64 = scmp.eq.s32.totalorder %s26, 1
      %p65 = scmp.ne.s32.totalorder %s60, %s62
      %p66 = scmp.eq.s32.totalorder %s26, 0
      %p67 = por %p65, %p66
      %p68 = scmp.ne.s32.totalorder %s60, %s62
      %p69 = scmp.eq.s32.totalorder %s31, 1
      %p70 = por %p68, %p69
      %p71 = scmp.ne.s32.totalorder %s62, %s63
      %p72 = scmp.eq.s32.totalorder %s31, 0
      %p73 = por %p71, %p72
      %p74 = scmp.ne.s32.totalorder %s62, %s63
      %p75 = scmp.eq.s32.totalorder %s32, 1
      %p76 = por %p74, %p75
      %p78 = scmp.ne.s32.totalorder %s63, %s77
      %p79 = scmp.eq.s32.totalorder %s32, 0
      %p80 = por %p78, %p79
      %s82 = sadd.s32 %s81, 1
      %p85 = scmp.eq.s32.totalorder %s26, 1
      %p86 = scmp.ne.s32.totalorder %s81, %s83
      %p87 = scmp.eq.s32.totalorder %s26, 0
      %p88 = por %p86, %p87
      %p89 = scmp.ne.s32.totalorder %s81, %s83
      %p90 = scmp.eq.s32.totalorder %s31, 1
      %p91 = por %p89, %p90
      %p92 = scmp.ne.s32.totalorder %s83, %s84
      %p93 = scmp.eq.s32.totalorder %s31, 0
      %p94 = por %p92, %p93
      %p95 = scmp.ne.s32.totalorder %s83, %s84
      %p96 = scmp.eq.s32.totalorder %s32, 1
      %p97 = por %p95, %p96
      %p99 = scmp.ne.s32.totalorder %s84, %s98
      %p100 = scmp.eq.s32.totalorder %s32, 0
      %p101 = por %p99, %p100
      %s103 = sadd.s32 %s102, 1
      %p106 = scmp.eq.s32.totalorder %s26, 1
      %p107 = scmp.ne.s32.totalorder %s102, %s104
      %p108 = scmp.eq.s32.totalorder %s26, 0
      %p109 = por %p107, %p108
      %p110 = scmp.ne.s32.totalorder %s102, %s104
      %p111 = scmp.eq.s32.totalorder %s31, 1
      %p112 = por %p110, %p111
      %p113 = scmp.ne.s32.totalorder %s104, %s105
      %p114 = scmp.eq.s32.totalorder %s31, 0
      %p115 = por %p113, %p114
      %p116 = scmp.ne.s32.totalorder %s104, %s105
      %p117 = scmp.eq.s32.totalorder %s32, 1
      %p118 = por %p116, %p117
      %p120 = scmp.ne.s32.totalorder %s105, %s119
      %p121 = scmp.eq.s32.totalorder %s32, 0
      %p122 = por %p120, %p121
      %s124 = sadd.s32 %s123, 1
      %p127 = scmp.eq.s32.totalorder %s26, 1
      %p128 = scmp.ne.s32.totalorder %s123, %s125
      %p129 = scmp.eq.s32.totalorder %s26, 0
      %p130 = por %p128, %p129
      %p131 = scmp.ne.s32.totalorder %s123, %s125
      %p132 = scmp.eq.s32.totalorder %s31, 1
      %p133 = por %p131, %p132
      %p134 = scmp.ne.s32.totalorder %s125, %s126
      %p135 = scmp.eq.s32.totalorder %s31, 0
      %p136 = por %p134, %p135
      %p137 = scmp.ne.s32.totalorder %s125, %s126
      %p138 = scmp.eq.s32.totalorder %s32, 1
      %p139 = por %p137, %p138
      %p141 = scmp.ne.s32.totalorder %s126, %s140
      %p142 = scmp.eq.s32.totalorder %s32, 0
      %p143 = por %p141, %p142
      %s145 = sadd.s32 %s144, 1
      %p148 = scmp.eq.s32.totalorder %s26, 1
      %p149 = scmp.ne.s32.totalorder %s144, %s146
      %p150 = scmp.eq.s32.totalorder %s26, 0
      %p151 = por %p149, %p150
      %p152 = scmp.ne.s32.totalorder %s144, %s146
      %p153 = scmp.eq.s32.totalorder %s31, 1
      %p154 = por %p152, %p153
      %p155 = scmp.ne.s32.totalorder %s146, %s147
      %p156 = scmp.eq.s32.totalorder %s31, 0
      %p157 = por %p155, %p156
      %p158 = scmp.ne.s32.totalorder %s146, %s147
      %p159 = scmp.eq.s32.totalorder %s32, 1
      %p160 = por %p158, %p159
      %p162 = scmp.ne.s32.totalorder %s147, %s161
      %p163 = scmp.eq.s32.totalorder %s32, 0
      %p164 = por %p162, %p163
      %s166 = sadd.s32 %s165, 1
      %p169 = scmp.eq.s32.totalorder %s26, 1
      %p170 = scmp.ne.s32.totalorder %s165, %s167
      %p171 = scmp.eq.s32.totalorder %s26, 0
      %p172 = por %p170, %p171
      %p173 = scmp.ne.s32.totalorder %s165, %s167
      %p174 = scmp.eq.s32.totalorder %s31, 1
      %p175 = por %p173, %p174
      %p176 = scmp.ne.s32.totalorder %s167, %s168
      %p177 = scmp.eq.s32.totalorder %s31, 0
      %p178 = por %p176, %p177
      %p179 = scmp.ne.s32.totalorder %s167, %s168
      %p180 = scmp.eq.s32.totalorder %s32, 1
      %p181 = por %p179, %p180
      %p183 = scmp.ne.s32.totalorder %s168, %s182
      %p184 = scmp.eq.s32.totalorder %s32, 0
      %p185 = por %p183, %p184
      %s187 = sadd.s32 %s186, 1
      %p190 = scmp.eq.s32.totalorder %s26, 1
      %p191 = scmp.ne.s32.totalorder %s186, %s188
      %p192 = scmp.eq.s32.totalorder %s26, 0
      %p193 = por %p191, %p192
      %p194 = scmp.ne.s32.totalorder %s186, %s188
      %p195 = scmp.eq.s32.totalorder %s31, 1
      %p196 = por %p194, %p195
      %p197 = scmp.ne.s32.totalorder %s188, %s189
      %p198 = scmp.eq.s32.totalorder %s31, 0
      %p199 = por %p197, %p198
      %p200 = scmp.ne.s32.totalorder %s188, %s189
      %p201 = scmp.eq.s32.totalorder %s32, 1
      %p202 = por %p200, %p201
      %p204 = scmp.ne.s32.totalorder %s189, %s203
      %p205 = scmp.eq.s32.totalorder %s32, 0
      %p206 = por %p204, %p205
      %s208 = sadd.s32 %s207, 1
      %p211 = scmp.eq.s32.totalorder %s26, 1
      %p212 = scmp.ne.s32.totalorder %s207, %s209
      %p213 = scmp.eq.s32.totalorder %s26, 0
      %p214 = por %p212, %p213
      %p215 = scmp.ne.s32.totalorder %s207, %s209
      %p216 = scmp.eq.s32.totalorder %s31, 1
      %p217 = por %p215, %p216
      %p218 = scmp.ne.s32.totalorder %s209, %s210
      %p219 = scmp.eq.s32.totalorder %s31, 0
      %p220 = por %p218, %p219
      %p221 = scmp.ne.s32.totalorder %s209, %s210
      %p222 = scmp.eq.s32.totalorder %s32, 1
      %p223 = por %p221, %p222
      %p225 = scmp.ne.s32.totalorder %s210, %s224
      %p226 = scmp.eq.s32.totalorder %s32, 0
      %p227 = por %p225, %p226
      %s229 = sadd.s32 %s228, 1
      %p232 = scmp.eq.s32.totalorder %s26, 1
      %p233 = scmp.ne.s32.totalorder %s228, %s230
      %p234 = scmp.eq.s32.totalorder %s26, 0
      %p235 = por %p233, %p234
      %p236 = scmp.ne.s32.totalorder %s228, %s230
      %p237 = scmp.eq.s32.totalorder %s31, 1
      %p238 = por %p236, %p237
      %p239 = scmp.ne.s32.totalorder %s230, %s231
      %p240 = scmp.eq.s32.totalorder %s31, 0
      %p241 = por %p239, %p240
      %p242 = scmp.ne.s32.totalorder %s230, %s231
      %p243 = scmp.eq.s32.totalorder %s32, 1
      %p244 = por %p242, %p243
      %p246 = scmp.ne.s32.totalorder %s231, %s245
      %p247 = scmp.eq.s32.totalorder %s32, 0
      %p248 = por %p246, %p247
      %s250 = sadd.s32 %s249, 1
      %p253 = scmp.eq.s32.totalorder %s26, 1
      %p254 = scmp.ne.s32.totalorder %s249, %s251
      %p255 = scmp.eq.s32.totalorder %s26, 0
      %p256 = por %p254, %p255
      %p257 = scmp.ne.s32.totalorder %s249, %s251
      %p258 = scmp.eq.s32.totalorder %s31, 1
      %p259 = por %p257, %p258
      %p260 = scmp.ne.s32.totalorder %s251, %s252
      %p261 = scmp.eq.s32.totalorder %s31, 0
      %p262 = por %p260, %p261
      %p263 = scmp.ne.s32.totalorder %s251, %s252
      %p264 = scmp.eq.s32.totalorder %s32, 1
      %p265 = por %p263, %p264
      %p267 = scmp.ne.s32.totalorder %s252, %s266
      %p268 = scmp.eq.s32.totalorder %s32, 0
      %p269 = por %p267, %p268
      %s271 = sadd.s32 %s270, 1
      %p274 = scmp.eq.s32.totalorder %s26, 1
      %p275 = scmp.ne.s32.totalorder %s270, %s272
      %p276 = scmp.eq.s32.totalorder %s26, 0
      %p277 = por %p275, %p276
      %p278 = scmp.ne.s32.totalorder %s270, %s272
      %p279 = scmp.eq.s32.totalorder %s31, 1
      %p280 = por %p278, %p279
      %p281 = scmp.ne.s32.totalorder %s272, %s273
      %p282 = scmp.eq.s32.totalorder %s31, 0
      %p283 = por %p281, %p282
      %p284 = scmp.ne.s32.totalorder %s272, %s273
      %p285 = scmp.eq.s32.totalorder %s32, 1
      %p286 = por %p284, %p285
      %p288 = scmp.ne.s32.totalorder %s273, %s287
      %p289 = scmp.eq.s32.totalorder %s32, 0
      %p290 = por %p288, %p289
      %s291 = ssub.s32 %s26, %s33
      %p292 = scmp.eq.s32.totalorder %s291, 0
      %s294 = sadd.s32 %s293, 1
      %s295 = scalar_select %p292, %s293, %s294
      %p298 = pneg %p292
      %p299 = scmp.eq.s32.totalorder %s26, 1
      %p300 = por %p298, %p299
      %p301 = scmp.ne.s32.totalorder %s293, %s296
      %p302 = scmp.eq.s32.totalorder %s26, 0
      %p303 = por %p301, %p302
      %p304 = scmp.ne.s32.totalorder %s293, %s296
      %p305 = scmp.eq.s32.totalorder %s31, 1
      %p306 = por %p304, %p305
      %p307 = scmp.ne.s32.totalorder %s296, %s297
      %p308 = scmp.eq.s32.totalorder %s31, 0
      %p309 = por %p307, %p308
      %p310 = scmp.ne.s32.totalorder %s296, %s297
      %p311 = scmp.eq.s32.totalorder %s32, 1
      %p312 = por %p310, %p311
      %p314 = scmp.ne.s32.totalorder %s297, %s313
      %p315 = scmp.eq.s32.totalorder %s32, 0
      %p316 = por %p314, %p315
      %p317 = scmp.le.s32.totalorder 1, %s26
      %p318 = scmp.lt.s32.totalorder %s26, 3
      %p319 = pnand %p317, %p318
      %p320 = pneg %p319
      // Predicated region
      $region9: #{tpu_custom_call.1} parent=5 // pred_check
        _
      $region10: #{tpu_custom_call.1} parent=5 // pred_check_branch
        %322 = sbr.rel (%p319) target = $region12
      $region11: #{tpu_custom_call.1} parent=5 // pred_region
        %s323 = ssub.s32 %s26, 1
        // Predicated region
        $region13: #{tpu_custom_call.1} parent=11 // pred_check
          %p324 = pneg %p73
        $region14: #{tpu_custom_call.1} parent=11 // pred_check_branch
          %326 = sbr.rel (%p324) target = $region16
        $region15: #{tpu_custom_call.1} parent=11 // pred_region
          _
        $region16: #{tpu_custom_call.1} parent=11 // pred_fallthru
          _
        // Predicated region
        $region17: #{tpu_custom_call.1} parent=11 // pred_check
          %p327 = pneg %p94
        $region18: #{tpu_custom_call.1} parent=11 // pred_check_branch
          %329 = sbr.rel (%p327) target = $region20
        $region19: #{tpu_custom_call.1} parent=11 // pred_region
          _
        $region20: #{tpu_custom_call.1} parent=11 // pred_fallthru
          _
        // Predicated region
        $region21: #{tpu_custom_call.1} parent=11 // pred_check
          %p330 = pneg %p115
        $region22: #{tpu_custom_call.1} parent=11 // pred_check_branch
          %332 = sbr.rel (%p330) target = $region24
        $region23: #{tpu_custom_call.1} parent=11 // pred_region
          %s334 = ssub.s32 24576, 24576
          %335 = vsyncadd [#allocation6], %s334
          %s336 = sshll.u32 [#allocation5], 4
          %s337 = int_to_ptr.vmem [resolvable:$true] %s336
          %342 = dma.hbm_to_vmem [thread:$0]  %s3, 24576, %s337, [#allocation6], 768, 768, 48
        $region24: #{tpu_custom_call.1} parent=11 // pred_fallthru
          _
        // Predicated region
        $region25: #{tpu_custom_call.1} parent=11 // pred_check
          %p343 = pneg %p136
        $region26: #{tpu_custom_call.1} parent=11 // pred_check_branch
          %345 = sbr.rel (%p343) target = $region28
        $region27: #{tpu_custom_call.1} parent=11 // pred_region
          %s347 = ssub.s32 8192, 8192
          %348 = vsyncadd [#allocation6], %s347
          %s349 = sshll.u32 [#allocation7], 4
          %s350 = int_to_ptr.vmem [resolvable:$true] %s349
          %355 = dma.hbm_to_vmem [thread:$0]  %s4, 8192, %s350, [#allocation6], 256, 256, 16
        $region28: #{tpu_custom_call.1} parent=11 // pred_fallthru
          _
        // Predicated region
        $region29: #{tpu_custom_call.1} parent=11 // pred_check
          %p356 = pneg %p157
        $region30: #{tpu_custom_call.1} parent=11 // pred_check_branch
          %358 = sbr.rel (%p356) target = $region32
        $region31: #{tpu_custom_call.1} parent=11 // pred_region
          _
        $region32: #{tpu_custom_call.1} parent=11 // pred_fallthru
          _
        // Predicated region
        $region33: #{tpu_custom_call.1} parent=11 // pred_check
          %p359 = pneg %p178
        $region34: #{tpu_custom_call.1} parent=11 // pred_check_branch
          %361 = sbr.rel (%p359) target = $region36
        $region35: #{tpu_custom_call.1} parent=11 // pred_region
          _
        $region36: #{tpu_custom_call.1} parent=11 // pred_fallthru
          _
        // Predicated region
        $region37: #{tpu_custom_call.1} parent=11 // pred_check
          %p362 = pneg %p199
        $region38: #{tpu_custom_call.1} parent=11 // pred_check_branch
          %364 = sbr.rel (%p362) target = $region40
        $region39: #{tpu_custom_call.1} parent=11 // pred_region
          _
        $region40: #{tpu_custom_call.1} parent=11 // pred_fallthru
          _
        // Predicated region
        $region41: #{tpu_custom_call.1} parent=11 // pred_check
          %p365 = pneg %p220
        $region42: #{tpu_custom_call.1} parent=11 // pred_check_branch
          %367 = sbr.rel (%p365) target = $region44
        $region43: #{tpu_custom_call.1} parent=11 // pred_region
          %s369 = ssub.s32 32768, 32768
          %370 = vsyncadd [#allocation9], %s369
          %s371 = sshll.u32 [#allocation8], 4
          %s372 = int_to_ptr.vmem [resolvable:$true] %s371
          %377 = dma.hbm_to_vmem [thread:$0]  %s8, 32768, %s372, [#allocation9], 1024, 1024, 64
        $region44: #{tpu_custom_call.1} parent=11 // pred_fallthru
          _
        // Predicated region
        $region45: #{tpu_custom_call.1} parent=11 // pred_check
          %p378 = pneg %p241
        $region46: #{tpu_custom_call.1} parent=11 // pred_check_branch
          %380 = sbr.rel (%p378) target = $region48
        $region47: #{tpu_custom_call.1} parent=11 // pred_region
          _
        $region48: #{tpu_custom_call.1} parent=11 // pred_fallthru
          _
        // Predicated region
        $region49: #{tpu_custom_call.1} parent=11 // pred_check
          %p381 = pneg %p262
        $region50: #{tpu_custom_call.1} parent=11 // pred_check_branch
          %383 = sbr.rel (%p381) target = $region52
        $region51: #{tpu_custom_call.1} parent=11 // pred_region
          %s385 = ssub.s32 32768, 32768
          %386 = vsyncadd [#allocation9], %s385
          %s387 = sshll.u32 [#allocation10], 4
          %s388 = int_to_ptr.vmem [resolvable:$true] %s387
          %393 = dma.hbm_to_vmem [thread:$0]  %s10, 32768, %s388, [#allocation9], 256, 256, 16
        $region52: #{tpu_custom_call.1} parent=11 // pred_fallthru
          _
        // Predicated region
        $region53: #{tpu_custom_call.1} parent=11 // pred_check
          %p394 = pneg %p283
        $region54: #{tpu_custom_call.1} parent=11 // pred_check_branch
          %396 = sbr.rel (%p394) target = $region56
        $region55: #{tpu_custom_call.1} parent=11 // pred_region
          _
        $region56: #{tpu_custom_call.1} parent=11 // pred_fallthru
          _
      $region12: #{tpu_custom_call.1} parent=5 // pred_fallthru
        _
      %p397 = scmp.lt.s32.totalorder %s26, 2
      // Predicated region
      $region57: #{tpu_custom_call.1} parent=5 // pred_check
        %p398 = pneg %p397
      $region58: #{tpu_custom_call.1} parent=5 // pred_check_branch
        %400 = sbr.rel (%p398) target = $region60
      $region59: #{tpu_custom_call.1} parent=5 // pred_region
        // Predicated region
        $region61: #{tpu_custom_call.1} parent=59 // pred_check
          %p401 = pneg %p46
        $region62: #{tpu_custom_call.1} parent=59 // pred_check_branch
          %403 = sbr.rel (%p401) target = $region64
        $region63: #{tpu_custom_call.1} parent=59 // pred_region
          %s404 = sand.u32 %s36, 1
          %s405 = scalar_lea.sflag [#allocation3], %s404
          %s406 = sand.u32 %s36, 1
          %s407 = smul.addr %s406, 16
          %s408 = scalar_lea.vmem [#allocation2], %s407
          %s410 = ssub.s32 256, 256
          %411 = vsyncadd %s405, %s410
          %s412 = smul.addr %s26, 2
          %s413 = smul.addr %s412, 128
          %s414 = scalar_lea.hbm %s0, %s413
          %s416 = sshll.u32 %s408, 4
          %s417 = int_to_ptr.vmem [resolvable:$true] %s416
          %419 = dma.hbm_to_vmem [thread:$0]  %s414, 256, %s417, %s405
        $region64: #{tpu_custom_call.1} parent=59 // pred_fallthru
          _
      $region60: #{tpu_custom_call.1} parent=5 // pred_fallthru
        _
      %p420 = scmp.le.s32.totalorder 1, %s26
      %p421 = scmp.lt.s32.totalorder %s26, 3
      %p422 = pnand %p420, %p421
      %p423 = pneg %p422
      // Predicated region
      $region65: #{tpu_custom_call.1} parent=5 // pred_check
        _
      $region66: #{tpu_custom_call.1} parent=5 // pred_check_branch
        %425 = sbr.rel (%p422) target = $region68
      $region67: #{tpu_custom_call.1} parent=5 // pred_region
        %s426 = ssub.s32 %s26, 1
        %s427 = sand.u32 %s39, 1
        %s428 = scalar_lea.sflag [#allocation3], %s427
        %s429 = sand.u32 %s39, 1
        %s430 = smul.addr %s429, 16
        %s431 = scalar_lea.vmem [#allocation2], %s430
        // Predicated region
        $region69: #{tpu_custom_call.1} parent=67 // pred_check
          %p432 = pneg %p52
        $region70: #{tpu_custom_call.1} parent=67 // pred_check_branch
          %434 = sbr.rel (%p432) target = $region72
        $region71: #{tpu_custom_call.1} parent=67 // pred_region
          %435 = dma.done %s428, 256
        $region72: #{tpu_custom_call.1} parent=67 // pred_fallthru
          _
        // Predicated region
        $region73: #{tpu_custom_call.1} parent=67 // pred_check
          %p436 = pneg %p115
        $region74: #{tpu_custom_call.1} parent=67 // pred_check_branch
          %438 = sbr.rel (%p436) target = $region76
        $region75: #{tpu_custom_call.1} parent=67 // pred_region
          %439 = dma.done [#allocation6], 24576
        $region76: #{tpu_custom_call.1} parent=67 // pred_fallthru
          _
        // Predicated region
        $region77: #{tpu_custom_call.1} parent=67 // pred_check
          %p440 = pneg %p136
        $region78: #{tpu_custom_call.1} parent=67 // pred_check_branch
          %442 = sbr.rel (%p440) target = $region80
        $region79: #{tpu_custom_call.1} parent=67 // pred_region
          %443 = dma.done [#allocation6], 8192
        $region80: #{tpu_custom_call.1} parent=67 // pred_fallthru
          _
        // Predicated region
        $region81: #{tpu_custom_call.1} parent=67 // pred_check
          %p444 = pneg %p220
        $region82: #{tpu_custom_call.1} parent=67 // pred_check_branch
          %446 = sbr.rel (%p444) target = $region84
        $region83: #{tpu_custom_call.1} parent=67 // pred_region
          %447 = dma.done [#allocation9], 32768
        $region84: #{tpu_custom_call.1} parent=67 // pred_fallthru
          _
        // Predicated region
        $region85: #{tpu_custom_call.1} parent=67 // pred_check
          %p448 = pneg %p262
        $region86: #{tpu_custom_call.1} parent=67 // pred_check_branch
          %450 = sbr.rel (%p448) target = $region88
        $region87: #{tpu_custom_call.1} parent=67 // pred_region
          %451 = dma.done [#allocation9], 32768
        $region88: #{tpu_custom_call.1} parent=67 // pred_fallthru
          _
        %s452 = sand.u32 %s39, 1
        %s453 = scalar_lea.sflag [#allocation3], %s452
        %s454 = sand.u32 %s39, 1
        %s455 = smul.addr %s454, 16
        %s456 = scalar_lea.vmem [#allocation2], %s455
        %p457 = pneg %p52
        %p458 = pneg %p49
        %p459 = pneg %p73
        %p460 = pneg %p70
        %p461 = pneg %p94
        %p462 = pneg %p91
        %p463 = pneg %p115
        %p464 = pneg %p112
        %p465 = pneg %p136
        %p466 = pneg %p133
        %p467 = pneg %p157
        %p468 = pneg %p154
        %p469 = pneg %p178
        %p470 = pneg %p175
        %p471 = pneg %p199
        %p472 = pneg %p196
        %p473 = pneg %p220
        %p474 = pneg %p217
        %p475 = pneg %p241
        %p476 = pneg %p238
        %p477 = pneg %p262
        %p478 = pneg %p259
        %p479 = pneg %p283
        %p480 = pneg %p280
        %p481 = pneg %p309
        %p482 = pneg %p306
        %s483 = sand.u32 %s296, 1
        %s484 = scalar_lea.sflag [#allocation4], %s483
        %s485 = sand.u32 %s296, 1
        %s486 = smul.addr %s485, 16
        %s487 = scalar_lea.vmem [#allocation11], %s486
        %v488 = vld [vmem:[%s431] sm:$0xff]
        %v489 = vld [vmem:[%s431 + $0x8] sm:$0xff]
        %v490 = vld [vmem:[%s1] sm:$0x3]
        %v491 = vld [vmem:[%s2] sm:$0x3]
        %v492 = vadd.f32 %v488, %v489
        %493 = vadd.xlane.f32.xlu0 %v492
        %v494 = vpop.xlane.xlu0 %493
        %v495 = vrcp.pop 256.0
        %v496 = vmul.f32 %v494, %v495
        %v497 = vsub.f32 %v488, %v496
        %v498 = vsub.f32 %v489, %v496
        %v499 = vmul.f32 %v497, %v497
        %v500 = vmul.f32 %v498, %v498
        %v501 = vadd.f32 %v499, %v500
        %502 = vadd.xlane.f32.xlu0 %v501
        %v503 = vpop.xlane.xlu0 %502
        %v504 = vmul.f32 %v503, %v495
        %v505 = vadd.f32 %v504, 1e-05
        %v506 = vrsqrt.pop %v505
        %v507 = vmul.f32 %v497, %v506
        %v508 = vmul.f32 %v498, %v506
        %v510 = vlaneseq
        %v511 = vshrl.u32 %v510, 7
        %v512 = vsub.s32 0, %v511
        %v513 = vrot.slane %v490, %v512
        %v514 = vlaneseq
        %v515 = vshrl.u32 %v514, 7
        %v516 = vsub.s32 1, %v515
        %v517 = vrot.slane %v490, %v516
        %v520 = vmul.f32 %v507, %v513
        %v521 = vmul.f32 %v508, %v517
        %v523 = vlaneseq
        %v524 = vshrl.u32 %v523, 7
        %v525 = vsub.s32 0, %v524
        %v526 = vrot.slane %v491, %v525
        %v527 = vlaneseq
        %v528 = vshrl.u32 %v527, 7
        %v529 = vsub.s32 1, %v528
        %v530 = vrot.slane %v491, %v529
        %v533 = vadd.f32 %v520, %v526
        %v534 = vadd.f32 %v521, %v530
        %v535 = vld [vmem:[#allocation5] sm:$0xff]
        %v536 = vld [vmem:[#allocation5 + $0x8] sm:$0xff]
        %v537 = vld [vmem:[#allocation5 + $0x10] sm:$0xff]
        %v538 = vld [vmem:[#allocation5 + $0x18] sm:$0xff]
        %v539 = vld [vmem:[#allocation5 + $0x20] sm:$0xff]
        %v540 = vld [vmem:[#allocation5 + $0x28] sm:$0xff]
        %v541 = vld [vmem:[#allocation5 + $0x30] sm:$0xff]
        %v542 = vld [vmem:[#allocation5 + $0x38] sm:$0xff]
        %v543 = vld [vmem:[#allocation5 + $0x40] sm:$0xff]
        %v544 = vld [vmem:[#allocation5 + $0x48] sm:$0xff]
        %v545 = vld [vmem:[#allocation5 + $0x50] sm:$0xff]
        %v546 = vld [vmem:[#allocation5 + $0x58] sm:$0xff]
        %v547 = vld [vmem:[#allocation5 + $0x60] sm:$0xff]
        %v548 = vld [vmem:[#allocation5 + $0x68] sm:$0xff]
        %v549 = vld [vmem:[#allocation5 + $0x70] sm:$0xff]
        %v550 = vld [vmem:[#allocation5 + $0x78] sm:$0xff]
        %v551 = vld [vmem:[#allocation5 + $0x80] sm:$0xff]
        %v552 = vld [vmem:[#allocation5 + $0x88] sm:$0xff]
        %v553 = vld [vmem:[#allocation5 + $0x90] sm:$0xff]
        %v554 = vld [vmem:[#allocation5 + $0x98] sm:$0xff]
        %v555 = vld [vmem:[#allocation5 + $0xa0] sm:$0xff]
        %v556 = vld [vmem:[#allocation5 + $0xa8] sm:$0xff]
        %v557 = vld [vmem:[#allocation5 + $0xb0] sm:$0xff]
        %v558 = vld [vmem:[#allocation5 + $0xb8] sm:$0xff]
        %v559 = vld [vmem:[#allocation5 + $0xc0] sm:$0xff]
        %v560 = vld [vmem:[#allocation5 + $0xc8] sm:$0xff]
        %v561 = vld [vmem:[#allocation5 + $0xd0] sm:$0xff]
        %v562 = vld [vmem:[#allocation5 + $0xd8] sm:$0xff]
        %v563 = vld [vmem:[#allocation5 + $0xe0] sm:$0xff]
        %v564 = vld [vmem:[#allocation5 + $0xe8] sm:$0xff]
        %v565 = vld [vmem:[#allocation5 + $0xf0] sm:$0xff]
        %v566 = vld [vmem:[#allocation5 + $0xf8] sm:$0xff]
        %v567 = vld [vmem:[#allocation5 + $0x100] sm:$0xff]
        %v568 = vld [vmem:[#allocation5 + $0x108] sm:$0xff]
        %v569 = vld [vmem:[#allocation5 + $0x110] sm:$0xff]
        %v570 = vld [vmem:[#allocation5 + $0x118] sm:$0xff]
        %v571 = vld [vmem:[#allocation5 + $0x120] sm:$0xff]
        %v572 = vld [vmem:[#allocation5 + $0x128] sm:$0xff]
        %v573 = vld [vmem:[#allocation5 + $0x130] sm:$0xff]
        %v574 = vld [vmem:[#allocation5 + $0x138] sm:$0xff]
        %v575 = vld [vmem:[#allocation5 + $0x140] sm:$0xff]
        %v576 = vld [vmem:[#allocation5 + $0x148] sm:$0xff]
        %v577 = vld [vmem:[#allocation5 + $0x150] sm:$0xff]
        %v578 = vld [vmem:[#allocation5 + $0x158] sm:$0xff]
        %v579 = vld [vmem:[#allocation5 + $0x160] sm:$0xff]
        %v580 = vld [vmem:[#allocation5 + $0x168] sm:$0xff]
        %v581 = vld [vmem:[#allocation5 + $0x170] sm:$0xff]
        %v582 = vld [vmem:[#allocation5 + $0x178] sm:$0xff]
        %v583 = vld [vmem:[#allocation5 + $0x180] sm:$0xff]
        %v584 = vld [vmem:[#allocation5 + $0x188] sm:$0xff]
        %v585 = vld [vmem:[#allocation5 + $0x190] sm:$0xff]
        %v586 = vld [vmem:[#allocation5 + $0x198] sm:$0xff]
        %v587 = vld [vmem:[#allocation5 + $0x1a0] sm:$0xff]
        %v588 = vld [vmem:[#allocation5 + $0x1a8] sm:$0xff]
        %v589 = vld [vmem:[#allocation5 + $0x1b0] sm:$0xff]
        %v590 = vld [vmem:[#allocation5 + $0x1b8] sm:$0xff]
        %v591 = vld [vmem:[#allocation5 + $0x1c0] sm:$0xff]
        %v592 = vld [vmem:[#allocation5 + $0x1c8] sm:$0xff]
        %v593 = vld [vmem:[#allocation5 + $0x1d0] sm:$0xff]
        %v594 = vld [vmem:[#allocation5 + $0x1d8] sm:$0xff]
        %v595 = vld [vmem:[#allocation5 + $0x1e0] sm:$0xff]
        %v596 = vld [vmem:[#allocation5 + $0x1e8] sm:$0xff]
        %v597 = vld [vmem:[#allocation5 + $0x1f0] sm:$0xff]
        %v598 = vld [vmem:[#allocation5 + $0x1f8] sm:$0xff]
        %v599 = vld [vmem:[#allocation5 + $0x200] sm:$0xff]
        %v600 = vld [vmem:[#allocation5 + $0x208] sm:$0xff]
        %v601 = vld [vmem:[#allocation5 + $0x210] sm:$0xff]
        %v602 = vld [vmem:[#allocation5 + $0x218] sm:$0xff]
        %v603 = vld [vmem:[#allocation5 + $0x220] sm:$0xff]
        %v604 = vld [vmem:[#allocation5 + $0x228] sm:$0xff]
        %v605 = vld [vmem:[#allocation5 + $0x230] sm:$0xff]
        %v606 = vld [vmem:[#allocation5 + $0x238] sm:$0xff]
        %v607 = vld [vmem:[#allocation5 + $0x240] sm:$0xff]
        %v608 = vld [vmem:[#allocation5 + $0x248] sm:$0xff]
        %v609 = vld [vmem:[#allocation5 + $0x250] sm:$0xff]
        %v610 = vld [vmem:[#allocation5 + $0x258] sm:$0xff]
        %v611 = vld [vmem:[#allocation5 + $0x260] sm:$0xff]
        %v612 = vld [vmem:[#allocation5 + $0x268] sm:$0xff]
        %v613 = vld [vmem:[#allocation5 + $0x270] sm:$0xff]
        %v614 = vld [vmem:[#allocation5 + $0x278] sm:$0xff]
        %v615 = vld [vmem:[#allocation5 + $0x280] sm:$0xff]
        %v616 = vld [vmem:[#allocation5 + $0x288] sm:$0xff]
        %v617 = vld [vmem:[#allocation5 + $0x290] sm:$0xff]
        %v618 = vld [vmem:[#allocation5 + $0x298] sm:$0xff]
        %v619 = vld [vmem:[#allocation5 + $0x2a0] sm:$0xff]
        %v620 = vld [vmem:[#allocation5 + $0x2a8] sm:$0xff]
        %v621 = vld [vmem:[#allocation5 + $0x2b0] sm:$0xff]
        %v622 = vld [vmem:[#allocation5 + $0x2b8] sm:$0xff]
        %v623 = vld [vmem:[#allocation5 + $0x2c0] sm:$0xff]
        %v624 = vld [vmem:[#allocation5 + $0x2c8] sm:$0xff]
        %v625 = vld [vmem:[#allocation5 + $0x2d0] sm:$0xff]
        %v626 = vld [vmem:[#allocation5 + $0x2d8] sm:$0xff]
        %v627 = vld [vmem:[#allocation5 + $0x2e0] sm:$0xff]
        %v628 = vld [vmem:[#allocation5 + $0x2e8] sm:$0xff]
        %v629 = vld [vmem:[#allocation5 + $0x2f0] sm:$0xff]
        %v630 = vld [vmem:[#allocation5 + $0x2f8] sm:$0xff]
        %v631 = vld [vmem:[#allocation5 + $0x300] sm:$0xff]
        %v632 = vld [vmem:[#allocation5 + $0x308] sm:$0xff]
        %v633 = vld [vmem:[#allocation5 + $0x310] sm:$0xff]
        %v634 = vld [vmem:[#allocation5 + $0x318] sm:$0xff]
        %v635 = vld [vmem:[#allocation5 + $0x320] sm:$0xff]
        %v636 = vld [vmem:[#allocation5 + $0x328] sm:$0xff]
        %v637 = vld [vmem:[#allocation5 + $0x330] sm:$0xff]
        %v638 = vld [vmem:[#allocation5 + $0x338] sm:$0xff]
        %v639 = vld [vmem:[#allocation5 + $0x340] sm:$0xff]
        %v640 = vld [vmem:[#allocation5 + $0x348] sm:$0xff]
        %v641 = vld [vmem:[#allocation5 + $0x350] sm:$0xff]
        %v642 = vld [vmem:[#allocation5 + $0x358] sm:$0xff]
        %v643 = vld [vmem:[#allocation5 + $0x360] sm:$0xff]
        %v644 = vld [vmem:[#allocation5 + $0x368] sm:$0xff]
        %v645 = vld [vmem:[#allocation5 + $0x370] sm:$0xff]
        %v646 = vld [vmem:[#allocation5 + $0x378] sm:$0xff]
        %v647 = vld [vmem:[#allocation5 + $0x380] sm:$0xff]
        %v648 = vld [vmem:[#allocation5 + $0x388] sm:$0xff]
        %v649 = vld [vmem:[#allocation5 + $0x390] sm:$0xff]
        %v650 = vld [vmem:[#allocation5 + $0x398] sm:$0xff]
        %v651 = vld [vmem:[#allocation5 + $0x3a0] sm:$0xff]
        %v652 = vld [vmem:[#allocation5 + $0x3a8] sm:$0xff]
        %v653 = vld [vmem:[#allocation5 + $0x3b0] sm:$0xff]
        %v654 = vld [vmem:[#allocation5 + $0x3b8] sm:$0xff]
        %v655 = vld [vmem:[#allocation5 + $0x3c0] sm:$0xff]
        %v656 = vld [vmem:[#allocation5 + $0x3c8] sm:$0xff]
        %v657 = vld [vmem:[#allocation5 + $0x3d0] sm:$0xff]
        %v658 = vld [vmem:[#allocation5 + $0x3d8] sm:$0xff]
        %v659 = vld [vmem:[#allocation5 + $0x3e0] sm:$0xff]
        %v660 = vld [vmem:[#allocation5 + $0x3e8] sm:$0xff]
        %v661 = vld [vmem:[#allocation5 + $0x3f0] sm:$0xff]
        %v662 = vld [vmem:[#allocation5 + $0x3f8] sm:$0xff]
        %v663 = vld [vmem:[#allocation5 + $0x400] sm:$0xff]
        %v664 = vld [vmem:[#allocation5 + $0x408] sm:$0xff]
        %v665 = vld [vmem:[#allocation5 + $0x410] sm:$0xff]
        %v666 = vld [vmem:[#allocation5 + $0x418] sm:$0xff]
        %v667 = vld [vmem:[#allocation5 + $0x420] sm:$0xff]
        %v668 = vld [vmem:[#allocation5 + $0x428] sm:$0xff]
        %v669 = vld [vmem:[#allocation5 + $0x430] sm:$0xff]
        %v670 = vld [vmem:[#allocation5 + $0x438] sm:$0xff]
        %v671 = vld [vmem:[#allocation5 + $0x440] sm:$0xff]
        %v672 = vld [vmem:[#allocation5 + $0x448] sm:$0xff]
        %v673 = vld [vmem:[#allocation5 + $0x450] sm:$0xff]
        %v674 = vld [vmem:[#allocation5 + $0x458] sm:$0xff]
        %v675 = vld [vmem:[#allocation5 + $0x460] sm:$0xff]
        %v676 = vld [vmem:[#allocation5 + $0x468] sm:$0xff]
        %v677 = vld [vmem:[#allocation5 + $0x470] sm:$0xff]
        %v678 = vld [vmem:[#allocation5 + $0x478] sm:$0xff]
        %v679 = vld [vmem:[#allocation5 + $0x480] sm:$0xff]
        %v680 = vld [vmem:[#allocation5 + $0x488] sm:$0xff]
        %v681 = vld [vmem:[#allocation5 + $0x490] sm:$0xff]
        %v682 = vld [vmem:[#allocation5 + $0x498] sm:$0xff]
        %v683 = vld [vmem:[#allocation5 + $0x4a0] sm:$0xff]
        %v684 = vld [vmem:[#allocation5 + $0x4a8] sm:$0xff]
        %v685 = vld [vmem:[#allocation5 + $0x4b0] sm:$0xff]
        %v686 = vld [vmem:[#allocation5 + $0x4b8] sm:$0xff]
        %v687 = vld [vmem:[#allocation5 + $0x4c0] sm:$0xff]
        %v688 = vld [vmem:[#allocation5 + $0x4c8] sm:$0xff]
        %v689 = vld [vmem:[#allocation5 + $0x4d0] sm:$0xff]
        %v690 = vld [vmem:[#allocation5 + $0x4d8] sm:$0xff]
        %v691 = vld [vmem:[#allocation5 + $0x4e0] sm:$0xff]
        %v692 = vld [vmem:[#allocation5 + $0x4e8] sm:$0xff]
        %v693 = vld [vmem:[#allocation5 + $0x4f0] sm:$0xff]
        %v694 = vld [vmem:[#allocation5 + $0x4f8] sm:$0xff]
        %v695 = vld [vmem:[#allocation5 + $0x500] sm:$0xff]
        %v696 = vld [vmem:[#allocation5 + $0x508] sm:$0xff]
        %v697 = vld [vmem:[#allocation5 + $0x510] sm:$0xff]
        %v698 = vld [vmem:[#allocation5 + $0x518] sm:$0xff]
        %v699 = vld [vmem:[#allocation5 + $0x520] sm:$0xff]
        %v700 = vld [vmem:[#allocation5 + $0x528] sm:$0xff]
        %v701 = vld [vmem:[#allocation5 + $0x530] sm:$0xff]
        %v702 = vld [vmem:[#allocation5 + $0x538] sm:$0xff]
        %v703 = vld [vmem:[#allocation5 + $0x540] sm:$0xff]
        %v704 = vld [vmem:[#allocation5 + $0x548] sm:$0xff]
        %v705 = vld [vmem:[#allocation5 + $0x550] sm:$0xff]
        %v706 = vld [vmem:[#allocation5 + $0x558] sm:$0xff]
        %v707 = vld [vmem:[#allocation5 + $0x560] sm:$0xff]
        %v708 = vld [vmem:[#allocation5 + $0x568] sm:$0xff]
        %v709 = vld [vmem:[#allocation5 + $0x570] sm:$0xff]
        %v710 = vld [vmem:[#allocation5 + $0x578] sm:$0xff]
        %v711 = vld [vmem:[#allocation5 + $0x580] sm:$0xff]
        %v712 = vld [vmem:[#allocation5 + $0x588] sm:$0xff]
        %v713 = vld [vmem:[#allocation5 + $0x590] sm:$0xff]
        %v714 = vld [vmem:[#allocation5 + $0x598] sm:$0xff]
        %v715 = vld [vmem:[#allocation5 + $0x5a0] sm:$0xff]
        %v716 = vld [vmem:[#allocation5 + $0x5a8] sm:$0xff]
        %v717 = vld [vmem:[#allocation5 + $0x5b0] sm:$0xff]
        %v718 = vld [vmem:[#allocation5 + $0x5b8] sm:$0xff]
        %v719 = vld [vmem:[#allocation5 + $0x5c0] sm:$0xff]
        %v720 = vld [vmem:[#allocation5 + $0x5c8] sm:$0xff]
        %v721 = vld [vmem:[#allocation5 + $0x5d0] sm:$0xff]
        %v722 = vld [vmem:[#allocation5 + $0x5d8] sm:$0xff]
        %v723 = vld [vmem:[#allocation5 + $0x5e0] sm:$0xff]
        %v724 = vld [vmem:[#allocation5 + $0x5e8] sm:$0xff]
        %v725 = vld [vmem:[#allocation5 + $0x5f0] sm:$0xff]
        %v726 = vld [vmem:[#allocation5 + $0x5f8] sm:$0xff]
        %727 = vmatprep.subr.mxu0 %v536
        %728 = vmatpush1.msra.mxu0 %v535
        %729 = vmatprep.subr.mxu0 %v542
        %730 = vmatpush1.msra.mxu0 %v541
        %731 = vmatprep.subr.mxu0 %v548
        %732 = vmatpush1.msra.mxu0 %v547
        %733 = vmatprep.subr.mxu0 %v554
        %734 = vmatpush1.msra.mxu0 %v553
        %735 = vmatprep.subr.mxu0 %v560
        %736 = vmatpush1.msra.mxu0 %v559
        %737 = vmatprep.subr.mxu0 %v566
        %738 = vmatpush1.msra.mxu0 %v565
        %739 = vmatprep.subr.mxu0 %v572
        %740 = vmatpush1.msra.mxu0 %v571
        %741 = vmatprep.subr.mxu0 %v578
        %742 = vmatpush1.msra.mxu0 %v577
        %743 = vmatprep.subr.mxu0 %v584
        %744 = vmatpush1.msra.mxu0 %v583
        %745 = vmatprep.subr.mxu0 %v590
        %746 = vmatpush1.msra.mxu0 %v589
        %747 = vmatprep.subr.mxu0 %v596
        %748 = vmatpush1.msra.mxu0 %v595
        %749 = vmatprep.subr.mxu0 %v602
        %750 = vmatpush1.msra.mxu0 %v601
        %751 = vmatprep.subr.mxu0 %v608
        %752 = vmatpush1.msra.mxu0 %v607
        %753 = vmatprep.subr.mxu0 %v614
        %754 = vmatpush1.msra.mxu0 %v613
        %755 = vmatprep.subr.mxu0 %v620
        %756 = vmatpush1.msra.mxu0 %v619
        %757 = vmatprep.subr.mxu0 %v626
        %758 = vmatpush1.msra.mxu0 %v625
        %759 = vmatprep.subr.mxu0 %v632
        %760 = vmatpush1.msra.mxu0 %v631
        %761 = vmatprep.subr.mxu0 %v638
        %762 = vmatpush1.msra.mxu0 %v637
        %763 = vmatprep.subr.mxu0 %v644
        %764 = vmatpush1.msra.mxu0 %v643
        %765 = vmatprep.subr.mxu0 %v650
        %766 = vmatpush1.msra.mxu0 %v649
        %767 = vmatprep.subr.mxu0 %v656
        %768 = vmatpush1.msra.mxu0 %v655
        %769 = vmatprep.subr.mxu0 %v662
        %770 = vmatpush1.msra.mxu0 %v661
        %771 = vmatprep.subr.mxu0 %v668
        %772 = vmatpush1.msra.mxu0 %v667
        %773 = vmatprep.subr.mxu0 %v674
        %774 = vmatpush1.msra.mxu0 %v673
        %775 = vmatprep.subr.mxu0 %v680
        %776 = vmatpush1.msra.mxu0 %v679
        %777 = vmatprep.subr.mxu0 %v686
        %778 = vmatpush1.msra.mxu0 %v685
        %779 = vmatprep.subr.mxu0 %v692
        %780 = vmatpush1.msra.mxu0 %v691
        %781 = vmatprep.subr.mxu0 %v698
        %782 = vmatpush1.msra.mxu0 %v697
        %783 = vmatprep.subr.mxu0 %v704
        %784 = vmatpush1.msra.mxu0 %v703
        %785 = vmatprep.subr.mxu0 %v710
        %786 = vmatpush1.msra.mxu0 %v709
        %787 = vmatprep.subr.mxu0 %v716
        %788 = vmatpush1.msra.mxu0 %v715
        %789 = vmatprep.subr.mxu0 %v722
        %790 = vmatpush1.msra.mxu0 %v721
        %791 = vmatprep.mubr.f32.mxu0 %v534
        %792 = vmatmul.mubr.f32.gmra.mrb[0].mxu0 %v533
        %v793 = vpop.f32.mrb[0].mxu0
        %v794 = vadd.f32 0.0, %v793
        %v795 = vpop.f32.mrb[0].mxu0
        %v796 = vadd.f32 0.0, %v795
        %797 = vdwg.mxu0
        %798 = vmatprep.subr.mxu0 %v538
        %799 = vmatpush1.msra.mxu0 %v537
        %800 = vmatprep.subr.mxu0 %v544
        %801 = vmatpush1.msra.mxu0 %v543
        %802 = vmatprep.subr.mxu0 %v550
        %803 = vmatpush1.msra.mxu0 %v549
        %804 = vmatprep.subr.mxu0 %v556
        %805 = vmatpush1.msra.mxu0 %v555
        %806 = vmatprep.subr.mxu0 %v562
        %807 = vmatpush1.msra.mxu0 %v561
        %808 = vmatprep.subr.mxu0 %v568
        %809 = vmatpush1.msra.mxu0 %v567
        %810 = vmatprep.subr.mxu0 %v574
        %811 = vmatpush1.msra.mxu0 %v573
        %812 = vmatprep.subr.mxu0 %v580
        %813 = vmatpush1.msra.mxu0 %v579
        %814 = vmatprep.subr.mxu0 %v586
        %815 = vmatpush1.msra.mxu0 %v585
        %816 = vmatprep.subr.mxu0 %v592
        %817 = vmatpush1.msra.mxu0 %v591
        %818 = vmatprep.subr.mxu0 %v598
        %819 = vmatpush1.msra.mxu0 %v597
        %820 = vmatprep.subr.mxu0 %v604
        %821 = vmatpush1.msra.mxu0 %v603
        %822 = vmatprep.subr.mxu0 %v610
        %823 = vmatpush1.msra.mxu0 %v609
        %824 = vmatprep.subr.mxu0 %v616
        %825 = vmatpush1.msra.mxu0 %v615
        %826 = vmatprep.subr.mxu0 %v622
        %827 = vmatpush1.msra.mxu0 %v621
        %828 = vmatprep.subr.mxu0 %v628
        %829 = vmatpush1.msra.mxu0 %v627
        %830 = vmatprep.subr.mxu0 %v634
        %831 = vmatpush1.msra.mxu0 %v633
        %832 = vmatprep.subr.mxu0 %v640
        %833 = vmatpush1.msra.mxu0 %v639
        %834 = vmatprep.subr.mxu0 %v646
        %835 = vmatpush1.msra.mxu0 %v645
        %836 = vmatprep.subr.mxu0 %v652
        %837 = vmatpush1.msra.mxu0 %v651
        %838 = vmatprep.subr.mxu0 %v658
        %839 = vmatpush1.msra.mxu0 %v657
        %840 = vmatprep.subr.mxu0 %v664
        %841 = vmatpush1.msra.mxu0 %v663
        %842 = vmatprep.subr.mxu0 %v670
        %843 = vmatpush1.msra.mxu0 %v669
        %844 = vmatprep.subr.mxu0 %v676
        %845 = vmatpush1.msra.mxu0 %v675
        %846 = vmatprep.subr.mxu0 %v682
        %847 = vmatpush1.msra.mxu0 %v681
        %848 = vmatprep.subr.mxu0 %v688
        %849 = vmatpush1.msra.mxu0 %v687
        %850 = vmatprep.subr.mxu0 %v694
        %851 = vmatpush1.msra.mxu0 %v693
        %852 = vmatprep.subr.mxu0 %v700
        %853 = vmatpush1.msra.mxu0 %v699
        %854 = vmatprep.subr.mxu0 %v706
        %855 = vmatpush1.msra.mxu0 %v705
        %856 = vmatprep.subr.mxu0 %v712
        %857 = vmatpush1.msra.mxu0 %v711
        %858 = vmatprep.subr.mxu0 %v718
        %859 = vmatpush1.msra.mxu0 %v717
        %860 = vmatprep.subr.mxu0 %v724
        %861 = vmatpush1.msra.mxu0 %v723
        %862 = vmatprep.mubr.f32.mxu0 %v534
        %863 = vmatmul.mubr.f32.gmra.mrb[0].mxu0 %v533
        %v864 = vpop.f32.mrb[0].mxu0
        %v865 = vadd.f32 0.0, %v864
        %v866 = vpop.f32.mrb[0].mxu0
        %v867 = vadd.f32 0.0, %v866
        %868 = vdwg.mxu0
        %869 = vmatprep.subr.mxu0 %v540
        %870 = vmatpush1.msra.mxu0 %v539
        %871 = vmatprep.subr.mxu0 %v546
        %872 = vmatpush1.msra.mxu0 %v545
        %873 = vmatprep.subr.mxu0 %v552
        %874 = vmatpush1.msra.mxu0 %v551
        %875 = vmatprep.subr.mxu0 %v558
        %876 = vmatpush1.msra.mxu0 %v557
        %877 = vmatprep.subr.mxu0 %v564
        %878 = vmatpush1.msra.mxu0 %v563
        %879 = vmatprep.subr.mxu0 %v570
        %880 = vmatpush1.msra.mxu0 %v569
        %881 = vmatprep.subr.mxu0 %v576
        %882 = vmatpush1.msra.mxu0 %v575
        %883 = vmatprep.subr.mxu0 %v582
        %884 = vmatpush1.msra.mxu0 %v581
        %885 = vmatprep.subr.mxu0 %v588
        %886 = vmatpush1.msra.mxu0 %v587
        %887 = vmatprep.subr.mxu0 %v594
        %888 = vmatpush1.msra.mxu0 %v593
        %889 = vmatprep.subr.mxu0 %v600
        %890 = vmatpush1.msra.mxu0 %v599
        %891 = vmatprep.subr.mxu0 %v606
        %892 = vmatpush1.msra.mxu0 %v605
        %893 = vmatprep.subr.mxu0 %v612
        %894 = vmatpush1.msra.mxu0 %v611
        %895 = vmatprep.subr.mxu0 %v618
        %896 = vmatpush1.msra.mxu0 %v617
        %897 = vmatprep.subr.mxu0 %v624
        %898 = vmatpush1.msra.mxu0 %v623
        %899 = vmatprep.subr.mxu0 %v630
        %900 = vmatpush1.msra.mxu0 %v629
        %901 = vmatprep.subr.mxu0 %v636
        %902 = vmatpush1.msra.mxu0 %v635
        %903 = vmatprep.subr.mxu0 %v642
        %904 = vmatpush1.msra.mxu0 %v641
        %905 = vmatprep.subr.mxu0 %v648
        %906 = vmatpush1.msra.mxu0 %v647
        %907 = vmatprep.subr.mxu0 %v654
        %908 = vmatpush1.msra.mxu0 %v653
        %909 = vmatprep.subr.mxu0 %v660
        %910 = vmatpush1.msra.mxu0 %v659
        %911 = vmatprep.subr.mxu0 %v666
        %912 = vmatpush1.msra.mxu0 %v665
        %913 = vmatprep.subr.mxu0 %v672
        %914 = vmatpush1.msra.mxu0 %v671
        %915 = vmatprep.subr.mxu0 %v678
        %916 = vmatpush1.msra.mxu0 %v677
        %917 = vmatprep.subr.mxu0 %v684
        %918 = vmatpush1.msra.mxu0 %v683
        %919 = vmatprep.subr.mxu0 %v690
        %920 = vmatpush1.msra.mxu0 %v689
        %921 = vmatprep.subr.mxu0 %v696
        %922 = vmatpush1.msra.mxu0 %v695
        %923 = vmatprep.subr.mxu0 %v702
        %924 = vmatpush1.msra.mxu0 %v701
        %925 = vmatprep.subr.mxu0 %v708
        %926 = vmatpush1.msra.mxu0 %v707
        %927 = vmatprep.subr.mxu0 %v714
        %928 = vmatpush1.msra.mxu0 %v713
        %929 = vmatprep.subr.mxu0 %v720
        %930 = vmatpush1.msra.mxu0 %v719
        %931 = vmatprep.subr.mxu0 %v726
        %932 = vmatpush1.msra.mxu0 %v725
        %933 = vmatprep.mubr.f32.mxu0 %v534
        %934 = vmatmul.mubr.f32.gmra.mrb[0].mxu0 %v533
        %v935 = vpop.f32.mrb[0].mxu0
        %v936 = vadd.f32 0.0, %v935
        %v937 = vpop.f32.mrb[0].mxu0
        %v938 = vadd.f32 0.0, %v937
        %939 = vdwg.mxu0
        %v940 = vlaneseq
        %v941 = vshrl.u32 %v940, 7
        %v942 = vlaneseq
        %v943 = vand.u32 %v942, 127
        %vm944 = vcmp.ge.s32.totalorder %v941, %v943
        %v945 = vsel %vm944, 0.0, -1e+30
        %v946 = vld [vmem:[#allocation7] sm:$0xff]
        %v947 = vld [vmem:[#allocation7 + $0x8] sm:$0xff]
        %v948 = vld [vmem:[#allocation7 + $0x10] sm:$0xff]
        %v949 = vld [vmem:[#allocation7 + $0x18] sm:$0xff]
        %v950 = vld [vmem:[#allocation7 + $0x20] sm:$0xff]
        %v951 = vld [vmem:[#allocation7 + $0x28] sm:$0xff]
        %v952 = vld [vmem:[#allocation7 + $0x30] sm:$0xff]
        %v953 = vld [vmem:[#allocation7 + $0x38] sm:$0xff]
        %v954 = vld [vmem:[#allocation7 + $0x40] sm:$0xff]
        %v955 = vld [vmem:[#allocation7 + $0x48] sm:$0xff]
        %v956 = vld [vmem:[#allocation7 + $0x50] sm:$0xff]
        %v957 = vld [vmem:[#allocation7 + $0x58] sm:$0xff]
        %v958 = vld [vmem:[#allocation7 + $0x60] sm:$0xff]
        %v959 = vld [vmem:[#allocation7 + $0x68] sm:$0xff]
        %v960 = vld [vmem:[#allocation7 + $0x70] sm:$0xff]
        %v961 = vld [vmem:[#allocation7 + $0x78] sm:$0xff]
        %v962 = vld [vmem:[#allocation7 + $0x80] sm:$0xff]
        %v963 = vld [vmem:[#allocation7 + $0x88] sm:$0xff]
        %v964 = vld [vmem:[#allocation7 + $0x90] sm:$0xff]
        %v965 = vld [vmem:[#allocation7 + $0x98] sm:$0xff]
        %v966 = vld [vmem:[#allocation7 + $0xa0] sm:$0xff]
        %v967 = vld [vmem:[#allocation7 + $0xa8] sm:$0xff]
        %v968 = vld [vmem:[#allocation7 + $0xb0] sm:$0xff]
        %v969 = vld [vmem:[#allocation7 + $0xb8] sm:$0xff]
        %v970 = vld [vmem:[#allocation7 + $0xc0] sm:$0xff]
        %v971 = vld [vmem:[#allocation7 + $0xc8] sm:$0xff]
        %v972 = vld [vmem:[#allocation7 + $0xd0] sm:$0xff]
        %v973 = vld [vmem:[#allocation7 + $0xd8] sm:$0xff]
        %v974 = vld [vmem:[#allocation7 + $0xe0] sm:$0xff]
        %v975 = vld [vmem:[#allocation7 + $0xe8] sm:$0xff]
        %v976 = vld [vmem:[#allocation7 + $0xf0] sm:$0xff]
        %v977 = vld [vmem:[#allocation7 + $0xf8] sm:$0xff]
        %v978 = vld [vmem:[#allocation7 + $0x100] sm:$0xff]
        %v979 = vld [vmem:[#allocation7 + $0x108] sm:$0xff]
        %v980 = vld [vmem:[#allocation7 + $0x110] sm:$0xff]
        %v981 = vld [vmem:[#allocation7 + $0x118] sm:$0xff]
        %v982 = vld [vmem:[#allocation7 + $0x120] sm:$0xff]
        %v983 = vld [vmem:[#allocation7 + $0x128] sm:$0xff]
        %v984 = vld [vmem:[#allocation7 + $0x130] sm:$0xff]
        %v985 = vld [vmem:[#allocation7 + $0x138] sm:$0xff]
        %v986 = vld [vmem:[#allocation7 + $0x140] sm:$0xff]
        %v987 = vld [vmem:[#allocation7 + $0x148] sm:$0xff]
        %v988 = vld [vmem:[#allocation7 + $0x150] sm:$0xff]
        %v989 = vld [vmem:[#allocation7 + $0x158] sm:$0xff]
        %v990 = vld [vmem:[#allocation7 + $0x160] sm:$0xff]
        %v991 = vld [vmem:[#allocation7 + $0x168] sm:$0xff]
        %v992 = vld [vmem:[#allocation7 + $0x170] sm:$0xff]
        %v993 = vld [vmem:[#allocation7 + $0x178] sm:$0xff]
        %v994 = vld [vmem:[#allocation7 + $0x180] sm:$0xff]
        %v995 = vld [vmem:[#allocation7 + $0x188] sm:$0xff]
        %v996 = vld [vmem:[#allocation7 + $0x190] sm:$0xff]
        %v997 = vld [vmem:[#allocation7 + $0x198] sm:$0xff]
        %v998 = vld [vmem:[#allocation7 + $0x1a0] sm:$0xff]
        %v999 = vld [vmem:[#allocation7 + $0x1a8] sm:$0xff]
        %v1000 = vld [vmem:[#allocation7 + $0x1b0] sm:$0xff]
        %v1001 = vld [vmem:[#allocation7 + $0x1b8] sm:$0xff]
        %v1002 = vld [vmem:[#allocation7 + $0x1c0] sm:$0xff]
        %v1003 = vld [vmem:[#allocation7 + $0x1c8] sm:$0xff]
        %v1004 = vld [vmem:[#allocation7 + $0x1d0] sm:$0xff]
        %v1005 = vld [vmem:[#allocation7 + $0x1d8] sm:$0xff]
        %v1006 = vld [vmem:[#allocation7 + $0x1e0] sm:$0xff]
        %v1007 = vld [vmem:[#allocation7 + $0x1e8] sm:$0xff]
        %v1008 = vld [vmem:[#allocation7 + $0x1f0] sm:$0xff]
        %v1009 = vld [vmem:[#allocation7 + $0x1f8] sm:$0xff]
        %vm1010 = vcmask 523264
        %v1012 = vsel %vm1010, %v794, 0
        %v1015 = vsel %vm1010, %v865, 0
        %1017 = vmatprep.subr.mxu0 0.0
        %1018 = vmatpush1.xpose.msra.mxu0 %v1015
        %1019 = vmatprep.subr.mxu0 0.0
        %1020 = vmatpush1.xpose.msra.mxu0 0.0
        %1021 = vmatprep.subr.mxu0 0.0
        %1022 = vmatpush1.xpose.msra.mxu0 0.0
        %1023 = vmatprep.subr.mxu0 0.0
        %1024 = vmatpush1.xpose.msra.mxu0 0.0
        %1025 = vmatprep.subr.mxu0 0.0
        %1026 = vmatpush1.xpose.msra.mxu0 0.0
        %1027 = vmatprep.subr.mxu0 0.0
        %1028 = vmatpush1.xpose.msra.mxu0 0.0
        %1029 = vmatprep.subr.mxu0 0.0
        %1030 = vmatpush1.xpose.msra.mxu0 0.0
        %1031 = vmatprep.subr.mxu0 0.0
        %1032 = vmatpush1.xpose.msra.mxu0 0.0
        %1033 = vmatprep.subr.mxu0 0.0
        %1034 = vmatpush1.xpose.msra.mxu0 0.0
        %1035 = vmatprep.subr.mxu0 0.0
        %1036 = vmatpush1.xpose.msra.mxu0 0.0
        %1037 = vmatprep.subr.mxu0 0.0
        %1038 = vmatpush1.xpose.msra.mxu0 0.0
        %1039 = vmatprep.subr.mxu0 0.0
        %1040 = vmatpush1.xpose.msra.mxu0 0.0
        %1041 = vmatprep.subr.mxu0 0.0
        %1042 = vmatpush1.xpose.msra.mxu0 0.0
        %1043 = vmatprep.subr.mxu0 0.0
        %1044 = vmatpush1.xpose.msra.mxu0 0.0
        %1045 = vmatprep.subr.mxu0 0.0
        %1046 = vmatpush1.xpose.msra.mxu0 0.0
        %1047 = vmatprep.subr.mxu0 0.0
        %1048 = vmatpush1.xpose.msra.mxu0 0.0
        %1049 = vmatprep.subr.mxu0 0.0
        %1050 = vmatpush1.xpose.msra.mxu0 0.0
        %1051 = vmatprep.subr.mxu0 0.0
        %1052 = vmatpush1.xpose.msra.mxu0 0.0
        %1053 = vmatprep.subr.mxu0 0.0
        %1054 = vmatpush1.xpose.msra.mxu0 0.0
        %1055 = vmatprep.subr.mxu0 0.0
        %1056 = vmatpush1.xpose.msra.mxu0 0.0
        %1057 = vmatprep.subr.mxu0 0.0
        %1058 = vmatpush1.xpose.msra.mxu0 0.0
        %1059 = vmatprep.subr.mxu0 0.0
        %1060 = vmatpush1.xpose.msra.mxu0 0.0
        %1061 = vmatprep.subr.mxu0 0.0
        %1062 = vmatpush1.xpose.msra.mxu0 0.0
        %1063 = vmatprep.subr.mxu0 0.0
        %1064 = vmatpush1.xpose.msra.mxu0 0.0
        %1065 = vmatprep.subr.mxu0 0.0
        %1066 = vmatpush1.xpose.msra.mxu0 0.0
        %1067 = vmatprep.subr.mxu0 0.0
        %1068 = vmatpush1.xpose.msra.mxu0 0.0
        %1069 = vmatprep.subr.mxu0 0.0
        %1070 = vmatpush1.xpose.msra.mxu0 0.0
        %1071 = vmatprep.subr.mxu0 0.0
        %1072 = vmatpush1.xpose.msra.mxu0 0.0
        %1073 = vmatprep.subr.mxu0 0.0
        %1074 = vmatpush1.xpose.msra.mxu0 0.0
        %1075 = vmatprep.subr.mxu0 0.0
        %1076 = vmatpush1.xpose.msra.mxu0 0.0
        %1077 = vmatprep.subr.mxu0 0.0
        %1078 = vmatpush1.xpose.msra.mxu0 0.0
        %1079 = vmatprep.subr.mxu0 0.0
        %1080 = vmatpush1.xpose.msra.mxu0 0.0
        %1081 = vmatprep.mubr.f32.mxu0 0.0
        %1082 = vmatmul.mubr.f32.gmra.mrb[0].mxu0 %v1012
        %v1083 = vpop.f32.mrb[0].mxu0
        %v1084 = vadd.f32 %v945, %v1083
        %v1085 = vpop.f32.mrb[0].mxu0
        %1086 = vdwg.mxu0
        %vm1087 = vcmask 64512
        %v1088 = vsel %vm1087, %v1084, -inf
        %1089 = vmax.xlane.f32.xlu0 %v1088
        %v1090 = vpop.xlane.xlu0 %1089
        %v1091 = vsub.f32 %v1084, %v1090
        %v1092 = vmul.f32 %v1091, 1.442695
        %v1093 = vpow.pop %v1092
        %v1094 = vsel %vm1087, %v1093, 0.0
        %1095 = vadd.xlane.f32.xlu0 %v1094
        %v1096 = vpop.xlane.xlu0 %1095
        %v1097 = vrcp.pop %v1096
        %v1098 = vmul.f32 %v1093, %v1097
        %v1100 = vsel %vm1087, %v1098, 0
        %1102 = vmatprep.subr.mxu0 0.0
        %1103 = vmatpush1.msra.mxu0 %v936
        %1104 = vmatprep.subr.mxu0 0.0
        %1105 = vmatpush1.msra.mxu0 0.0
        %1106 = vmatprep.subr.mxu0 0.0
        %1107 = vmatpush1.msra.mxu0 0.0
        %1108 = vmatprep.subr.mxu0 0.0
        %1109 = vmatpush1.msra.mxu0 0.0
        %1110 = vmatprep.subr.mxu0 0.0
        %1111 = vmatpush1.msra.mxu0 0.0
        %1112 = vmatprep.subr.mxu0 0.0
        %1113 = vmatpush1.msra.mxu0 0.0
        %1114 = vmatprep.subr.mxu0 0.0
        %1115 = vmatpush1.msra.mxu0 0.0
        %1116 = vmatprep.subr.mxu0 0.0
        %1117 = vmatpush1.msra.mxu0 0.0
        %1118 = vmatprep.subr.mxu0 0.0
        %1119 = vmatpush1.msra.mxu0 0.0
        %1120 = vmatprep.subr.mxu0 0.0
        %1121 = vmatpush1.msra.mxu0 0.0
        %1122 = vmatprep.subr.mxu0 0.0
        %1123 = vmatpush1.msra.mxu0 0.0
        %1124 = vmatprep.subr.mxu0 0.0
        %1125 = vmatpush1.msra.mxu0 0.0
        %1126 = vmatprep.subr.mxu0 0.0
        %1127 = vmatpush1.msra.mxu0 0.0
        %1128 = vmatprep.subr.mxu0 0.0
        %1129 = vmatpush1.msra.mxu0 0.0
        %1130 = vmatprep.subr.mxu0 0.0
        %1131 = vmatpush1.msra.mxu0 0.0
        %1132 = vmatprep.subr.mxu0 0.0
        %1133 = vmatpush1.msra.mxu0 0.0
        %1134 = vmatprep.subr.mxu0 0.0
        %1135 = vmatpush1.msra.mxu0 0.0
        %1136 = vmatprep.subr.mxu0 0.0
        %1137 = vmatpush1.msra.mxu0 0.0
        %1138 = vmatprep.subr.mxu0 0.0
        %1139 = vmatpush1.msra.mxu0 0.0
        %1140 = vmatprep.subr.mxu0 0.0
        %1141 = vmatpush1.msra.mxu0 0.0
        %1142 = vmatprep.subr.mxu0 0.0
        %1143 = vmatpush1.msra.mxu0 0.0
        %1144 = vmatprep.subr.mxu0 0.0
        %1145 = vmatpush1.msra.mxu0 0.0
        %1146 = vmatprep.subr.mxu0 0.0
        %1147 = vmatpush1.msra.mxu0 0.0
        %1148 = vmatprep.subr.mxu0 0.0
        %1149 = vmatpush1.msra.mxu0 0.0
        %1150 = vmatprep.subr.mxu0 0.0
        %1151 = vmatpush1.msra.mxu0 0.0
        %1152 = vmatprep.subr.mxu0 0.0
        %1153 = vmatpush1.msra.mxu0 0.0
        %1154 = vmatprep.subr.mxu0 0.0
        %1155 = vmatpush1.msra.mxu0 0.0
        %1156 = vmatprep.subr.mxu0 0.0
        %1157 = vmatpush1.msra.mxu0 0.0
        %1158 = vmatprep.subr.mxu0 0.0
        %1159 = vmatpush1.msra.mxu0 0.0
        %1160 = vmatprep.subr.mxu0 0.0
        %1161 = vmatpush1.msra.mxu0 0.0
        %1162 = vmatprep.subr.mxu0 0.0
        %1163 = vmatpush1.msra.mxu0 0.0
        %1164 = vmatprep.subr.mxu0 0.0
        %1165 = vmatpush1.msra.mxu0 0.0
        %1166 = vmatprep.mubr.f32.mxu0 0.0
        %1167 = vmatmul.mubr.f32.gmra.mrb[0].mxu0 %v1100
        %v1168 = vpop.f32.mrb[0].mxu0
        %v1169 = vadd.f32 0.0, %v1168
        %v1170 = vpop.f32.mrb[0].mxu0
        %1171 = vdwg.mxu0
        %1172 = vrot.lane.b32.xlu0 %v794, 64
        %v1173 = vpop.permute.xlu0 %1172
        %1174 = vrot.lane.b32.xlu0 %v865, 64
        %v1175 = vpop.permute.xlu0 %1174
        %v1176 = vsel %vm1010, %v1173, 0
        %v1178 = vsel %vm1010, %v1175, 0
        %1180 = vmatprep.subr.mxu0 0.0
        %1181 = vmatpush1.xpose.msra.mxu0 %v1178
        %1182 = vmatprep.subr.mxu0 0.0
        %1183 = vmatpush1.xpose.msra.mxu0 0.0
        %1184 = vmatprep.subr.mxu0 0.0
        %1185 = vmatpush1.xpose.msra.mxu0 0.0
        %1186 = vmatprep.subr.mxu0 0.0
        %1187 = vmatpush1.xpose.msra.mxu0 0.0
        %1188 = vmatprep.subr.mxu0 0.0
        %1189 = vmatpush1.xpose.msra.mxu0 0.0
        %1190 = vmatprep.subr.mxu0 0.0
        %1191 = vmatpush1.xpose.msra.mxu0 0.0
        %1192 = vmatprep.subr.mxu0 0.0
        %1193 = vmatpush1.xpose.msra.mxu0 0.0
        %1194 = vmatprep.subr.mxu0 0.0
        %1195 = vmatpush1.xpose.msra.mxu0 0.0
        %1196 = vmatprep.subr.mxu0 0.0
        %1197 = vmatpush1.xpose.msra.mxu0 0.0
        %1198 = vmatprep.subr.mxu0 0.0
        %1199 = vmatpush1.xpose.msra.mxu0 0.0
        %1200 = vmatprep.subr.mxu0 0.0
        %1201 = vmatpush1.xpose.msra.mxu0 0.0
        %1202 = vmatprep.subr.mxu0 0.0
        %1203 = vmatpush1.xpose.msra.mxu0 0.0
        %1204 = vmatprep.subr.mxu0 0.0
        %1205 = vmatpush1.xpose.msra.mxu0 0.0
        %1206 = vmatprep.subr.mxu0 0.0
        %1207 = vmatpush1.xpose.msra.mxu0 0.0
        %1208 = vmatprep.subr.mxu0 0.0
        %1209 = vmatpush1.xpose.msra.mxu0 0.0
        %1210 = vmatprep.subr.mxu0 0.0
        %1211 = vmatpush1.xpose.msra.mxu0 0.0
        %1212 = vmatprep.subr.mxu0 0.0
        %1213 = vmatpush1.xpose.msra.mxu0 0.0
        %1214 = vmatprep.subr.mxu0 0.0
        %1215 = vmatpush1.xpose.msra.mxu0 0.0
        %1216 = vmatprep.subr.mxu0 0.0
        %1217 = vmatpush1.xpose.msra.mxu0 0.0
        %1218 = vmatprep.subr.mxu0 0.0
        %1219 = vmatpush1.xpose.msra.mxu0 0.0
        %1220 = vmatprep.subr.mxu0 0.0
        %1221 = vmatpush1.xpose.msra.mxu0 0.0
        %1222 = vmatprep.subr.mxu0 0.0
        %1223 = vmatpush1.xpose.msra.mxu0 0.0
        %1224 = vmatprep.subr.mxu0 0.0
        %1225 = vmatpush1.xpose.msra.mxu0 0.0
        %1226 = vmatprep.subr.mxu0 0.0
        %1227 = vmatpush1.xpose.msra.mxu0 0.0
        %1228 = vmatprep.subr.mxu0 0.0
        %1229 = vmatpush1.xpose.msra.mxu0 0.0
        %1230 = vmatprep.subr.mxu0 0.0
        %1231 = vmatpush1.xpose.msra.mxu0 0.0
        %1232 = vmatprep.subr.mxu0 0.0
        %1233 = vmatpush1.xpose.msra.mxu0 0.0
        %1234 = vmatprep.subr.mxu0 0.0
        %1235 = vmatpush1.xpose.msra.mxu0 0.0
        %1236 = vmatprep.subr.mxu0 0.0
        %1237 = vmatpush1.xpose.msra.mxu0 0.0
        %1238 = vmatprep.subr.mxu0 0.0
        %1239 = vmatpush1.xpose.msra.mxu0 0.0
        %1240 = vmatprep.subr.mxu0 0.0
        %1241 = vmatpush1.xpose.msra.mxu0 0.0
        %1242 = vmatprep.subr.mxu0 0.0
        %1243 = vmatpush1.xpose.msra.mxu0 0.0
        %1244 = vmatprep.mubr.f32.mxu0 0.0
        %1245 = vmatmul.mubr.f32.gmra.mrb[0].mxu0 %v1176
        %v1246 = vpop.f32.mrb[0].mxu0
        %v1247 = vadd.f32 %v945, %v1246
        %v1248 = vpop.f32.mrb[0].mxu0
        %1249 = vdwg.mxu0
        %v1250 = vsel %vm1087, %v1247, -inf
        %1251 = vmax.xlane.f32.xlu0 %v1250
        %v1252 = vpop.xlane.xlu0 %1251
        %v1253 = vsub.f32 %v1247, %v1252
        %v1254 = vmul.f32 %v1253, 1.442695
        %v1255 = vpow.pop %v1254
        %v1256 = vsel %vm1087, %v1255, 0.0
        %1257 = vadd.xlane.f32.xlu0 %v1256
        %v1258 = vpop.xlane.xlu0 %1257
        %v1259 = vrcp.pop %v1258
        %v1260 = vmul.f32 %v1255, %v1259
        %1262 = vrot.lane.b32.xlu0 %v936, 64
        %v1263 = vpop.permute.xlu0 %1262
        %v1266 = vsel %vm1087, %v1260, 0
        %1268 = vmatprep.subr.mxu0 0.0
        %1269 = vmatpush1.msra.mxu0 %v1263
        %1270 = vmatprep.subr.mxu0 0.0
        %1271 = vmatpush1.msra.mxu0 0.0
        %1272 = vmatprep.subr.mxu0 0.0
        %1273 = vmatpush1.msra.mxu0 0.0
        %1274 = vmatprep.subr.mxu0 0.0
        %1275 = vmatpush1.msra.mxu0 0.0
        %1276 = vmatprep.subr.mxu0 0.0
        %1277 = vmatpush1.msra.mxu0 0.0
        %1278 = vmatprep.subr.mxu0 0.0
        %1279 = vmatpush1.msra.mxu0 0.0
        %1280 = vmatprep.subr.mxu0 0.0
        %1281 = vmatpush1.msra.mxu0 0.0
        %1282 = vmatprep.subr.mxu0 0.0
        %1283 = vmatpush1.msra.mxu0 0.0
        %1284 = vmatprep.subr.mxu0 0.0
        %1285 = vmatpush1.msra.mxu0 0.0
        %1286 = vmatprep.subr.mxu0 0.0
        %1287 = vmatpush1.msra.mxu0 0.0
        %1288 = vmatprep.subr.mxu0 0.0
        %1289 = vmatpush1.msra.mxu0 0.0
        %1290 = vmatprep.subr.mxu0 0.0
        %1291 = vmatpush1.msra.mxu0 0.0
        %1292 = vmatprep.subr.mxu0 0.0
        %1293 = vmatpush1.msra.mxu0 0.0
        %1294 = vmatprep.subr.mxu0 0.0
        %1295 = vmatpush1.msra.mxu0 0.0
        %1296 = vmatprep.subr.mxu0 0.0
        %1297 = vmatpush1.msra.mxu0 0.0
        %1298 = vmatprep.subr.mxu0 0.0
        %1299 = vmatpush1.msra.mxu0 0.0
        %1300 = vmatprep.subr.mxu0 0.0
        %1301 = vmatpush1.msra.mxu0 0.0
        %1302 = vmatprep.subr.mxu0 0.0
        %1303 = vmatpush1.msra.mxu0 0.0
        %1304 = vmatprep.subr.mxu0 0.0
        %1305 = vmatpush1.msra.mxu0 0.0
        %1306 = vmatprep.subr.mxu0 0.0
        %1307 = vmatpush1.msra.mxu0 0.0
        %1308 = vmatprep.subr.mxu0 0.0
        %1309 = vmatpush1.msra.mxu0 0.0
        %1310 = vmatprep.subr.mxu0 0.0
        %1311 = vmatpush1.msra.mxu0 0.0
        %1312 = vmatprep.subr.mxu0 0.0
        %1313 = vmatpush1.msra.mxu0 0.0
        %1314 = vmatprep.subr.mxu0 0.0
        %1315 = vmatpush1.msra.mxu0 0.0
        %1316 = vmatprep.subr.mxu0 0.0
        %1317 = vmatpush1.msra.mxu0 0.0
        %1318 = vmatprep.subr.mxu0 0.0
        %1319 = vmatpush1.msra.mxu0 0.0
        %1320 = vmatprep.subr.mxu0 0.0
        %1321 = vmatpush1.msra.mxu0 0.0
        %1322 = vmatprep.subr.mxu0 0.0
        %1323 = vmatpush1.msra.mxu0 0.0
        %1324 = vmatprep.subr.mxu0 0.0
        %1325 = vmatpush1.msra.mxu0 0.0
        %1326 = vmatprep.subr.mxu0 0.0
        %1327 = vmatpush1.msra.mxu0 0.0
        %1328 = vmatprep.subr.mxu0 0.0
        %1329 = vmatpush1.msra.mxu0 0.0
        %1330 = vmatprep.subr.mxu0 0.0
        %1331 = vmatpush1.msra.mxu0 0.0
        %1332 = vmatprep.mubr.f32.mxu0 0.0
        %1333 = vmatmul.mubr.f32.gmra.mrb[0].mxu0 %v1266
        %v1334 = vpop.f32.mrb[0].mxu0
        %v1335 = vadd.f32 0.0, %v1334
        %v1336 = vpop.f32.mrb[0].mxu0
        %1337 = vdwg.mxu0
        %v1339 = vsel %vm1010, %v1335, 0
        %1341 = vmatprep.subr.mxu0 %v963
        %1342 = vmatpush1.msra.mxu0 %v962
        %1343 = vmatprep.subr.mxu0 %v965
        %1344 = vmatpush1.msra.mxu0 %v964
        %1345 = vmatprep.subr.mxu0 %v967
        %1346 = vmatpush1.msra.mxu0 %v966
        %1347 = vmatprep.subr.mxu0 %v969
        %1348 = vmatpush1.msra.mxu0 %v968
        %1349 = vmatprep.subr.mxu0 %v971
        %1350 = vmatpush1.msra.mxu0 %v970
        %1351 = vmatprep.subr.mxu0 %v973
        %1352 = vmatpush1.msra.mxu0 %v972
        %1353 = vmatprep.subr.mxu0 %v975
        %1354 = vmatpush1.msra.mxu0 %v974
        %1355 = vmatprep.subr.mxu0 %v977
        %1356 = vmatpush1.msra.mxu0 %v976
        %1357 = vmatprep.subr.mxu0 0.0
        %1358 = vmatpush1.msra.mxu0 0.0
        %1359 = vmatprep.subr.mxu0 0.0
        %1360 = vmatpush1.msra.mxu0 0.0
        %1361 = vmatprep.subr.mxu0 0.0
        %1362 = vmatpush1.msra.mxu0 0.0
        %1363 = vmatprep.subr.mxu0 0.0
        %1364 = vmatpush1.msra.mxu0 0.0
        %1365 = vmatprep.subr.mxu0 0.0
        %1366 = vmatpush1.msra.mxu0 0.0
        %1367 = vmatprep.subr.mxu0 0.0
        %1368 = vmatpush1.msra.mxu0 0.0
        %1369 = vmatprep.subr.mxu0 0.0
        %1370 = vmatpush1.msra.mxu0 0.0
        %1371 = vmatprep.subr.mxu0 0.0
        %1372 = vmatpush1.msra.mxu0 0.0
        %1373 = vmatprep.subr.mxu0 0.0
        %1374 = vmatpush1.msra.mxu0 0.0
        %1375 = vmatprep.subr.mxu0 0.0
        %1376 = vmatpush1.msra.mxu0 0.0
        %1377 = vmatprep.subr.mxu0 0.0
        %1378 = vmatpush1.msra.mxu0 0.0
        %1379 = vmatprep.subr.mxu0 0.0
        %1380 = vmatpush1.msra.mxu0 0.0
        %1381 = vmatprep.subr.mxu0 0.0
        %1382 = vmatpush1.msra.mxu0 0.0
        %1383 = vmatprep.subr.mxu0 0.0
        %1384 = vmatpush1.msra.mxu0 0.0
        %1385 = vmatprep.subr.mxu0 0.0
        %1386 = vmatpush1.msra.mxu0 0.0
        %1387 = vmatprep.subr.mxu0 0.0
        %1388 = vmatpush1.msra.mxu0 0.0
        %1389 = vmatprep.subr.mxu0 0.0
        %1390 = vmatpush1.msra.mxu0 0.0
        %1391 = vmatprep.subr.mxu0 0.0
        %1392 = vmatpush1.msra.mxu0 0.0
        %1393 = vmatprep.subr.mxu0 0.0
        %1394 = vmatpush1.msra.mxu0 0.0
        %1395 = vmatprep.subr.mxu0 0.0
        %1396 = vmatpush1.msra.mxu0 0.0
        %1397 = vmatprep.subr.mxu0 0.0
        %1398 = vmatpush1.msra.mxu0 0.0
        %1399 = vmatprep.subr.mxu0 0.0
        %1400 = vmatpush1.msra.mxu0 0.0
        %1401 = vmatprep.subr.mxu0 0.0
        %1402 = vmatpush1.msra.mxu0 0.0
        %1403 = vmatprep.subr.mxu0 0.0
        %1404 = vmatpush1.msra.mxu0 0.0
        %1405 = vmatprep.mubr.f32.mxu0 0.0
        %1406 = vmatmul.mubr.f32.gmra.mrb[0].mxu0 %v1339
        %v1407 = vpop.f32.mrb[0].mxu0
        %v1408 = vadd.f32 0.0, %v1407
        %v1409 = vpop.f32.mrb[0].mxu0
        %v1410 = vadd.f32 0.0, %v1409
        %1411 = vdwg.mxu0
        %v1413 = vsel %vm1010, %v1169, 0
        %1415 = vmatprep.subr.mxu0 %v947
        %1416 = vmatpush1.msra.mxu0 %v946
        %1417 = vmatprep.subr.mxu0 %v949
        %1418 = vmatpush1.msra.mxu0 %v948
        %1419 = vmatprep.subr.mxu0 %v951
        %1420 = vmatpush1.msra.mxu0 %v950
        %1421 = vmatprep.subr.mxu0 %v953
        %1422 = vmatpush1.msra.mxu0 %v952
        %1423 = vmatprep.subr.mxu0 %v955
        %1424 = vmatpush1.msra.mxu0 %v954
        %1425 = vmatprep.subr.mxu0 %v957
        %1426 = vmatpush1.msra.mxu0 %v956
        %1427 = vmatprep.subr.mxu0 %v959
        %1428 = vmatpush1.msra.mxu0 %v958
        %1429 = vmatprep.subr.mxu0 %v961
        %1430 = vmatpush1.msra.mxu0 %v960
        %1431 = vmatprep.subr.mxu0 0.0
        %1432 = vmatpush1.msra.mxu0 0.0
        %1433 = vmatprep.subr.mxu0 0.0
        %1434 = vmatpush1.msra.mxu0 0.0
        %1435 = vmatprep.subr.mxu0 0.0
        %1436 = vmatpush1.msra.mxu0 0.0
        %1437 = vmatprep.subr.mxu0 0.0
        %1438 = vmatpush1.msra.mxu0 0.0
        %1439 = vmatprep.subr.mxu0 0.0
        %1440 = vmatpush1.msra.mxu0 0.0
        %1441 = vmatprep.subr.mxu0 0.0
        %1442 = vmatpush1.msra.mxu0 0.0
        %1443 = vmatprep.subr.mxu0 0.0
        %1444 = vmatpush1.msra.mxu0 0.0
        %1445 = vmatprep.subr.mxu0 0.0
        %1446 = vmatpush1.msra.mxu0 0.0
        %1447 = vmatprep.subr.mxu0 0.0
        %1448 = vmatpush1.msra.mxu0 0.0
        %1449 = vmatprep.subr.mxu0 0.0
        %1450 = vmatpush1.msra.mxu0 0.0
        %1451 = vmatprep.subr.mxu0 0.0
        %1452 = vmatpush1.msra.mxu0 0.0
        %1453 = vmatprep.subr.mxu0 0.0
        %1454 = vmatpush1.msra.mxu0 0.0
        %1455 = vmatprep.subr.mxu0 0.0
        %1456 = vmatpush1.msra.mxu0 0.0
        %1457 = vmatprep.subr.mxu0 0.0
        %1458 = vmatpush1.msra.mxu0 0.0
        %1459 = vmatprep.subr.mxu0 0.0
        %1460 = vmatpush1.msra.mxu0 0.0
        %1461 = vmatprep.subr.mxu0 0.0
        %1462 = vmatpush1.msra.mxu0 0.0
        %1463 = vmatprep.subr.mxu0 0.0
        %1464 = vmatpush1.msra.mxu0 0.0
        %1465 = vmatprep.subr.mxu0 0.0
        %1466 = vmatpush1.msra.mxu0 0.0
        %1467 = vmatprep.subr.mxu0 0.0
        %1468 = vmatpush1.msra.mxu0 0.0
        %1469 = vmatprep.subr.mxu0 0.0
        %1470 = vmatpush1.msra.mxu0 0.0
        %1471 = vmatprep.subr.mxu0 0.0
        %1472 = vmatpush1.msra.mxu0 0.0
        %1473 = vmatprep.subr.mxu0 0.0
        %1474 = vmatpush1.msra.mxu0 0.0
        %1475 = vmatprep.subr.mxu0 0.0
        %1476 = vmatpush1.msra.mxu0 0.0
        %1477 = vmatprep.subr.mxu0 0.0
        %1478 = vmatpush1.msra.mxu0 0.0
        %1479 = vmatprep.mubr.f32.mxu0 0.0
        %1480 = vmatmul.mubr.f32.gmra.mrb[0].mxu0 %v1413
        %v1481 = vpop.f32.mrb[0].mxu0
        %v1482 = vadd.f32 %v1408, %v1481
        %v1483 = vpop.f32.mrb[0].mxu0
        %v1484 = vadd.f32 %v1410, %v1483
        %1485 = vdwg.mxu0
        %v1487 = vsel %vm1010, %v796, 0
        %v1490 = vsel %vm1010, %v867, 0
        %1492 = vmatprep.subr.mxu0 0.0
        %1493 = vmatpush1.xpose.msra.mxu0 %v1490
        %1494 = vmatprep.subr.mxu0 0.0
        %1495 = vmatpush1.xpose.msra.mxu0 0.0
        %1496 = vmatprep.subr.mxu0 0.0
        %1497 = vmatpush1.xpose.msra.mxu0 0.0
        %1498 = vmatprep.subr.mxu0 0.0
        %1499 = vmatpush1.xpose.msra.mxu0 0.0
        %1500 = vmatprep.subr.mxu0 0.0
        %1501 = vmatpush1.xpose.msra.mxu0 0.0
        %1502 = vmatprep.subr.mxu0 0.0
        %1503 = vmatpush1.xpose.msra.mxu0 0.0
        %1504 = vmatprep.subr.mxu0 0.0
        %1505 = vmatpush1.xpose.msra.mxu0 0.0
        %1506 = vmatprep.subr.mxu0 0.0
        %1507 = vmatpush1.xpose.msra.mxu0 0.0
        %1508 = vmatprep.subr.mxu0 0.0
        %1509 = vmatpush1.xpose.msra.mxu0 0.0
        %1510 = vmatprep.subr.mxu0 0.0
        %1511 = vmatpush1.xpose.msra.mxu0 0.0
        %1512 = vmatprep.subr.mxu0 0.0
        %1513 = vmatpush1.xpose.msra.mxu0 0.0
        %1514 = vmatprep.subr.mxu0 0.0
        %1515 = vmatpush1.xpose.msra.mxu0 0.0
        %1516 = vmatprep.subr.mxu0 0.0
        %1517 = vmatpush1.xpose.msra.mxu0 0.0
        %1518 = vmatprep.subr.mxu0 0.0
        %1519 = vmatpush1.xpose.msra.mxu0 0.0
        %1520 = vmatprep.subr.mxu0 0.0
        %1521 = vmatpush1.xpose.msra.mxu0 0.0
        %1522 = vmatprep.subr.mxu0 0.0
        %1523 = vmatpush1.xpose.msra.mxu0 0.0
        %1524 = vmatprep.subr.mxu0 0.0
        %1525 = vmatpush1.xpose.msra.mxu0 0.0
        %1526 = vmatprep.subr.mxu0 0.0
        %1527 = vmatpush1.xpose.msra.mxu0 0.0
        %1528 = vmatprep.subr.mxu0 0.0
        %1529 = vmatpush1.xpose.msra.mxu0 0.0
        %1530 = vmatprep.subr.mxu0 0.0
        %1531 = vmatpush1.xpose.msra.mxu0 0.0
        %1532 = vmatprep.subr.mxu0 0.0
        %1533 = vmatpush1.xpose.msra.mxu0 0.0
        %1534 = vmatprep.subr.mxu0 0.0
        %1535 = vmatpush1.xpose.msra.mxu0 0.0
        %1536 = vmatprep.subr.mxu0 0.0
        %1537 = vmatpush1.xpose.msra.mxu0 0.0
        %1538 = vmatprep.subr.mxu0 0.0
        %1539 = vmatpush1.xpose.msra.mxu0 0.0
        %1540 = vmatprep.subr.mxu0 0.0
        %1541 = vmatpush1.xpose.msra.mxu0 0.0
        %1542 = vmatprep.subr.mxu0 0.0
        %1543 = vmatpush1.xpose.msra.mxu0 0.0
        %1544 = vmatprep.subr.mxu0 0.0
        %1545 = vmatpush1.xpose.msra.mxu0 0.0
        %1546 = vmatprep.subr.mxu0 0.0
        %1547 = vmatpush1.xpose.msra.mxu0 0.0
        %1548 = vmatprep.subr.mxu0 0.0
        %1549 = vmatpush1.xpose.msra.mxu0 0.0
        %1550 = vmatprep.subr.mxu0 0.0
        %1551 = vmatpush1.xpose.msra.mxu0 0.0
        %1552 = vmatprep.subr.mxu0 0.0
        %1553 = vmatpush1.xpose.msra.mxu0 0.0
        %1554 = vmatprep.subr.mxu0 0.0
        %1555 = vmatpush1.xpose.msra.mxu0 0.0
        %1556 = vmatprep.mubr.f32.mxu0 0.0
        %1557 = vmatmul.mubr.f32.gmra.mrb[0].mxu0 %v1487
        %v1558 = vpop.f32.mrb[0].mxu0
        %v1559 = vadd.f32 %v945, %v1558
        %v1560 = vpop.f32.mrb[0].mxu0
        %1561 = vdwg.mxu0
        %v1562 = vsel %vm1087, %v1559, -inf
        %1563 = vmax.xlane.f32.xlu0 %v1562
        %v1564 = vpop.xlane.xlu0 %1563
        %v1565 = vsub.f32 %v1559, %v1564
        %v1566 = vmul.f32 %v1565, 1.442695
        %v1567 = vpow.pop %v1566
        %v1568 = vsel %vm1087, %v1567, 0.0
        %1569 = vadd.xlane.f32.xlu0 %v1568
        %v1570 = vpop.xlane.xlu0 %1569
        %v1571 = vrcp.pop %v1570
        %v1572 = vmul.f32 %v1567, %v1571
        %v1574 = vsel %vm1087, %v1572, 0
        %1576 = vmatprep.subr.mxu0 0.0
        %1577 = vmatpush1.msra.mxu0 %v938
        %1578 = vmatprep.subr.mxu0 0.0
        %1579 = vmatpush1.msra.mxu0 0.0
        %1580 = vmatprep.subr.mxu0 0.0
        %1581 = vmatpush1.msra.mxu0 0.0
        %1582 = vmatprep.subr.mxu0 0.0
        %1583 = vmatpush1.msra.mxu0 0.0
        %1584 = vmatprep.subr.mxu0 0.0
        %1585 = vmatpush1.msra.mxu0 0.0
        %1586 = vmatprep.subr.mxu0 0.0
        %1587 = vmatpush1.msra.mxu0 0.0
        %1588 = vmatprep.subr.mxu0 0.0
        %1589 = vmatpush1.msra.mxu0 0.0
        %1590 = vmatprep.subr.mxu0 0.0
        %1591 = vmatpush1.msra.mxu0 0.0
        %1592 = vmatprep.subr.mxu0 0.0
        %1593 = vmatpush1.msra.mxu0 0.0
        %1594 = vmatprep.subr.mxu0 0.0
        %1595 = vmatpush1.msra.mxu0 0.0
        %1596 = vmatprep.subr.mxu0 0.0
        %1597 = vmatpush1.msra.mxu0 0.0
        %1598 = vmatprep.subr.mxu0 0.0
        %1599 = vmatpush1.msra.mxu0 0.0
        %1600 = vmatprep.subr.mxu0 0.0
        %1601 = vmatpush1.msra.mxu0 0.0
        %1602 = vmatprep.subr.mxu0 0.0
        %1603 = vmatpush1.msra.mxu0 0.0
        %1604 = vmatprep.subr.mxu0 0.0
        %1605 = vmatpush1.msra.mxu0 0.0
        %1606 = vmatprep.subr.mxu0 0.0
        %1607 = vmatpush1.msra.mxu0 0.0
        %1608 = vmatprep.subr.mxu0 0.0
        %1609 = vmatpush1.msra.mxu0 0.0
        %1610 = vmatprep.subr.mxu0 0.0
        %1611 = vmatpush1.msra.mxu0 0.0
        %1612 = vmatprep.subr.mxu0 0.0
        %1613 = vmatpush1.msra.mxu0 0.0
        %1614 = vmatprep.subr.mxu0 0.0
        %1615 = vmatpush1.msra.mxu0 0.0
        %1616 = vmatprep.subr.mxu0 0.0
        %1617 = vmatpush1.msra.mxu0 0.0
        %1618 = vmatprep.subr.mxu0 0.0
        %1619 = vmatpush1.msra.mxu0 0.0
        %1620 = vmatprep.subr.mxu0 0.0
        %1621 = vmatpush1.msra.mxu0 0.0
        %1622 = vmatprep.subr.mxu0 0.0
        %1623 = vmatpush1.msra.mxu0 0.0
        %1624 = vmatprep.subr.mxu0 0.0
        %1625 = vmatpush1.msra.mxu0 0.0
        %1626 = vmatprep.subr.mxu0 0.0
        %1627 = vmatpush1.msra.mxu0 0.0
        %1628 = vmatprep.subr.mxu0 0.0
        %1629 = vmatpush1.msra.mxu0 0.0
        %1630 = vmatprep.subr.mxu0 0.0
        %1631 = vmatpush1.msra.mxu0 0.0
        %1632 = vmatprep.subr.mxu0 0.0
        %1633 = vmatpush1.msra.mxu0 0.0
        %1634 = vmatprep.subr.mxu0 0.0
        %1635 = vmatpush1.msra.mxu0 0.0
        %1636 = vmatprep.subr.mxu0 0.0
        %1637 = vmatpush1.msra.mxu0 0.0
        %1638 = vmatprep.subr.mxu0 0.0
        %1639 = vmatpush1.msra.mxu0 0.0
        %1640 = vmatprep.mubr.f32.mxu0 0.0
        %1641 = vmatmul.mubr.f32.gmra.mrb[0].mxu0 %v1574
        %v1642 = vpop.f32.mrb[0].mxu0
        %v1643 = vadd.f32 0.0, %v1642
        %v1644 = vpop.f32.mrb[0].mxu0
        %1645 = vdwg.mxu0
        %v1647 = vsel %vm1010, %v1643, 0
        %1649 = vmatprep.subr.mxu0 %v979
        %1650 = vmatpush1.msra.mxu0 %v978
        %1651 = vmatprep.subr.mxu0 %v981
        %1652 = vmatpush1.msra.mxu0 %v980
        %1653 = vmatprep.subr.mxu0 %v983
        %1654 = vmatpush1.msra.mxu0 %v982
        %1655 = vmatprep.subr.mxu0 %v985
        %1656 = vmatpush1.msra.mxu0 %v984
        %1657 = vmatprep.subr.mxu0 %v987
        %1658 = vmatpush1.msra.mxu0 %v986
        %1659 = vmatprep.subr.mxu0 %v989
        %1660 = vmatpush1.msra.mxu0 %v988
        %1661 = vmatprep.subr.mxu0 %v991
        %1662 = vmatpush1.msra.mxu0 %v990
        %1663 = vmatprep.subr.mxu0 %v993
        %1664 = vmatpush1.msra.mxu0 %v992
        %1665 = vmatprep.subr.mxu0 0.0
        %1666 = vmatpush1.msra.mxu0 0.0
        %1667 = vmatprep.subr.mxu0 0.0
        %1668 = vmatpush1.msra.mxu0 0.0
        %1669 = vmatprep.subr.mxu0 0.0
        %1670 = vmatpush1.msra.mxu0 0.0
        %1671 = vmatprep.subr.mxu0 0.0
        %1672 = vmatpush1.msra.mxu0 0.0
        %1673 = vmatprep.subr.mxu0 0.0
        %1674 = vmatpush1.msra.mxu0 0.0
        %1675 = vmatprep.subr.mxu0 0.0
        %1676 = vmatpush1.msra.mxu0 0.0
        %1677 = vmatprep.subr.mxu0 0.0
        %1678 = vmatpush1.msra.mxu0 0.0
        %1679 = vmatprep.subr.mxu0 0.0
        %1680 = vmatpush1.msra.mxu0 0.0
        %1681 = vmatprep.subr.mxu0 0.0
        %1682 = vmatpush1.msra.mxu0 0.0
        %1683 = vmatprep.subr.mxu0 0.0
        %1684 = vmatpush1.msra.mxu0 0.0
        %1685 = vmatprep.subr.mxu0 0.0
        %1686 = vmatpush1.msra.mxu0 0.0
        %1687 = vmatprep.subr.mxu0 0.0
        %1688 = vmatpush1.msra.mxu0 0.0
        %1689 = vmatprep.subr.mxu0 0.0
        %1690 = vmatpush1.msra.mxu0 0.0
        %1691 = vmatprep.subr.mxu0 0.0
        %1692 = vmatpush1.msra.mxu0 0.0
        %1693 = vmatprep.subr.mxu0 0.0
        %1694 = vmatpush1.msra.mxu0 0.0
        %1695 = vmatprep.subr.mxu0 0.0
        %1696 = vmatpush1.msra.mxu0 0.0
        %1697 = vmatprep.subr.mxu0 0.0
        %1698 = vmatpush1.msra.mxu0 0.0
        %1699 = vmatprep.subr.mxu0 0.0
        %1700 = vmatpush1.msra.mxu0 0.0
        %1701 = vmatprep.subr.mxu0 0.0
        %1702 = vmatpush1.msra.mxu0 0.0
        %1703 = vmatprep.subr.mxu0 0.0
        %1704 = vmatpush1.msra.mxu0 0.0
        %1705 = vmatprep.subr.mxu0 0.0
        %1706 = vmatpush1.msra.mxu0 0.0
        %1707 = vmatprep.subr.mxu0 0.0
        %1708 = vmatpush1.msra.mxu0 0.0
        %1709 = vmatprep.subr.mxu0 0.0
        %1710 = vmatpush1.msra.mxu0 0.0
        %1711 = vmatprep.subr.mxu0 0.0
        %1712 = vmatpush1.msra.mxu0 0.0
        %1713 = vmatprep.mubr.f32.mxu0 0.0
        %1714 = vmatmul.mubr.f32.gmra.mrb[0].mxu0 %v1647
        %v1715 = vpop.f32.mrb[0].mxu0
        %v1716 = vadd.f32 0.0, %v1715
        %v1717 = vpop.f32.mrb[0].mxu0
        %v1718 = vadd.f32 0.0, %v1717
        %1719 = vdwg.mxu0
        %v1720 = vadd.f32 %v1482, %v1716
        %v1721 = vadd.f32 %v1484, %v1718
        %1722 = vrot.lane.b32.xlu0 %v796, 64
        %v1723 = vpop.permute.xlu0 %1722
        %1724 = vrot.lane.b32.xlu0 %v867, 64
        %v1725 = vpop.permute.xlu0 %1724
        %v1726 = vsel %vm1010, %v1723, 0
        %v1728 = vsel %vm1010, %v1725, 0
        %1730 = vmatprep.subr.mxu0 0.0
        %1731 = vmatpush1.xpose.msra.mxu0 %v1728
        %1732 = vmatprep.subr.mxu0 0.0
        %1733 = vmatpush1.xpose.msra.mxu0 0.0
        %1734 = vmatprep.subr.mxu0 0.0
        %1735 = vmatpush1.xpose.msra.mxu0 0.0
        %1736 = vmatprep.subr.mxu0 0.0
        %1737 = vmatpush1.xpose.msra.mxu0 0.0
        %1738 = vmatprep.subr.mxu0 0.0
        %1739 = vmatpush1.xpose.msra.mxu0 0.0
        %1740 = vmatprep.subr.mxu0 0.0
        %1741 = vmatpush1.xpose.msra.mxu0 0.0
        %1742 = vmatprep.subr.mxu0 0.0
        %1743 = vmatpush1.xpose.msra.mxu0 0.0
        %1744 = vmatprep.subr.mxu0 0.0
        %1745 = vmatpush1.xpose.msra.mxu0 0.0
        %1746 = vmatprep.subr.mxu0 0.0
        %1747 = vmatpush1.xpose.msra.mxu0 0.0
        %1748 = vmatprep.subr.mxu0 0.0
        %1749 = vmatpush1.xpose.msra.mxu0 0.0
        %1750 = vmatprep.subr.mxu0 0.0
        %1751 = vmatpush1.xpose.msra.mxu0 0.0
        %1752 = vmatprep.subr.mxu0 0.0
        %1753 = vmatpush1.xpose.msra.mxu0 0.0
        %1754 = vmatprep.subr.mxu0 0.0
        %1755 = vmatpush1.xpose.msra.mxu0 0.0
        %1756 = vmatprep.subr.mxu0 0.0
        %1757 = vmatpush1.xpose.msra.mxu0 0.0
        %1758 = vmatprep.subr.mxu0 0.0
        %1759 = vmatpush1.xpose.msra.mxu0 0.0
        %1760 = vmatprep.subr.mxu0 0.0
        %1761 = vmatpush1.xpose.msra.mxu0 0.0
        %1762 = vmatprep.subr.mxu0 0.0
        %1763 = vmatpush1.xpose.msra.mxu0 0.0
        %1764 = vmatprep.subr.mxu0 0.0
        %1765 = vmatpush1.xpose.msra.mxu0 0.0
        %1766 = vmatprep.subr.mxu0 0.0
        %1767 = vmatpush1.xpose.msra.mxu0 0.0
        %1768 = vmatprep.subr.mxu0 0.0
        %1769 = vmatpush1.xpose.msra.mxu0 0.0
        %1770 = vmatprep.subr.mxu0 0.0
        %1771 = vmatpush1.xpose.msra.mxu0 0.0
        %1772 = vmatprep.subr.mxu0 0.0
        %1773 = vmatpush1.xpose.msra.mxu0 0.0
        %1774 = vmatprep.subr.mxu0 0.0
        %1775 = vmatpush1.xpose.msra.mxu0 0.0
        %1776 = vmatprep.subr.mxu0 0.0
        %1777 = vmatpush1.xpose.msra.mxu0 0.0
        %1778 = vmatprep.subr.mxu0 0.0
        %1779 = vmatpush1.xpose.msra.mxu0 0.0
        %1780 = vmatprep.subr.mxu0 0.0
        %1781 = vmatpush1.xpose.msra.mxu0 0.0
        %1782 = vmatprep.subr.mxu0 0.0
        %1783 = vmatpush1.xpose.msra.mxu0 0.0
        %1784 = vmatprep.subr.mxu0 0.0
        %1785 = vmatpush1.xpose.msra.mxu0 0.0
        %1786 = vmatprep.subr.mxu0 0.0
        %1787 = vmatpush1.xpose.msra.mxu0 0.0
        %1788 = vmatprep.subr.mxu0 0.0
        %1789 = vmatpush1.xpose.msra.mxu0 0.0
        %1790 = vmatprep.subr.mxu0 0.0
        %1791 = vmatpush1.xpose.msra.mxu0 0.0
        %1792 = vmatprep.subr.mxu0 0.0
        %1793 = vmatpush1.xpose.msra.mxu0 0.0
        %1794 = vmatprep.mubr.f32.mxu0 0.0
        %1795 = vmatmul.mubr.f32.gmra.mrb[0].mxu0 %v1726
        %v1796 = vpop.f32.mrb[0].mxu0
        %v1797 = vadd.f32 %v945, %v1796
        %v1798 = vpop.f32.mrb[0].mxu0
        %1799 = vdwg.mxu0
        %v1800 = vsel %vm1087, %v1797, -inf
        %1801 = vmax.xlane.f32.xlu0 %v1800
        %v1802 = vpop.xlane.xlu0 %1801
        %v1803 = vsub.f32 %v1797, %v1802
        %v1804 = vmul.f32 %v1803, 1.442695
        %v1805 = vpow.pop %v1804
        %v1806 = vsel %vm1087, %v1805, 0.0
        %1807 = vadd.xlane.f32.xlu0 %v1806
        %v1808 = vpop.xlane.xlu0 %1807
        %v1809 = vrcp.pop %v1808
        %v1810 = vmul.f32 %v1805, %v1809
        %1812 = vrot.lane.b32.xlu0 %v938, 64
        %v1813 = vpop.permute.xlu0 %1812
        %v1816 = vsel %vm1087, %v1810, 0
        %1818 = vmatprep.subr.mxu0 0.0
        %1819 = vmatpush1.msra.mxu0 %v1813
        %1820 = vmatprep.subr.mxu0 0.0
        %1821 = vmatpush1.msra.mxu0 0.0
        %1822 = vmatprep.subr.mxu0 0.0
        %1823 = vmatpush1.msra.mxu0 0.0
        %1824 = vmatprep.subr.mxu0 0.0
        %1825 = vmatpush1.msra.mxu0 0.0
        %1826 = vmatprep.subr.mxu0 0.0
        %1827 = vmatpush1.msra.mxu0 0.0
        %1828 = vmatprep.subr.mxu0 0.0
        %1829 = vmatpush1.msra.mxu0 0.0
        %1830 = vmatprep.subr.mxu0 0.0
        %1831 = vmatpush1.msra.mxu0 0.0
        %1832 = vmatprep.subr.mxu0 0.0
        %1833 = vmatpush1.msra.mxu0 0.0
        %1834 = vmatprep.subr.mxu0 0.0
        %1835 = vmatpush1.msra.mxu0 0.0
        %1836 = vmatprep.subr.mxu0 0.0
        %1837 = vmatpush1.msra.mxu0 0.0
        %1838 = vmatprep.subr.mxu0 0.0
        %1839 = vmatpush1.msra.mxu0 0.0
        %1840 = vmatprep.subr.mxu0 0.0
        %1841 = vmatpush1.msra.mxu0 0.0
        %1842 = vmatprep.subr.mxu0 0.0
        %1843 = vmatpush1.msra.mxu0 0.0
        %1844 = vmatprep.subr.mxu0 0.0
        %1845 = vmatpush1.msra.mxu0 0.0
        %1846 = vmatprep.subr.mxu0 0.0
        %1847 = vmatpush1.msra.mxu0 0.0
        %1848 = vmatprep.subr.mxu0 0.0
        %1849 = vmatpush1.msra.mxu0 0.0
        %1850 = vmatprep.subr.mxu0 0.0
        %1851 = vmatpush1.msra.mxu0 0.0
        %1852 = vmatprep.subr.mxu0 0.0
        %1853 = vmatpush1.msra.mxu0 0.0
        %1854 = vmatprep.subr.mxu0 0.0
        %1855 = vmatpush1.msra.mxu0 0.0
        %1856 = vmatprep.subr.mxu0 0.0
        %1857 = vmatpush1.msra.mxu0 0.0
        %1858 = vmatprep.subr.mxu0 0.0
        %1859 = vmatpush1.msra.mxu0 0.0
        %1860 = vmatprep.subr.mxu0 0.0
        %1861 = vmatpush1.msra.mxu0 0.0
        %1862 = vmatprep.subr.mxu0 0.0
        %1863 = vmatpush1.msra.mxu0 0.0
        %1864 = vmatprep.subr.mxu0 0.0
        %1865 = vmatpush1.msra.mxu0 0.0
        %1866 = vmatprep.subr.mxu0 0.0
        %1867 = vmatpush1.msra.mxu0 0.0
        %1868 = vmatprep.subr.mxu0 0.0
        %1869 = vmatpush1.msra.mxu0 0.0
        %1870 = vmatprep.subr.mxu0 0.0
        %1871 = vmatpush1.msra.mxu0 0.0
        %1872 = vmatprep.subr.mxu0 0.0
        %1873 = vmatpush1.msra.mxu0 0.0
        %1874 = vmatprep.subr.mxu0 0.0
        %1875 = vmatpush1.msra.mxu0 0.0
        %1876 = vmatprep.subr.mxu0 0.0
        %1877 = vmatpush1.msra.mxu0 0.0
        %1878 = vmatprep.subr.mxu0 0.0
        %1879 = vmatpush1.msra.mxu0 0.0
        %1880 = vmatprep.subr.mxu0 0.0
        %1881 = vmatpush1.msra.mxu0 0.0
        %1882 = vmatprep.mubr.f32.mxu0 0.0
        %1883 = vmatmul.mubr.f32.gmra.mrb[0].mxu0 %v1816
        %v1884 = vpop.f32.mrb[0].mxu0
        %v1885 = vadd.f32 0.0, %v1884
        %v1886 = vpop.f32.mrb[0].mxu0
        %1887 = vdwg.mxu0
        %v1889 = vsel %vm1010, %v1885, 0
        %1891 = vmatprep.subr.mxu0 %v995
        %1892 = vmatpush1.msra.mxu0 %v994
        %1893 = vmatprep.subr.mxu0 %v997
        %1894 = vmatpush1.msra.mxu0 %v996
        %1895 = vmatprep.subr.mxu0 %v999
        %1896 = vmatpush1.msra.mxu0 %v998
        %1897 = vmatprep.subr.mxu0 %v1001
        %1898 = vmatpush1.msra.mxu0 %v1000
        %1899 = vmatprep.subr.mxu0 %v1003
        %1900 = vmatpush1.msra.mxu0 %v1002
        %1901 = vmatprep.subr.mxu0 %v1005
        %1902 = vmatpush1.msra.mxu0 %v1004
        %1903 = vmatprep.subr.mxu0 %v1007
        %1904 = vmatpush1.msra.mxu0 %v1006
        %1905 = vmatprep.subr.mxu0 %v1009
        %1906 = vmatpush1.msra.mxu0 %v1008
        %1907 = vmatprep.subr.mxu0 0.0
        %1908 = vmatpush1.msra.mxu0 0.0
        %1909 = vmatprep.subr.mxu0 0.0
        %1910 = vmatpush1.msra.mxu0 0.0
        %1911 = vmatprep.subr.mxu0 0.0
        %1912 = vmatpush1.msra.mxu0 0.0
        %1913 = vmatprep.subr.mxu0 0.0
        %1914 = vmatpush1.msra.mxu0 0.0
        %1915 = vmatprep.subr.mxu0 0.0
        %1916 = vmatpush1.msra.mxu0 0.0
        %1917 = vmatprep.subr.mxu0 0.0
        %1918 = vmatpush1.msra.mxu0 0.0
        %1919 = vmatprep.subr.mxu0 0.0
        %1920 = vmatpush1.msra.mxu0 0.0
        %1921 = vmatprep.subr.mxu0 0.0
        %1922 = vmatpush1.msra.mxu0 0.0
        %1923 = vmatprep.subr.mxu0 0.0
        %1924 = vmatpush1.msra.mxu0 0.0
        %1925 = vmatprep.subr.mxu0 0.0
        %1926 = vmatpush1.msra.mxu0 0.0
        %1927 = vmatprep.subr.mxu0 0.0
        %1928 = vmatpush1.msra.mxu0 0.0
        %1929 = vmatprep.subr.mxu0 0.0
        %1930 = vmatpush1.msra.mxu0 0.0
        %1931 = vmatprep.subr.mxu0 0.0
        %1932 = vmatpush1.msra.mxu0 0.0
        %1933 = vmatprep.subr.mxu0 0.0
        %1934 = vmatpush1.msra.mxu0 0.0
        %1935 = vmatprep.subr.mxu0 0.0
        %1936 = vmatpush1.msra.mxu0 0.0
        %1937 = vmatprep.subr.mxu0 0.0
        %1938 = vmatpush1.msra.mxu0 0.0
        %1939 = vmatprep.subr.mxu0 0.0
        %1940 = vmatpush1.msra.mxu0 0.0
        %1941 = vmatprep.subr.mxu0 0.0
        %1942 = vmatpush1.msra.mxu0 0.0
        %1943 = vmatprep.subr.mxu0 0.0
        %1944 = vmatpush1.msra.mxu0 0.0
        %1945 = vmatprep.subr.mxu0 0.0
        %1946 = vmatpush1.msra.mxu0 0.0
        %1947 = vmatprep.subr.mxu0 0.0
        %1948 = vmatpush1.msra.mxu0 0.0
        %1949 = vmatprep.subr.mxu0 0.0
        %1950 = vmatpush1.msra.mxu0 0.0
        %1951 = vmatprep.subr.mxu0 0.0
        %1952 = vmatpush1.msra.mxu0 0.0
        %1953 = vmatprep.subr.mxu0 0.0
        %1954 = vmatpush1.msra.mxu0 0.0
        %1955 = vmatprep.mubr.f32.mxu0 0.0
        %1956 = vmatmul.mubr.f32.gmra.mrb[0].mxu0 %v1889
        %v1957 = vpop.f32.mrb[0].mxu0
        %v1958 = vadd.f32 0.0, %v1957
        %v1959 = vpop.f32.mrb[0].mxu0
        %v1960 = vadd.f32 0.0, %v1959
        %1961 = vdwg.mxu0
        %v1962 = vadd.f32 %v1720, %v1958
        %v1963 = vadd.f32 %v1721, %v1960
        %v1964 = vld [vmem:[%s5] sm:$0x3]
        %v1966 = vlaneseq
        %v1967 = vshrl.u32 %v1966, 7
        %v1968 = vsub.s32 0, %v1967
        %v1969 = vrot.slane %v1964, %v1968
        %v1970 = vlaneseq
        %v1971 = vshrl.u32 %v1970, 7
        %v1972 = vsub.s32 1, %v1971
        %v1973 = vrot.slane %v1964, %v1972
        %v1976 = vadd.f32 %v1962, %v1969
        %v1977 = vadd.f32 %v1963, %v1973
        %v1978 = vadd.f32 %v488, %v1976
        %v1979 = vadd.f32 %v489, %v1977
        %v1980 = vld [vmem:[%s6] sm:$0x3]
        %v1981 = vld [vmem:[%s7] sm:$0x3]
        %v1982 = vadd.f32 %v1978, %v1979
        %1983 = vadd.xlane.f32.xlu0 %v1982
        %v1984 = vpop.xlane.xlu0 %1983
        %v1985 = vmul.f32 %v1984, %v495
        %v1986 = vsub.f32 %v1978, %v1985
        %v1987 = vsub.f32 %v1979, %v1985
        %v1988 = vmul.f32 %v1986, %v1986
        %v1989 = vmul.f32 %v1987, %v1987
        %v1990 = vadd.f32 %v1988, %v1989
        %1991 = vadd.xlane.f32.xlu0 %v1990
        %v1992 = vpop.xlane.xlu0 %1991
        %v1993 = vmul.f32 %v1992, %v495
        %v1994 = vadd.f32 %v1993, 1e-05
        %v1995 = vrsqrt.pop %v1994
        %v1996 = vmul.f32 %v1986, %v1995
        %v1997 = vmul.f32 %v1987, %v1995
        %v1999 = vlaneseq
        %v2000 = vshrl.u32 %v1999, 7
        %v2001 = vsub.s32 0, %v2000
        %v2002 = vrot.slane %v1980, %v2001
        %v2003 = vlaneseq
        %v2004 = vshrl.u32 %v2003, 7
        %v2005 = vsub.s32 1, %v2004
        %v2006 = vrot.slane %v1980, %v2005
        %v2009 = vmul.f32 %v1996, %v2002
        %v2010 = vmul.f32 %v1997, %v2006
        %v2012 = vlaneseq
        %v2013 = vshrl.u32 %v2012, 7
        %v2014 = vsub.s32 0, %v2013
        %v2015 = vrot.slane %v1981, %v2014
        %v2016 = vlaneseq
        %v2017 = vshrl.u32 %v2016, 7
        %v2018 = vsub.s32 1, %v2017
        %v2019 = vrot.slane %v1981, %v2018
        %v2022 = vadd.f32 %v2009, %v2015
        %v2023 = vadd.f32 %v2010, %v2019
        %v2024 = vld [vmem:[#allocation8] sm:$0xff]
        %v2025 = vld [vmem:[#allocation8 + $0x8] sm:$0xff]
        %v2026 = vld [vmem:[#allocation8 + $0x10] sm:$0xff]
        %v2027 = vld [vmem:[#allocation8 + $0x18] sm:$0xff]
        %v2028 = vld [vmem:[#allocation8 + $0x20] sm:$0xff]
        %v2029 = vld [vmem:[#allocation8 + $0x28] sm:$0xff]
        %v2030 = vld [vmem:[#allocation8 + $0x30] sm:$0xff]
        %v2031 = vld [vmem:[#allocation8 + $0x38] sm:$0xff]
        %v2032 = vld [vmem:[#allocation8 + $0x40] sm:$0xff]
        %v2033 = vld [vmem:[#allocation8 + $0x48] sm:$0xff]
        %v2034 = vld [vmem:[#allocation8 + $0x50] sm:$0xff]
        %v2035 = vld [vmem:[#allocation8 + $0x58] sm:$0xff]
        %v2036 = vld [vmem:[#allocation8 + $0x60] sm:$0xff]
        %v2037 = vld [vmem:[#allocation8 + $0x68] sm:$0xff]
        %v2038 = vld [vmem:[#allocation8 + $0x70] sm:$0xff]
        %v2039 = vld [vmem:[#allocation8 + $0x78] sm:$0xff]
        %v2040 = vld [vmem:[#allocation8 + $0x80] sm:$0xff]
        %v2041 = vld [vmem:[#allocation8 + $0x88] sm:$0xff]
        %v2042 = vld [vmem:[#allocation8 + $0x90] sm:$0xff]
        %v2043 = vld [vmem:[#allocation8 + $0x98] sm:$0xff]
        %v2044 = vld [vmem:[#allocation8 + $0xa0] sm:$0xff]
        %v2045 = vld [vmem:[#allocation8 + $0xa8] sm:$0xff]
        %v2046 = vld [vmem:[#allocation8 + $0xb0] sm:$0xff]
        %v2047 = vld [vmem:[#allocation8 + $0xb8] sm:$0xff]
        %v2048 = vld [vmem:[#allocation8 + $0xc0] sm:$0xff]
        %v2049 = vld [vmem:[#allocation8 + $0xc8] sm:$0xff]
        %v2050 = vld [vmem:[#allocation8 + $0xd0] sm:$0xff]
        %v2051 = vld [vmem:[#allocation8 + $0xd8] sm:$0xff]
        %v2052 = vld [vmem:[#allocation8 + $0xe0] sm:$0xff]
        %v2053 = vld [vmem:[#allocation8 + $0xe8] sm:$0xff]
        %v2054 = vld [vmem:[#allocation8 + $0xf0] sm:$0xff]
        %v2055 = vld [vmem:[#allocation8 + $0xf8] sm:$0xff]
        %v2056 = vld [vmem:[#allocation8 + $0x100] sm:$0xff]
        %v2057 = vld [vmem:[#allocation8 + $0x108] sm:$0xff]
        %v2058 = vld [vmem:[#allocation8 + $0x110] sm:$0xff]
        %v2059 = vld [vmem:[#allocation8 + $0x118] sm:$0xff]
        %v2060 = vld [vmem:[#allocation8 + $0x120] sm:$0xff]
        %v2061 = vld [vmem:[#allocation8 + $0x128] sm:$0xff]
        %v2062 = vld [vmem:[#allocation8 + $0x130] sm:$0xff]
        %v2063 = vld [vmem:[#allocation8 + $0x138] sm:$0xff]
        %v2064 = vld [vmem:[#allocation8 + $0x140] sm:$0xff]
        %v2065 = vld [vmem:[#allocation8 + $0x148] sm:$0xff]
        %v2066 = vld [vmem:[#allocation8 + $0x150] sm:$0xff]
        %v2067 = vld [vmem:[#allocation8 + $0x158] sm:$0xff]
        %v2068 = vld [vmem:[#allocation8 + $0x160] sm:$0xff]
        %v2069 = vld [vmem:[#allocation8 + $0x168] sm:$0xff]
        %v2070 = vld [vmem:[#allocation8 + $0x170] sm:$0xff]
        %v2071 = vld [vmem:[#allocation8 + $0x178] sm:$0xff]
        %v2072 = vld [vmem:[#allocation8 + $0x180] sm:$0xff]
        %v2073 = vld [vmem:[#allocation8 + $0x188] sm:$0xff]
        %v2074 = vld [vmem:[#allocation8 + $0x190] sm:$0xff]
        %v2075 = vld [vmem:[#allocation8 + $0x198] sm:$0xff]
        %v2076 = vld [vmem:[#allocation8 + $0x1a0] sm:$0xff]
        %v2077 = vld [vmem:[#allocation8 + $0x1a8] sm:$0xff]
        %v2078 = vld [vmem:[#allocation8 + $0x1b0] sm:$0xff]
        %v2079 = vld [vmem:[#allocation8 + $0x1b8] sm:$0xff]
        %v2080 = vld [vmem:[#allocation8 + $0x1c0] sm:$0xff]
        %v2081 = vld [vmem:[#allocation8 + $0x1c8] sm:$0xff]
        %v2082 = vld [vmem:[#allocation8 + $0x1d0] sm:$0xff]
        %v2083 = vld [vmem:[#allocation8 + $0x1d8] sm:$0xff]
        %v2084 = vld [vmem:[#allocation8 + $0x1e0] sm:$0xff]
        %v2085 = vld [vmem:[#allocation8 + $0x1e8] sm:$0xff]
        %v2086 = vld [vmem:[#allocation8 + $0x1f0] sm:$0xff]
        %v2087 = vld [vmem:[#allocation8 + $0x1f8] sm:$0xff]
        %v2088 = vld [vmem:[#allocation8 + $0x200] sm:$0xff]
        %v2089 = vld [vmem:[#allocation8 + $0x208] sm:$0xff]
        %v2090 = vld [vmem:[#allocation8 + $0x210] sm:$0xff]
        %v2091 = vld [vmem:[#allocation8 + $0x218] sm:$0xff]
        %v2092 = vld [vmem:[#allocation8 + $0x220] sm:$0xff]
        %v2093 = vld [vmem:[#allocation8 + $0x228] sm:$0xff]
        %v2094 = vld [vmem:[#allocation8 + $0x230] sm:$0xff]
        %v2095 = vld [vmem:[#allocation8 + $0x238] sm:$0xff]
        %v2096 = vld [vmem:[#allocation8 + $0x240] sm:$0xff]
        %v2097 = vld [vmem:[#allocation8 + $0x248] sm:$0xff]
        %v2098 = vld [vmem:[#allocation8 + $0x250] sm:$0xff]
        %v2099 = vld [vmem:[#allocation8 + $0x258] sm:$0xff]
        %v2100 = vld [vmem:[#allocation8 + $0x260] sm:$0xff]
        %v2101 = vld [vmem:[#allocation8 + $0x268] sm:$0xff]
        %v2102 = vld [vmem:[#allocation8 + $0x270] sm:$0xff]
        %v2103 = vld [vmem:[#allocation8 + $0x278] sm:$0xff]
        %v2104 = vld [vmem:[#allocation8 + $0x280] sm:$0xff]
        %v2105 = vld [vmem:[#allocation8 + $0x288] sm:$0xff]
        %v2106 = vld [vmem:[#allocation8 + $0x290] sm:$0xff]
        %v2107 = vld [vmem:[#allocation8 + $0x298] sm:$0xff]
        %v2108 = vld [vmem:[#allocation8 + $0x2a0] sm:$0xff]
        %v2109 = vld [vmem:[#allocation8 + $0x2a8] sm:$0xff]
        %v2110 = vld [vmem:[#allocation8 + $0x2b0] sm:$0xff]
        %v2111 = vld [vmem:[#allocation8 + $0x2b8] sm:$0xff]
        %v2112 = vld [vmem:[#allocation8 + $0x2c0] sm:$0xff]
        %v2113 = vld [vmem:[#allocation8 + $0x2c8] sm:$0xff]
        %v2114 = vld [vmem:[#allocation8 + $0x2d0] sm:$0xff]
        %v2115 = vld [vmem:[#allocation8 + $0x2d8] sm:$0xff]
        %v2116 = vld [vmem:[#allocation8 + $0x2e0] sm:$0xff]
        %v2117 = vld [vmem:[#allocation8 + $0x2e8] sm:$0xff]
        %v2118 = vld [vmem:[#allocation8 + $0x2f0] sm:$0xff]
        %v2119 = vld [vmem:[#allocation8 + $0x2f8] sm:$0xff]
        %v2120 = vld [vmem:[#allocation8 + $0x300] sm:$0xff]
        %v2121 = vld [vmem:[#allocation8 + $0x308] sm:$0xff]
        %v2122 = vld [vmem:[#allocation8 + $0x310] sm:$0xff]
        %v2123 = vld [vmem:[#allocation8 + $0x318] sm:$0xff]
        %v2124 = vld [vmem:[#allocation8 + $0x320] sm:$0xff]
        %v2125 = vld [vmem:[#allocation8 + $0x328] sm:$0xff]
        %v2126 = vld [vmem:[#allocation8 + $0x330] sm:$0xff]
        %v2127 = vld [vmem:[#allocation8 + $0x338] sm:$0xff]
        %v2128 = vld [vmem:[#allocation8 + $0x340] sm:$0xff]
        %v2129 = vld [vmem:[#allocation8 + $0x348] sm:$0xff]
        %v2130 = vld [vmem:[#allocation8 + $0x350] sm:$0xff]
        %v2131 = vld [vmem:[#allocation8 + $0x358] sm:$0xff]
        %v2132 = vld [vmem:[#allocation8 + $0x360] sm:$0xff]
        %v2133 = vld [vmem:[#allocation8 + $0x368] sm:$0xff]
        %v2134 = vld [vmem:[#allocation8 + $0x370] sm:$0xff]
        %v2135 = vld [vmem:[#allocation8 + $0x378] sm:$0xff]
        %v2136 = vld [vmem:[#allocation8 + $0x380] sm:$0xff]
        %v2137 = vld [vmem:[#allocation8 + $0x388] sm:$0xff]
        %v2138 = vld [vmem:[#allocation8 + $0x390] sm:$0xff]
        %v2139 = vld [vmem:[#allocation8 + $0x398] sm:$0xff]
        %v2140 = vld [vmem:[#allocation8 + $0x3a0] sm:$0xff]
        %v2141 = vld [vmem:[#allocation8 + $0x3a8] sm:$0xff]
        %v2142 = vld [vmem:[#allocation8 + $0x3b0] sm:$0xff]
        %v2143 = vld [vmem:[#allocation8 + $0x3b8] sm:$0xff]
        %v2144 = vld [vmem:[#allocation8 + $0x3c0] sm:$0xff]
        %v2145 = vld [vmem:[#allocation8 + $0x3c8] sm:$0xff]
        %v2146 = vld [vmem:[#allocation8 + $0x3d0] sm:$0xff]
        %v2147 = vld [vmem:[#allocation8 + $0x3d8] sm:$0xff]
        %v2148 = vld [vmem:[#allocation8 + $0x3e0] sm:$0xff]
        %v2149 = vld [vmem:[#allocation8 + $0x3e8] sm:$0xff]
        %v2150 = vld [vmem:[#allocation8 + $0x3f0] sm:$0xff]
        %v2151 = vld [vmem:[#allocation8 + $0x3f8] sm:$0xff]
        %v2152 = vld [vmem:[#allocation8 + $0x400] sm:$0xff]
        %v2153 = vld [vmem:[#allocation8 + $0x408] sm:$0xff]
        %v2154 = vld [vmem:[#allocation8 + $0x410] sm:$0xff]
        %v2155 = vld [vmem:[#allocation8 + $0x418] sm:$0xff]
        %v2156 = vld [vmem:[#allocation8 + $0x420] sm:$0xff]
        %v2157 = vld [vmem:[#allocation8 + $0x428] sm:$0xff]
        %v2158 = vld [vmem:[#allocation8 + $0x430] sm:$0xff]
        %v2159 = vld [vmem:[#allocation8 + $0x438] sm:$0xff]
        %v2160 = vld [vmem:[#allocation8 + $0x440] sm:$0xff]
        %v2161 = vld [vmem:[#allocation8 + $0x448] sm:$0xff]
        %v2162 = vld [vmem:[#allocation8 + $0x450] sm:$0xff]
        %v2163 = vld [vmem:[#allocation8 + $0x458] sm:$0xff]
        %v2164 = vld [vmem:[#allocation8 + $0x460] sm:$0xff]
        %v2165 = vld [vmem:[#allocation8 + $0x468] sm:$0xff]
        %v2166 = vld [vmem:[#allocation8 + $0x470] sm:$0xff]
        %v2167 = vld [vmem:[#allocation8 + $0x478] sm:$0xff]
        %v2168 = vld [vmem:[#allocation8 + $0x480] sm:$0xff]
        %v2169 = vld [vmem:[#allocation8 + $0x488] sm:$0xff]
        %v2170 = vld [vmem:[#allocation8 + $0x490] sm:$0xff]
        %v2171 = vld [vmem:[#allocation8 + $0x498] sm:$0xff]
        %v2172 = vld [vmem:[#allocation8 + $0x4a0] sm:$0xff]
        %v2173 = vld [vmem:[#allocation8 + $0x4a8] sm:$0xff]
        %v2174 = vld [vmem:[#allocation8 + $0x4b0] sm:$0xff]
        %v2175 = vld [vmem:[#allocation8 + $0x4b8] sm:$0xff]
        %v2176 = vld [vmem:[#allocation8 + $0x4c0] sm:$0xff]
        %v2177 = vld [vmem:[#allocation8 + $0x4c8] sm:$0xff]
        %v2178 = vld [vmem:[#allocation8 + $0x4d0] sm:$0xff]
        %v2179 = vld [vmem:[#allocation8 + $0x4d8] sm:$0xff]
        %v2180 = vld [vmem:[#allocation8 + $0x4e0] sm:$0xff]
        %v2181 = vld [vmem:[#allocation8 + $0x4e8] sm:$0xff]
        %v2182 = vld [vmem:[#allocation8 + $0x4f0] sm:$0xff]
        %v2183 = vld [vmem:[#allocation8 + $0x4f8] sm:$0xff]
        %v2184 = vld [vmem:[#allocation8 + $0x500] sm:$0xff]
        %v2185 = vld [vmem:[#allocation8 + $0x508] sm:$0xff]
        %v2186 = vld [vmem:[#allocation8 + $0x510] sm:$0xff]
        %v2187 = vld [vmem:[#allocation8 + $0x518] sm:$0xff]
        %v2188 = vld [vmem:[#allocation8 + $0x520] sm:$0xff]
        %v2189 = vld [vmem:[#allocation8 + $0x528] sm:$0xff]
        %v2190 = vld [vmem:[#allocation8 + $0x530] sm:$0xff]
        %v2191 = vld [vmem:[#allocation8 + $0x538] sm:$0xff]
        %v2192 = vld [vmem:[#allocation8 + $0x540] sm:$0xff]
        %v2193 = vld [vmem:[#allocation8 + $0x548] sm:$0xff]
        %v2194 = vld [vmem:[#allocation8 + $0x550] sm:$0xff]
        %v2195 = vld [vmem:[#allocation8 + $0x558] sm:$0xff]
        %v2196 = vld [vmem:[#allocation8 + $0x560] sm:$0xff]
        %v2197 = vld [vmem:[#allocation8 + $0x568] sm:$0xff]
        %v2198 = vld [vmem:[#allocation8 + $0x570] sm:$0xff]
        %v2199 = vld [vmem:[#allocation8 + $0x578] sm:$0xff]
        %v2200 = vld [vmem:[#allocation8 + $0x580] sm:$0xff]
        %v2201 = vld [vmem:[#allocation8 + $0x588] sm:$0xff]
        %v2202 = vld [vmem:[#allocation8 + $0x590] sm:$0xff]
        %v2203 = vld [vmem:[#allocation8 + $0x598] sm:$0xff]
        %v2204 = vld [vmem:[#allocation8 + $0x5a0] sm:$0xff]
        %v2205 = vld [vmem:[#allocation8 + $0x5a8] sm:$0xff]
        %v2206 = vld [vmem:[#allocation8 + $0x5b0] sm:$0xff]
        %v2207 = vld [vmem:[#allocation8 + $0x5b8] sm:$0xff]
        %v2208 = vld [vmem:[#allocation8 + $0x5c0] sm:$0xff]
        %v2209 = vld [vmem:[#allocation8 + $0x5c8] sm:$0xff]
        %v2210 = vld [vmem:[#allocation8 + $0x5d0] sm:$0xff]
        %v2211 = vld [vmem:[#allocation8 + $0x5d8] sm:$0xff]
        %v2212 = vld [vmem:[#allocation8 + $0x5e0] sm:$0xff]
        %v2213 = vld [vmem:[#allocation8 + $0x5e8] sm:$0xff]
        %v2214 = vld [vmem:[#allocation8 + $0x5f0] sm:$0xff]
        %v2215 = vld [vmem:[#allocation8 + $0x5f8] sm:$0xff]
        %v2216 = vld [vmem:[#allocation8 + $0x600] sm:$0xff]
        %v2217 = vld [vmem:[#allocation8 + $0x608] sm:$0xff]
        %v2218 = vld [vmem:[#allocation8 + $0x610] sm:$0xff]
        %v2219 = vld [vmem:[#allocation8 + $0x618] sm:$0xff]
        %v2220 = vld [vmem:[#allocation8 + $0x620] sm:$0xff]
        %v2221 = vld [vmem:[#allocation8 + $0x628] sm:$0xff]
        %v2222 = vld [vmem:[#allocation8 + $0x630] sm:$0xff]
        %v2223 = vld [vmem:[#allocation8 + $0x638] sm:$0xff]
        %v2224 = vld [vmem:[#allocation8 + $0x640] sm:$0xff]
        %v2225 = vld [vmem:[#allocation8 + $0x648] sm:$0xff]
        %v2226 = vld [vmem:[#allocation8 + $0x650] sm:$0xff]
        %v2227 = vld [vmem:[#allocation8 + $0x658] sm:$0xff]
        %v2228 = vld [vmem:[#allocation8 + $0x660] sm:$0xff]
        %v2229 = vld [vmem:[#allocation8 + $0x668] sm:$0xff]
        %v2230 = vld [vmem:[#allocation8 + $0x670] sm:$0xff]
        %v2231 = vld [vmem:[#allocation8 + $0x678] sm:$0xff]
        %v2232 = vld [vmem:[#allocation8 + $0x680] sm:$0xff]
        %v2233 = vld [vmem:[#allocation8 + $0x688] sm:$0xff]
        %v2234 = vld [vmem:[#allocation8 + $0x690] sm:$0xff]
        %v2235 = vld [vmem:[#allocation8 + $0x698] sm:$0xff]
        %v2236 = vld [vmem:[#allocation8 + $0x6a0] sm:$0xff]
        %v2237 = vld [vmem:[#allocation8 + $0x6a8] sm:$0xff]
        %v2238 = vld [vmem:[#allocation8 + $0x6b0] sm:$0xff]
        %v2239 = vld [vmem:[#allocation8 + $0x6b8] sm:$0xff]
        %v2240 = vld [vmem:[#allocation8 + $0x6c0] sm:$0xff]
        %v2241 = vld [vmem:[#allocation8 + $0x6c8] sm:$0xff]
        %v2242 = vld [vmem:[#allocation8 + $0x6d0] sm:$0xff]
        %v2243 = vld [vmem:[#allocation8 + $0x6d8] sm:$0xff]
        %v2244 = vld [vmem:[#allocation8 + $0x6e0] sm:$0xff]
        %v2245 = vld [vmem:[#allocation8 + $0x6e8] sm:$0xff]
        %v2246 = vld [vmem:[#allocation8 + $0x6f0] sm:$0xff]
        %v2247 = vld [vmem:[#allocation8 + $0x6f8] sm:$0xff]
        %v2248 = vld [vmem:[#allocation8 + $0x700] sm:$0xff]
        %v2249 = vld [vmem:[#allocation8 + $0x708] sm:$0xff]
        %v2250 = vld [vmem:[#allocation8 + $0x710] sm:$0xff]
        %v2251 = vld [vmem:[#allocation8 + $0x718] sm:$0xff]
        %v2252 = vld [vmem:[#allocation8 + $0x720] sm:$0xff]
        %v2253 = vld [vmem:[#allocation8 + $0x728] sm:$0xff]
        %v2254 = vld [vmem:[#allocation8 + $0x730] sm:$0xff]
        %v2255 = vld [vmem:[#allocation8 + $0x738] sm:$0xff]
        %v2256 = vld [vmem:[#allocation8 + $0x740] sm:$0xff]
        %v2257 = vld [vmem:[#allocation8 + $0x748] sm:$0xff]
        %v2258 = vld [vmem:[#allocation8 + $0x750] sm:$0xff]
        %v2259 = vld [vmem:[#allocation8 + $0x758] sm:$0xff]
        %v2260 = vld [vmem:[#allocation8 + $0x760] sm:$0xff]
        %v2261 = vld [vmem:[#allocation8 + $0x768] sm:$0xff]
        %v2262 = vld [vmem:[#allocation8 + $0x770] sm:$0xff]
        %v2263 = vld [vmem:[#allocation8 + $0x778] sm:$0xff]
        %v2264 = vld [vmem:[#allocation8 + $0x780] sm:$0xff]
        %v2265 = vld [vmem:[#allocation8 + $0x788] sm:$0xff]
        %v2266 = vld [vmem:[#allocation8 + $0x790] sm:$0xff]
        %v2267 = vld [vmem:[#allocation8 + $0x798] sm:$0xff]
        %v2268 = vld [vmem:[#allocation8 + $0x7a0] sm:$0xff]
        %v2269 = vld [vmem:[#allocation8 + $0x7a8] sm:$0xff]
        %v2270 = vld [vmem:[#allocation8 + $0x7b0] sm:$0xff]
        %v2271 = vld [vmem:[#allocation8 + $0x7b8] sm:$0xff]
        %v2272 = vld [vmem:[#allocation8 + $0x7c0] sm:$0xff]
        %v2273 = vld [vmem:[#allocation8 + $0x7c8] sm:$0xff]
        %v2274 = vld [vmem:[#allocation8 + $0x7d0] sm:$0xff]
        %v2275 = vld [vmem:[#allocation8 + $0x7d8] sm:$0xff]
        %v2276 = vld [vmem:[#allocation8 + $0x7e0] sm:$0xff]
        %v2277 = vld [vmem:[#allocation8 + $0x7e8] sm:$0xff]
        %v2278 = vld [vmem:[#allocation8 + $0x7f0] sm:$0xff]
        %v2279 = vld [vmem:[#allocation8 + $0x7f8] sm:$0xff]
        %v2280 = vld [vmem:[%s9] sm:$0xff]
        %v2282 = vlaneseq
        %v2283 = vshrl.u32 %v2282, 7
        %v2284 = vsub.s32 0, %v2283
        %v2285 = vrot.slane %v2280, %v2284
        %v2286 = vlaneseq
        %v2287 = vshrl.u32 %v2286, 7
        %v2288 = vsub.s32 1, %v2287
        %v2289 = vrot.slane %v2280, %v2288
        %v2290 = vlaneseq
        %v2291 = vshrl.u32 %v2290, 7
        %v2292 = vsub.s32 2, %v2291
        %v2293 = vrot.slane %v2280, %v2292
        %v2294 = vlaneseq
        %v2295 = vshrl.u32 %v2294, 7
        %v2296 = vsub.s32 3, %v2295
        %v2297 = vrot.slane %v2280, %v2296
        %v2298 = vlaneseq
        %v2299 = vshrl.u32 %v2298, 7
        %v2300 = vsub.s32 4, %v2299
        %v2301 = vrot.slane %v2280, %v2300
        %v2302 = vlaneseq
        %v2303 = vshrl.u32 %v2302, 7
        %v2304 = vsub.s32 5, %v2303
        %v2305 = vrot.slane %v2280, %v2304
        %v2306 = vlaneseq
        %v2307 = vshrl.u32 %v2306, 7
        %v2308 = vsub.s32 6, %v2307
        %v2309 = vrot.slane %v2280, %v2308
        %v2310 = vlaneseq
        %v2311 = vshrl.u32 %v2310, 7
        %v2312 = vsub.s32 7, %v2311
        %v2313 = vrot.slane %v2280, %v2312
        %2322 = vmatprep.subr.mxu0 %v2025
        %2323 = vmatpush1.msra.mxu0 %v2024
        %2324 = vmatprep.subr.mxu0 %v2033
        %2325 = vmatpush1.msra.mxu0 %v2032
        %2326 = vmatprep.subr.mxu0 %v2041
        %2327 = vmatpush1.msra.mxu0 %v2040
        %2328 = vmatprep.subr.mxu0 %v2049
        %2329 = vmatpush1.msra.mxu0 %v2048
        %2330 = vmatprep.subr.mxu0 %v2057
        %2331 = vmatpush1.msra.mxu0 %v2056
        %2332 = vmatprep.subr.mxu0 %v2065
        %2333 = vmatpush1.msra.mxu0 %v2064
        %2334 = vmatprep.subr.mxu0 %v2073
        %2335 = vmatpush1.msra.mxu0 %v2072
        %2336 = vmatprep.subr.mxu0 %v2081
        %2337 = vmatpush1.msra.mxu0 %v2080
        %2338 = vmatprep.subr.mxu0 %v2089
        %2339 = vmatpush1.msra.mxu0 %v2088
        %2340 = vmatprep.subr.mxu0 %v2097
        %2341 = vmatpush1.msra.mxu0 %v2096
        %2342 = vmatprep.subr.mxu0 %v2105
        %2343 = vmatpush1.msra.mxu0 %v2104
        %2344 = vmatprep.subr.mxu0 %v2113
        %2345 = vmatpush1.msra.mxu0 %v2112
        %2346 = vmatprep.subr.mxu0 %v2121
        %2347 = vmatpush1.msra.mxu0 %v2120
        %2348 = vmatprep.subr.mxu0 %v2129
        %2349 = vmatpush1.msra.mxu0 %v2128
        %2350 = vmatprep.subr.mxu0 %v2137
        %2351 = vmatpush1.msra.mxu0 %v2136
        %2352 = vmatprep.subr.mxu0 %v2145
        %2353 = vmatpush1.msra.mxu0 %v2144
        %2354 = vmatprep.subr.mxu0 %v2153
        %2355 = vmatpush1.msra.mxu0 %v2152
        %2356 = vmatprep.subr.mxu0 %v2161
        %2357 = vmatpush1.msra.mxu0 %v2160
        %2358 = vmatprep.subr.mxu0 %v2169
        %2359 = vmatpush1.msra.mxu0 %v2168
        %2360 = vmatprep.subr.mxu0 %v2177
        %2361 = vmatpush1.msra.mxu0 %v2176
        %2362 = vmatprep.subr.mxu0 %v2185
        %2363 = vmatpush1.msra.mxu0 %v2184
        %2364 = vmatprep.subr.mxu0 %v2193
        %2365 = vmatpush1.msra.mxu0 %v2192
        %2366 = vmatprep.subr.mxu0 %v2201
        %2367 = vmatpush1.msra.mxu0 %v2200
        %2368 = vmatprep.subr.mxu0 %v2209
        %2369 = vmatpush1.msra.mxu0 %v2208
        %2370 = vmatprep.subr.mxu0 %v2217
        %2371 = vmatpush1.msra.mxu0 %v2216
        %2372 = vmatprep.subr.mxu0 %v2225
        %2373 = vmatpush1.msra.mxu0 %v2224
        %2374 = vmatprep.subr.mxu0 %v2233
        %2375 = vmatpush1.msra.mxu0 %v2232
        %2376 = vmatprep.subr.mxu0 %v2241
        %2377 = vmatpush1.msra.mxu0 %v2240
        %2378 = vmatprep.subr.mxu0 %v2249
        %2379 = vmatpush1.msra.mxu0 %v2248
        %2380 = vmatprep.subr.mxu0 %v2257
        %2381 = vmatpush1.msra.mxu0 %v2256
        %2382 = vmatprep.subr.mxu0 %v2265
        %2383 = vmatpush1.msra.mxu0 %v2264
        %2384 = vmatprep.subr.mxu0 %v2273
        %2385 = vmatpush1.msra.mxu0 %v2272
        %2386 = vmatprep.mubr.f32.mxu0 %v2023
        %2387 = vmatmul.mubr.f32.gmra.mrb[0].mxu0 %v2022
        %v2388 = vpop.f32.mrb[0].mxu0
        %v2389 = vadd.f32 %v2285, %v2388
        %v2390 = vpop.f32.mrb[0].mxu0
        %v2391 = vadd.f32 %v2289, %v2390
        %2392 = vdwg.mxu0
        %2393 = vmatprep.subr.mxu0 %v2027
        %2394 = vmatpush1.msra.mxu0 %v2026
        %2395 = vmatprep.subr.mxu0 %v2035
        %2396 = vmatpush1.msra.mxu0 %v2034
        %2397 = vmatprep.subr.mxu0 %v2043
        %2398 = vmatpush1.msra.mxu0 %v2042
        %2399 = vmatprep.subr.mxu0 %v2051
        %2400 = vmatpush1.msra.mxu0 %v2050
        %2401 = vmatprep.subr.mxu0 %v2059
        %2402 = vmatpush1.msra.mxu0 %v2058
        %2403 = vmatprep.subr.mxu0 %v2067
        %2404 = vmatpush1.msra.mxu0 %v2066
        %2405 = vmatprep.subr.mxu0 %v2075
        %2406 = vmatpush1.msra.mxu0 %v2074
        %2407 = vmatprep.subr.mxu0 %v2083
        %2408 = vmatpush1.msra.mxu0 %v2082
        %2409 = vmatprep.subr.mxu0 %v2091
        %2410 = vmatpush1.msra.mxu0 %v2090
        %2411 = vmatprep.subr.mxu0 %v2099
        %2412 = vmatpush1.msra.mxu0 %v2098
        %2413 = vmatprep.subr.mxu0 %v2107
        %2414 = vmatpush1.msra.mxu0 %v2106
        %2415 = vmatprep.subr.mxu0 %v2115
        %2416 = vmatpush1.msra.mxu0 %v2114
        %2417 = vmatprep.subr.mxu0 %v2123
        %2418 = vmatpush1.msra.mxu0 %v2122
        %2419 = vmatprep.subr.mxu0 %v2131
        %2420 = vmatpush1.msra.mxu0 %v2130
        %2421 = vmatprep.subr.mxu0 %v2139
        %2422 = vmatpush1.msra.mxu0 %v2138
        %2423 = vmatprep.subr.mxu0 %v2147
        %2424 = vmatpush1.msra.mxu0 %v2146
        %2425 = vmatprep.subr.mxu0 %v2155
        %2426 = vmatpush1.msra.mxu0 %v2154
        %2427 = vmatprep.subr.mxu0 %v2163
        %2428 = vmatpush1.msra.mxu0 %v2162
        %2429 = vmatprep.subr.mxu0 %v2171
        %2430 = vmatpush1.msra.mxu0 %v2170
        %2431 = vmatprep.subr.mxu0 %v2179
        %2432 = vmatpush1.msra.mxu0 %v2178
        %2433 = vmatprep.subr.mxu0 %v2187
        %2434 = vmatpush1.msra.mxu0 %v2186
        %2435 = vmatprep.subr.mxu0 %v2195
        %2436 = vmatpush1.msra.mxu0 %v2194
        %2437 = vmatprep.subr.mxu0 %v2203
        %2438 = vmatpush1.msra.mxu0 %v2202
        %2439 = vmatprep.subr.mxu0 %v2211
        %2440 = vmatpush1.msra.mxu0 %v2210
        %2441 = vmatprep.subr.mxu0 %v2219
        %2442 = vmatpush1.msra.mxu0 %v2218
        %2443 = vmatprep.subr.mxu0 %v2227
        %2444 = vmatpush1.msra.mxu0 %v2226
        %2445 = vmatprep.subr.mxu0 %v2235
        %2446 = vmatpush1.msra.mxu0 %v2234
        %2447 = vmatprep.subr.mxu0 %v2243
        %2448 = vmatpush1.msra.mxu0 %v2242
        %2449 = vmatprep.subr.mxu0 %v2251
        %2450 = vmatpush1.msra.mxu0 %v2250
        %2451 = vmatprep.subr.mxu0 %v2259
        %2452 = vmatpush1.msra.mxu0 %v2258
        %2453 = vmatprep.subr.mxu0 %v2267
        %2454 = vmatpush1.msra.mxu0 %v2266
        %2455 = vmatprep.subr.mxu0 %v2275
        %2456 = vmatpush1.msra.mxu0 %v2274
        %2457 = vmatprep.mubr.f32.mxu0 %v2023
        %2458 = vmatmul.mubr.f32.gmra.mrb[0].mxu0 %v2022
        %v2459 = vpop.f32.mrb[0].mxu0
        %v2460 = vadd.f32 %v2293, %v2459
        %v2461 = vpop.f32.mrb[0].mxu0
        %v2462 = vadd.f32 %v2297, %v2461
        %2463 = vdwg.mxu0
        %2464 = vmatprep.subr.mxu0 %v2029
        %2465 = vmatpush1.msra.mxu0 %v2028
        %2466 = vmatprep.subr.mxu0 %v2037
        %2467 = vmatpush1.msra.mxu0 %v2036
        %2468 = vmatprep.subr.mxu0 %v2045
        %2469 = vmatpush1.msra.mxu0 %v2044
        %2470 = vmatprep.subr.mxu0 %v2053
        %2471 = vmatpush1.msra.mxu0 %v2052
        %2472 = vmatprep.subr.mxu0 %v2061
        %2473 = vmatpush1.msra.mxu0 %v2060
        %2474 = vmatprep.subr.mxu0 %v2069
        %2475 = vmatpush1.msra.mxu0 %v2068
        %2476 = vmatprep.subr.mxu0 %v2077
        %2477 = vmatpush1.msra.mxu0 %v2076
        %2478 = vmatprep.subr.mxu0 %v2085
        %2479 = vmatpush1.msra.mxu0 %v2084
        %2480 = vmatprep.subr.mxu0 %v2093
        %2481 = vmatpush1.msra.mxu0 %v2092
        %2482 = vmatprep.subr.mxu0 %v2101
        %2483 = vmatpush1.msra.mxu0 %v2100
        %2484 = vmatprep.subr.mxu0 %v2109
        %2485 = vmatpush1.msra.mxu0 %v2108
        %2486 = vmatprep.subr.mxu0 %v2117
        %2487 = vmatpush1.msra.mxu0 %v2116
        %2488 = vmatprep.subr.mxu0 %v2125
        %2489 = vmatpush1.msra.mxu0 %v2124
        %2490 = vmatprep.subr.mxu0 %v2133
        %2491 = vmatpush1.msra.mxu0 %v2132
        %2492 = vmatprep.subr.mxu0 %v2141
        %2493 = vmatpush1.msra.mxu0 %v2140
        %2494 = vmatprep.subr.mxu0 %v2149
        %2495 = vmatpush1.msra.mxu0 %v2148
        %2496 = vmatprep.subr.mxu0 %v2157
        %2497 = vmatpush1.msra.mxu0 %v2156
        %2498 = vmatprep.subr.mxu0 %v2165
        %2499 = vmatpush1.msra.mxu0 %v2164
        %2500 = vmatprep.subr.mxu0 %v2173
        %2501 = vmatpush1.msra.mxu0 %v2172
        %2502 = vmatprep.subr.mxu0 %v2181
        %2503 = vmatpush1.msra.mxu0 %v2180
        %2504 = vmatprep.subr.mxu0 %v2189
        %2505 = vmatpush1.msra.mxu0 %v2188
        %2506 = vmatprep.subr.mxu0 %v2197
        %2507 = vmatpush1.msra.mxu0 %v2196
        %2508 = vmatprep.subr.mxu0 %v2205
        %2509 = vmatpush1.msra.mxu0 %v2204
        %2510 = vmatprep.subr.mxu0 %v2213
        %2511 = vmatpush1.msra.mxu0 %v2212
        %2512 = vmatprep.subr.mxu0 %v2221
        %2513 = vmatpush1.msra.mxu0 %v2220
        %2514 = vmatprep.subr.mxu0 %v2229
        %2515 = vmatpush1.msra.mxu0 %v2228
        %2516 = vmatprep.subr.mxu0 %v2237
        %2517 = vmatpush1.msra.mxu0 %v2236
        %2518 = vmatprep.subr.mxu0 %v2245
        %2519 = vmatpush1.msra.mxu0 %v2244
        %2520 = vmatprep.subr.mxu0 %v2253
        %2521 = vmatpush1.msra.mxu0 %v2252
        %2522 = vmatprep.subr.mxu0 %v2261
        %2523 = vmatpush1.msra.mxu0 %v2260
        %2524 = vmatprep.subr.mxu0 %v2269
        %2525 = vmatpush1.msra.mxu0 %v2268
        %2526 = vmatprep.subr.mxu0 %v2277
        %2527 = vmatpush1.msra.mxu0 %v2276
        %2528 = vmatprep.mubr.f32.mxu0 %v2023
        %2529 = vmatmul.mubr.f32.gmra.mrb[0].mxu0 %v2022
        %v2530 = vpop.f32.mrb[0].mxu0
        %v2531 = vadd.f32 %v2301, %v2530
        %v2532 = vpop.f32.mrb[0].mxu0
        %v2533 = vadd.f32 %v2305, %v2532
        %2534 = vdwg.mxu0
        %2535 = vmatprep.subr.mxu0 %v2031
        %2536 = vmatpush1.msra.mxu0 %v2030
        %2537 = vmatprep.subr.mxu0 %v2039
        %2538 = vmatpush1.msra.mxu0 %v2038
        %2539 = vmatprep.subr.mxu0 %v2047
        %2540 = vmatpush1.msra.mxu0 %v2046
        %2541 = vmatprep.subr.mxu0 %v2055
        %2542 = vmatpush1.msra.mxu0 %v2054
        %2543 = vmatprep.subr.mxu0 %v2063
        %2544 = vmatpush1.msra.mxu0 %v2062
        %2545 = vmatprep.subr.mxu0 %v2071
        %2546 = vmatpush1.msra.mxu0 %v2070
        %2547 = vmatprep.subr.mxu0 %v2079
        %2548 = vmatpush1.msra.mxu0 %v2078
        %2549 = vmatprep.subr.mxu0 %v2087
        %2550 = vmatpush1.msra.mxu0 %v2086
        %2551 = vmatprep.subr.mxu0 %v2095
        %2552 = vmatpush1.msra.mxu0 %v2094
        %2553 = vmatprep.subr.mxu0 %v2103
        %2554 = vmatpush1.msra.mxu0 %v2102
        %2555 = vmatprep.subr.mxu0 %v2111
        %2556 = vmatpush1.msra.mxu0 %v2110
        %2557 = vmatprep.subr.mxu0 %v2119
        %2558 = vmatpush1.msra.mxu0 %v2118
        %2559 = vmatprep.subr.mxu0 %v2127
        %2560 = vmatpush1.msra.mxu0 %v2126
        %2561 = vmatprep.subr.mxu0 %v2135
        %2562 = vmatpush1.msra.mxu0 %v2134
        %2563 = vmatprep.subr.mxu0 %v2143
        %2564 = vmatpush1.msra.mxu0 %v2142
        %2565 = vmatprep.subr.mxu0 %v2151
        %2566 = vmatpush1.msra.mxu0 %v2150
        %2567 = vmatprep.subr.mxu0 %v2159
        %2568 = vmatpush1.msra.mxu0 %v2158
        %2569 = vmatprep.subr.mxu0 %v2167
        %2570 = vmatpush1.msra.mxu0 %v2166
        %2571 = vmatprep.subr.mxu0 %v2175
        %2572 = vmatpush1.msra.mxu0 %v2174
        %2573 = vmatprep.subr.mxu0 %v2183
        %2574 = vmatpush1.msra.mxu0 %v2182
        %2575 = vmatprep.subr.mxu0 %v2191
        %2576 = vmatpush1.msra.mxu0 %v2190
        %2577 = vmatprep.subr.mxu0 %v2199
        %2578 = vmatpush1.msra.mxu0 %v2198
        %2579 = vmatprep.subr.mxu0 %v2207
        %2580 = vmatpush1.msra.mxu0 %v2206
        %2581 = vmatprep.subr.mxu0 %v2215
        %2582 = vmatpush1.msra.mxu0 %v2214
        %2583 = vmatprep.subr.mxu0 %v2223
        %2584 = vmatpush1.msra.mxu0 %v2222
        %2585 = vmatprep.subr.mxu0 %v2231
        %2586 = vmatpush1.msra.mxu0 %v2230
        %2587 = vmatprep.subr.mxu0 %v2239
        %2588 = vmatpush1.msra.mxu0 %v2238
        %2589 = vmatprep.subr.mxu0 %v2247
        %2590 = vmatpush1.msra.mxu0 %v2246
        %2591 = vmatprep.subr.mxu0 %v2255
        %2592 = vmatpush1.msra.mxu0 %v2254
        %2593 = vmatprep.subr.mxu0 %v2263
        %2594 = vmatpush1.msra.mxu0 %v2262
        %2595 = vmatprep.subr.mxu0 %v2271
        %2596 = vmatpush1.msra.mxu0 %v2270
        %2597 = vmatprep.subr.mxu0 %v2279
        %2598 = vmatpush1.msra.mxu0 %v2278
        %2599 = vmatprep.mubr.f32.mxu0 %v2023
        %2600 = vmatmul.mubr.f32.gmra.mrb[0].mxu0 %v2022
        %v2601 = vpop.f32.mrb[0].mxu0
        %v2602 = vadd.f32 %v2309, %v2601
        %v2603 = vpop.f32.mrb[0].mxu0
        %v2604 = vadd.f32 %v2313, %v2603
        %2605 = vdwg.mxu0
        %v2606 = vmax.f32 %v2389, 0.0
        %v2607 = vmax.f32 %v2391, 0.0
        %v2608 = vmax.f32 %v2460, 0.0
        %v2609 = vmax.f32 %v2462, 0.0
        %v2610 = vmax.f32 %v2531, 0.0
        %v2611 = vmax.f32 %v2533, 0.0
        %v2612 = vmax.f32 %v2602, 0.0
        %v2613 = vmax.f32 %v2604, 0.0
        %v2614 = vld [vmem:[#allocation10] sm:$0xff]
        %v2615 = vld [vmem:[#allocation10 + $0x8] sm:$0xff]
        %v2616 = vld [vmem:[#allocation10 + $0x10] sm:$0xff]
        %v2617 = vld [vmem:[#allocation10 + $0x18] sm:$0xff]
        %v2618 = vld [vmem:[#allocation10 + $0x20] sm:$0xff]
        %v2619 = vld [vmem:[#allocation10 + $0x28] sm:$0xff]
        %v2620 = vld [vmem:[#allocation10 + $0x30] sm:$0xff]
        %v2621 = vld [vmem:[#allocation10 + $0x38] sm:$0xff]
        %v2622 = vld [vmem:[#allocation10 + $0x40] sm:$0xff]
        %v2623 = vld [vmem:[#allocation10 + $0x48] sm:$0xff]
        %v2624 = vld [vmem:[#allocation10 + $0x50] sm:$0xff]
        %v2625 = vld [vmem:[#allocation10 + $0x58] sm:$0xff]
        %v2626 = vld [vmem:[#allocation10 + $0x60] sm:$0xff]
        %v2627 = vld [vmem:[#allocation10 + $0x68] sm:$0xff]
        %v2628 = vld [vmem:[#allocation10 + $0x70] sm:$0xff]
        %v2629 = vld [vmem:[#allocation10 + $0x78] sm:$0xff]
        %v2630 = vld [vmem:[#allocation10 + $0x80] sm:$0xff]
        %v2631 = vld [vmem:[#allocation10 + $0x88] sm:$0xff]
        %v2632 = vld [vmem:[#allocation10 + $0x90] sm:$0xff]
        %v2633 = vld [vmem:[#allocation10 + $0x98] sm:$0xff]
        %v2634 = vld [vmem:[#allocation10 + $0xa0] sm:$0xff]
        %v2635 = vld [vmem:[#allocation10 + $0xa8] sm:$0xff]
        %v2636 = vld [vmem:[#allocation10 + $0xb0] sm:$0xff]
        %v2637 = vld [vmem:[#allocation10 + $0xb8] sm:$0xff]
        %v2638 = vld [vmem:[#allocation10 + $0xc0] sm:$0xff]
        %v2639 = vld [vmem:[#allocation10 + $0xc8] sm:$0xff]
        %v2640 = vld [vmem:[#allocation10 + $0xd0] sm:$0xff]
        %v2641 = vld [vmem:[#allocation10 + $0xd8] sm:$0xff]
        %v2642 = vld [vmem:[#allocation10 + $0xe0] sm:$0xff]
        %v2643 = vld [vmem:[#allocation10 + $0xe8] sm:$0xff]
        %v2644 = vld [vmem:[#allocation10 + $0xf0] sm:$0xff]
        %v2645 = vld [vmem:[#allocation10 + $0xf8] sm:$0xff]
        %v2646 = vld [vmem:[#allocation10 + $0x100] sm:$0xff]
        %v2647 = vld [vmem:[#allocation10 + $0x108] sm:$0xff]
        %v2648 = vld [vmem:[#allocation10 + $0x110] sm:$0xff]
        %v2649 = vld [vmem:[#allocation10 + $0x118] sm:$0xff]
        %v2650 = vld [vmem:[#allocation10 + $0x120] sm:$0xff]
        %v2651 = vld [vmem:[#allocation10 + $0x128] sm:$0xff]
        %v2652 = vld [vmem:[#allocation10 + $0x130] sm:$0xff]
        %v2653 = vld [vmem:[#allocation10 + $0x138] sm:$0xff]
        %v2654 = vld [vmem:[#allocation10 + $0x140] sm:$0xff]
        %v2655 = vld [vmem:[#allocation10 + $0x148] sm:$0xff]
        %v2656 = vld [vmem:[#allocation10 + $0x150] sm:$0xff]
        %v2657 = vld [vmem:[#allocation10 + $0x158] sm:$0xff]
        %v2658 = vld [vmem:[#allocation10 + $0x160] sm:$0xff]
        %v2659 = vld [vmem:[#allocation10 + $0x168] sm:$0xff]
        %v2660 = vld [vmem:[#allocation10 + $0x170] sm:$0xff]
        %v2661 = vld [vmem:[#allocation10 + $0x178] sm:$0xff]
        %v2662 = vld [vmem:[#allocation10 + $0x180] sm:$0xff]
        %v2663 = vld [vmem:[#allocation10 + $0x188] sm:$0xff]
        %v2664 = vld [vmem:[#allocation10 + $0x190] sm:$0xff]
        %v2665 = vld [vmem:[#allocation10 + $0x198] sm:$0xff]
        %v2666 = vld [vmem:[#allocation10 + $0x1a0] sm:$0xff]
        %v2667 = vld [vmem:[#allocation10 + $0x1a8] sm:$0xff]
        %v2668 = vld [vmem:[#allocation10 + $0x1b0] sm:$0xff]
        %v2669 = vld [vmem:[#allocation10 + $0x1b8] sm:$0xff]
        %v2670 = vld [vmem:[#allocation10 + $0x1c0] sm:$0xff]
        %v2671 = vld [vmem:[#allocation10 + $0x1c8] sm:$0xff]
        %v2672 = vld [vmem:[#allocation10 + $0x1d0] sm:$0xff]
        %v2673 = vld [vmem:[#allocation10 + $0x1d8] sm:$0xff]
        %v2674 = vld [vmem:[#allocation10 + $0x1e0] sm:$0xff]
        %v2675 = vld [vmem:[#allocation10 + $0x1e8] sm:$0xff]
        %v2676 = vld [vmem:[#allocation10 + $0x1f0] sm:$0xff]
        %v2677 = vld [vmem:[#allocation10 + $0x1f8] sm:$0xff]
        %v2678 = vld [vmem:[#allocation10 + $0x200] sm:$0xff]
        %v2679 = vld [vmem:[#allocation10 + $0x208] sm:$0xff]
        %v2680 = vld [vmem:[#allocation10 + $0x210] sm:$0xff]
        %v2681 = vld [vmem:[#allocation10 + $0x218] sm:$0xff]
        %v2682 = vld [vmem:[#allocation10 + $0x220] sm:$0xff]
        %v2683 = vld [vmem:[#allocation10 + $0x228] sm:$0xff]
        %v2684 = vld [vmem:[#allocation10 + $0x230] sm:$0xff]
        %v2685 = vld [vmem:[#allocation10 + $0x238] sm:$0xff]
        %v2686 = vld [vmem:[#allocation10 + $0x240] sm:$0xff]
        %v2687 = vld [vmem:[#allocation10 + $0x248] sm:$0xff]
        %v2688 = vld [vmem:[#allocation10 + $0x250] sm:$0xff]
        %v2689 = vld [vmem:[#allocation10 + $0x258] sm:$0xff]
        %v2690 = vld [vmem:[#allocation10 + $0x260] sm:$0xff]
        %v2691 = vld [vmem:[#allocation10 + $0x268] sm:$0xff]
        %v2692 = vld [vmem:[#allocation10 + $0x270] sm:$0xff]
        %v2693 = vld [vmem:[#allocation10 + $0x278] sm:$0xff]
        %v2694 = vld [vmem:[#allocation10 + $0x280] sm:$0xff]
        %v2695 = vld [vmem:[#allocation10 + $0x288] sm:$0xff]
        %v2696 = vld [vmem:[#allocation10 + $0x290] sm:$0xff]
        %v2697 = vld [vmem:[#allocation10 + $0x298] sm:$0xff]
        %v2698 = vld [vmem:[#allocation10 + $0x2a0] sm:$0xff]
        %v2699 = vld [vmem:[#allocation10 + $0x2a8] sm:$0xff]
        %v2700 = vld [vmem:[#allocation10 + $0x2b0] sm:$0xff]
        %v2701 = vld [vmem:[#allocation10 + $0x2b8] sm:$0xff]
        %v2702 = vld [vmem:[#allocation10 + $0x2c0] sm:$0xff]
        %v2703 = vld [vmem:[#allocation10 + $0x2c8] sm:$0xff]
        %v2704 = vld [vmem:[#allocation10 + $0x2d0] sm:$0xff]
        %v2705 = vld [vmem:[#allocation10 + $0x2d8] sm:$0xff]
        %v2706 = vld [vmem:[#allocation10 + $0x2e0] sm:$0xff]
        %v2707 = vld [vmem:[#allocation10 + $0x2e8] sm:$0xff]
        %v2708 = vld [vmem:[#allocation10 + $0x2f0] sm:$0xff]
        %v2709 = vld [vmem:[#allocation10 + $0x2f8] sm:$0xff]
        %v2710 = vld [vmem:[#allocation10 + $0x300] sm:$0xff]
        %v2711 = vld [vmem:[#allocation10 + $0x308] sm:$0xff]
        %v2712 = vld [vmem:[#allocation10 + $0x310] sm:$0xff]
        %v2713 = vld [vmem:[#allocation10 + $0x318] sm:$0xff]
        %v2714 = vld [vmem:[#allocation10 + $0x320] sm:$0xff]
        %v2715 = vld [vmem:[#allocation10 + $0x328] sm:$0xff]
        %v2716 = vld [vmem:[#allocation10 + $0x330] sm:$0xff]
        %v2717 = vld [vmem:[#allocation10 + $0x338] sm:$0xff]
        %v2718 = vld [vmem:[#allocation10 + $0x340] sm:$0xff]
        %v2719 = vld [vmem:[#allocation10 + $0x348] sm:$0xff]
        %v2720 = vld [vmem:[#allocation10 + $0x350] sm:$0xff]
        %v2721 = vld [vmem:[#allocation10 + $0x358] sm:$0xff]
        %v2722 = vld [vmem:[#allocation10 + $0x360] sm:$0xff]
        %v2723 = vld [vmem:[#allocation10 + $0x368] sm:$0xff]
        %v2724 = vld [vmem:[#allocation10 + $0x370] sm:$0xff]
        %v2725 = vld [vmem:[#allocation10 + $0x378] sm:$0xff]
        %v2726 = vld [vmem:[#allocation10 + $0x380] sm:$0xff]
        %v2727 = vld [vmem:[#allocation10 + $0x388] sm:$0xff]
        %v2728 = vld [vmem:[#allocation10 + $0x390] sm:$0xff]
        %v2729 = vld [vmem:[#allocation10 + $0x398] sm:$0xff]
        %v2730 = vld [vmem:[#allocation10 + $0x3a0] sm:$0xff]
        %v2731 = vld [vmem:[#allocation10 + $0x3a8] sm:$0xff]
        %v2732 = vld [vmem:[#allocation10 + $0x3b0] sm:$0xff]
        %v2733 = vld [vmem:[#allocation10 + $0x3b8] sm:$0xff]
        %v2734 = vld [vmem:[#allocation10 + $0x3c0] sm:$0xff]
        %v2735 = vld [vmem:[#allocation10 + $0x3c8] sm:$0xff]
        %v2736 = vld [vmem:[#allocation10 + $0x3d0] sm:$0xff]
        %v2737 = vld [vmem:[#allocation10 + $0x3d8] sm:$0xff]
        %v2738 = vld [vmem:[#allocation10 + $0x3e0] sm:$0xff]
        %v2739 = vld [vmem:[#allocation10 + $0x3e8] sm:$0xff]
        %v2740 = vld [vmem:[#allocation10 + $0x3f0] sm:$0xff]
        %v2741 = vld [vmem:[#allocation10 + $0x3f8] sm:$0xff]
        %v2742 = vld [vmem:[#allocation10 + $0x400] sm:$0xff]
        %v2743 = vld [vmem:[#allocation10 + $0x408] sm:$0xff]
        %v2744 = vld [vmem:[#allocation10 + $0x410] sm:$0xff]
        %v2745 = vld [vmem:[#allocation10 + $0x418] sm:$0xff]
        %v2746 = vld [vmem:[#allocation10 + $0x420] sm:$0xff]
        %v2747 = vld [vmem:[#allocation10 + $0x428] sm:$0xff]
        %v2748 = vld [vmem:[#allocation10 + $0x430] sm:$0xff]
        %v2749 = vld [vmem:[#allocation10 + $0x438] sm:$0xff]
        %v2750 = vld [vmem:[#allocation10 + $0x440] sm:$0xff]
        %v2751 = vld [vmem:[#allocation10 + $0x448] sm:$0xff]
        %v2752 = vld [vmem:[#allocation10 + $0x450] sm:$0xff]
        %v2753 = vld [vmem:[#allocation10 + $0x458] sm:$0xff]
        %v2754 = vld [vmem:[#allocation10 + $0x460] sm:$0xff]
        %v2755 = vld [vmem:[#allocation10 + $0x468] sm:$0xff]
        %v2756 = vld [vmem:[#allocation10 + $0x470] sm:$0xff]
        %v2757 = vld [vmem:[#allocation10 + $0x478] sm:$0xff]
        %v2758 = vld [vmem:[#allocation10 + $0x480] sm:$0xff]
        %v2759 = vld [vmem:[#allocation10 + $0x488] sm:$0xff]
        %v2760 = vld [vmem:[#allocation10 + $0x490] sm:$0xff]
        %v2761 = vld [vmem:[#allocation10 + $0x498] sm:$0xff]
        %v2762 = vld [vmem:[#allocation10 + $0x4a0] sm:$0xff]
        %v2763 = vld [vmem:[#allocation10 + $0x4a8] sm:$0xff]
        %v2764 = vld [vmem:[#allocation10 + $0x4b0] sm:$0xff]
        %v2765 = vld [vmem:[#allocation10 + $0x4b8] sm:$0xff]
        %v2766 = vld [vmem:[#allocation10 + $0x4c0] sm:$0xff]
        %v2767 = vld [vmem:[#allocation10 + $0x4c8] sm:$0xff]
        %v2768 = vld [vmem:[#allocation10 + $0x4d0] sm:$0xff]
        %v2769 = vld [vmem:[#allocation10 + $0x4d8] sm:$0xff]
        %v2770 = vld [vmem:[#allocation10 + $0x4e0] sm:$0xff]
        %v2771 = vld [vmem:[#allocation10 + $0x4e8] sm:$0xff]
        %v2772 = vld [vmem:[#allocation10 + $0x4f0] sm:$0xff]
        %v2773 = vld [vmem:[#allocation10 + $0x4f8] sm:$0xff]
        %v2774 = vld [vmem:[#allocation10 + $0x500] sm:$0xff]
        %v2775 = vld [vmem:[#allocation10 + $0x508] sm:$0xff]
        %v2776 = vld [vmem:[#allocation10 + $0x510] sm:$0xff]
        %v2777 = vld [vmem:[#allocation10 + $0x518] sm:$0xff]
        %v2778 = vld [vmem:[#allocation10 + $0x520] sm:$0xff]
        %v2779 = vld [vmem:[#allocation10 + $0x528] sm:$0xff]
        %v2780 = vld [vmem:[#allocation10 + $0x530] sm:$0xff]
        %v2781 = vld [vmem:[#allocation10 + $0x538] sm:$0xff]
        %v2782 = vld [vmem:[#allocation10 + $0x540] sm:$0xff]
        %v2783 = vld [vmem:[#allocation10 + $0x548] sm:$0xff]
        %v2784 = vld [vmem:[#allocation10 + $0x550] sm:$0xff]
        %v2785 = vld [vmem:[#allocation10 + $0x558] sm:$0xff]
        %v2786 = vld [vmem:[#allocation10 + $0x560] sm:$0xff]
        %v2787 = vld [vmem:[#allocation10 + $0x568] sm:$0xff]
        %v2788 = vld [vmem:[#allocation10 + $0x570] sm:$0xff]
        %v2789 = vld [vmem:[#allocation10 + $0x578] sm:$0xff]
        %v2790 = vld [vmem:[#allocation10 + $0x580] sm:$0xff]
        %v2791 = vld [vmem:[#allocation10 + $0x588] sm:$0xff]
        %v2792 = vld [vmem:[#allocation10 + $0x590] sm:$0xff]
        %v2793 = vld [vmem:[#allocation10 + $0x598] sm:$0xff]
        %v2794 = vld [vmem:[#allocation10 + $0x5a0] sm:$0xff]
        %v2795 = vld [vmem:[#allocation10 + $0x5a8] sm:$0xff]
        %v2796 = vld [vmem:[#allocation10 + $0x5b0] sm:$0xff]
        %v2797 = vld [vmem:[#allocation10 + $0x5b8] sm:$0xff]
        %v2798 = vld [vmem:[#allocation10 + $0x5c0] sm:$0xff]
        %v2799 = vld [vmem:[#allocation10 + $0x5c8] sm:$0xff]
        %v2800 = vld [vmem:[#allocation10 + $0x5d0] sm:$0xff]
        %v2801 = vld [vmem:[#allocation10 + $0x5d8] sm:$0xff]
        %v2802 = vld [vmem:[#allocation10 + $0x5e0] sm:$0xff]
        %v2803 = vld [vmem:[#allocation10 + $0x5e8] sm:$0xff]
        %v2804 = vld [vmem:[#allocation10 + $0x5f0] sm:$0xff]
        %v2805 = vld [vmem:[#allocation10 + $0x5f8] sm:$0xff]
        %v2806 = vld [vmem:[#allocation10 + $0x600] sm:$0xff]
        %v2807 = vld [vmem:[#allocation10 + $0x608] sm:$0xff]
        %v2808 = vld [vmem:[#allocation10 + $0x610] sm:$0xff]
        %v2809 = vld [vmem:[#allocation10 + $0x618] sm:$0xff]
        %v2810 = vld [vmem:[#allocation10 + $0x620] sm:$0xff]
        %v2811 = vld [vmem:[#allocation10 + $0x628] sm:$0xff]
        %v2812 = vld [vmem:[#allocation10 + $0x630] sm:$0xff]
        %v2813 = vld [vmem:[#allocation10 + $0x638] sm:$0xff]
        %v2814 = vld [vmem:[#allocation10 + $0x640] sm:$0xff]
        %v2815 = vld [vmem:[#allocation10 + $0x648] sm:$0xff]
        %v2816 = vld [vmem:[#allocation10 + $0x650] sm:$0xff]
        %v2817 = vld [vmem:[#allocation10 + $0x658] sm:$0xff]
        %v2818 = vld [vmem:[#allocation10 + $0x660] sm:$0xff]
        %v2819 = vld [vmem:[#allocation10 + $0x668] sm:$0xff]
        %v2820 = vld [vmem:[#allocation10 + $0x670] sm:$0xff]
        %v2821 = vld [vmem:[#allocation10 + $0x678] sm:$0xff]
        %v2822 = vld [vmem:[#allocation10 + $0x680] sm:$0xff]
        %v2823 = vld [vmem:[#allocation10 + $0x688] sm:$0xff]
        %v2824 = vld [vmem:[#allocation10 + $0x690] sm:$0xff]
        %v2825 = vld [vmem:[#allocation10 + $0x698] sm:$0xff]
        %v2826 = vld [vmem:[#allocation10 + $0x6a0] sm:$0xff]
        %v2827 = vld [vmem:[#allocation10 + $0x6a8] sm:$0xff]
        %v2828 = vld [vmem:[#allocation10 + $0x6b0] sm:$0xff]
        %v2829 = vld [vmem:[#allocation10 + $0x6b8] sm:$0xff]
        %v2830 = vld [vmem:[#allocation10 + $0x6c0] sm:$0xff]
        %v2831 = vld [vmem:[#allocation10 + $0x6c8] sm:$0xff]
        %v2832 = vld [vmem:[#allocation10 + $0x6d0] sm:$0xff]
        %v2833 = vld [vmem:[#allocation10 + $0x6d8] sm:$0xff]
        %v2834 = vld [vmem:[#allocation10 + $0x6e0] sm:$0xff]
        %v2835 = vld [vmem:[#allocation10 + $0x6e8] sm:$0xff]
        %v2836 = vld [vmem:[#allocation10 + $0x6f0] sm:$0xff]
        %v2837 = vld [vmem:[#allocation10 + $0x6f8] sm:$0xff]
        %v2838 = vld [vmem:[#allocation10 + $0x700] sm:$0xff]
        %v2839 = vld [vmem:[#allocation10 + $0x708] sm:$0xff]
        %v2840 = vld [vmem:[#allocation10 + $0x710] sm:$0xff]
        %v2841 = vld [vmem:[#allocation10 + $0x718] sm:$0xff]
        %v2842 = vld [vmem:[#allocation10 + $0x720] sm:$0xff]
        %v2843 = vld [vmem:[#allocation10 + $0x728] sm:$0xff]
        %v2844 = vld [vmem:[#allocation10 + $0x730] sm:$0xff]
        %v2845 = vld [vmem:[#allocation10 + $0x738] sm:$0xff]
        %v2846 = vld [vmem:[#allocation10 + $0x740] sm:$0xff]
        %v2847 = vld [vmem:[#allocation10 + $0x748] sm:$0xff]
        %v2848 = vld [vmem:[#allocation10 + $0x750] sm:$0xff]
        %v2849 = vld [vmem:[#allocation10 + $0x758] sm:$0xff]
        %v2850 = vld [vmem:[#allocation10 + $0x760] sm:$0xff]
        %v2851 = vld [vmem:[#allocation10 + $0x768] sm:$0xff]
        %v2852 = vld [vmem:[#allocation10 + $0x770] sm:$0xff]
        %v2853 = vld [vmem:[#allocation10 + $0x778] sm:$0xff]
        %v2854 = vld [vmem:[#allocation10 + $0x780] sm:$0xff]
        %v2855 = vld [vmem:[#allocation10 + $0x788] sm:$0xff]
        %v2856 = vld [vmem:[#allocation10 + $0x790] sm:$0xff]
        %v2857 = vld [vmem:[#allocation10 + $0x798] sm:$0xff]
        %v2858 = vld [vmem:[#allocation10 + $0x7a0] sm:$0xff]
        %v2859 = vld [vmem:[#allocation10 + $0x7a8] sm:$0xff]
        %v2860 = vld [vmem:[#allocation10 + $0x7b0] sm:$0xff]
        %v2861 = vld [vmem:[#allocation10 + $0x7b8] sm:$0xff]
        %v2862 = vld [vmem:[#allocation10 + $0x7c0] sm:$0xff]
        %v2863 = vld [vmem:[#allocation10 + $0x7c8] sm:$0xff]
        %v2864 = vld [vmem:[#allocation10 + $0x7d0] sm:$0xff]
        %v2865 = vld [vmem:[#allocation10 + $0x7d8] sm:$0xff]
        %v2866 = vld [vmem:[#allocation10 + $0x7e0] sm:$0xff]
        %v2867 = vld [vmem:[#allocation10 + $0x7e8] sm:$0xff]
        %v2868 = vld [vmem:[#allocation10 + $0x7f0] sm:$0xff]
        %v2869 = vld [vmem:[#allocation10 + $0x7f8] sm:$0xff]
        %v2870 = vld [vmem:[%s11] sm:$0x3]
        %v2872 = vlaneseq
        %v2873 = vshrl.u32 %v2872, 7
        %v2874 = vsub.s32 0, %v2873
        %v2875 = vrot.slane %v2870, %v2874
        %v2876 = vlaneseq
        %v2877 = vshrl.u32 %v2876, 7
        %v2878 = vsub.s32 1, %v2877
        %v2879 = vrot.slane %v2870, %v2878
        %2882 = vmatprep.subr.mxu0 %v2615
        %2883 = vmatpush1.msra.mxu0 %v2614
        %2884 = vmatprep.subr.mxu0 %v2617
        %2885 = vmatpush1.msra.mxu0 %v2616
        %2886 = vmatprep.subr.mxu0 %v2619
        %2887 = vmatpush1.msra.mxu0 %v2618
        %2888 = vmatprep.subr.mxu0 %v2621
        %2889 = vmatpush1.msra.mxu0 %v2620
        %2890 = vmatprep.subr.mxu0 %v2623
        %2891 = vmatpush1.msra.mxu0 %v2622
        %2892 = vmatprep.subr.mxu0 %v2625
        %2893 = vmatpush1.msra.mxu0 %v2624
        %2894 = vmatprep.subr.mxu0 %v2627
        %2895 = vmatpush1.msra.mxu0 %v2626
        %2896 = vmatprep.subr.mxu0 %v2629
        %2897 = vmatpush1.msra.mxu0 %v2628
        %2898 = vmatprep.subr.mxu0 %v2631
        %2899 = vmatpush1.msra.mxu0 %v2630
        %2900 = vmatprep.subr.mxu0 %v2633
        %2901 = vmatpush1.msra.mxu0 %v2632
        %2902 = vmatprep.subr.mxu0 %v2635
        %2903 = vmatpush1.msra.mxu0 %v2634
        %2904 = vmatprep.subr.mxu0 %v2637
        %2905 = vmatpush1.msra.mxu0 %v2636
        %2906 = vmatprep.subr.mxu0 %v2639
        %2907 = vmatpush1.msra.mxu0 %v2638
        %2908 = vmatprep.subr.mxu0 %v2641
        %2909 = vmatpush1.msra.mxu0 %v2640
        %2910 = vmatprep.subr.mxu0 %v2643
        %2911 = vmatpush1.msra.mxu0 %v2642
        %2912 = vmatprep.subr.mxu0 %v2645
        %2913 = vmatpush1.msra.mxu0 %v2644
        %2914 = vmatprep.subr.mxu0 %v2647
        %2915 = vmatpush1.msra.mxu0 %v2646
        %2916 = vmatprep.subr.mxu0 %v2649
        %2917 = vmatpush1.msra.mxu0 %v2648
        %2918 = vmatprep.subr.mxu0 %v2651
        %2919 = vmatpush1.msra.mxu0 %v2650
        %2920 = vmatprep.subr.mxu0 %v2653
        %2921 = vmatpush1.msra.mxu0 %v2652
        %2922 = vmatprep.subr.mxu0 %v2655
        %2923 = vmatpush1.msra.mxu0 %v2654
        %2924 = vmatprep.subr.mxu0 %v2657
        %2925 = vmatpush1.msra.mxu0 %v2656
        %2926 = vmatprep.subr.mxu0 %v2659
        %2927 = vmatpush1.msra.mxu0 %v2658
        %2928 = vmatprep.subr.mxu0 %v2661
        %2929 = vmatpush1.msra.mxu0 %v2660
        %2930 = vmatprep.subr.mxu0 %v2663
        %2931 = vmatpush1.msra.mxu0 %v2662
        %2932 = vmatprep.subr.mxu0 %v2665
        %2933 = vmatpush1.msra.mxu0 %v2664
        %2934 = vmatprep.subr.mxu0 %v2667
        %2935 = vmatpush1.msra.mxu0 %v2666
        %2936 = vmatprep.subr.mxu0 %v2669
        %2937 = vmatpush1.msra.mxu0 %v2668
        %2938 = vmatprep.subr.mxu0 %v2671
        %2939 = vmatpush1.msra.mxu0 %v2670
        %2940 = vmatprep.subr.mxu0 %v2673
        %2941 = vmatpush1.msra.mxu0 %v2672
        %2942 = vmatprep.subr.mxu0 %v2675
        %2943 = vmatpush1.msra.mxu0 %v2674
        %2944 = vmatprep.subr.mxu0 %v2677
        %2945 = vmatpush1.msra.mxu0 %v2676
        %2946 = vmatprep.mubr.f32.mxu0 %v2607
        %2947 = vmatmul.mubr.f32.gmra.mrb[0].mxu0 %v2606
        %v2948 = vpop.f32.mrb[0].mxu0
        %v2949 = vadd.f32 %v2875, %v2948
        %v2950 = vpop.f32.mrb[0].mxu0
        %v2951 = vadd.f32 %v2879, %v2950
        %2952 = vdwg.mxu0
        %2953 = vmatprep.subr.mxu0 %v2679
        %2954 = vmatpush1.msra.mxu0 %v2678
        %2955 = vmatprep.subr.mxu0 %v2681
        %2956 = vmatpush1.msra.mxu0 %v2680
        %2957 = vmatprep.subr.mxu0 %v2683
        %2958 = vmatpush1.msra.mxu0 %v2682
        %2959 = vmatprep.subr.mxu0 %v2685
        %2960 = vmatpush1.msra.mxu0 %v2684
        %2961 = vmatprep.subr.mxu0 %v2687
        %2962 = vmatpush1.msra.mxu0 %v2686
        %2963 = vmatprep.subr.mxu0 %v2689
        %2964 = vmatpush1.msra.mxu0 %v2688
        %2965 = vmatprep.subr.mxu0 %v2691
        %2966 = vmatpush1.msra.mxu0 %v2690
        %2967 = vmatprep.subr.mxu0 %v2693
        %2968 = vmatpush1.msra.mxu0 %v2692
        %2969 = vmatprep.subr.mxu0 %v2695
        %2970 = vmatpush1.msra.mxu0 %v2694
        %2971 = vmatprep.subr.mxu0 %v2697
        %2972 = vmatpush1.msra.mxu0 %v2696
        %2973 = vmatprep.subr.mxu0 %v2699
        %2974 = vmatpush1.msra.mxu0 %v2698
        %2975 = vmatprep.subr.mxu0 %v2701
        %2976 = vmatpush1.msra.mxu0 %v2700
        %2977 = vmatprep.subr.mxu0 %v2703
        %2978 = vmatpush1.msra.mxu0 %v2702
        %2979 = vmatprep.subr.mxu0 %v2705
        %2980 = vmatpush1.msra.mxu0 %v2704
        %2981 = vmatprep.subr.mxu0 %v2707
        %2982 = vmatpush1.msra.mxu0 %v2706
        %2983 = vmatprep.subr.mxu0 %v2709
        %2984 = vmatpush1.msra.mxu0 %v2708
        %2985 = vmatprep.subr.mxu0 %v2711
        %2986 = vmatpush1.msra.mxu0 %v2710
        %2987 = vmatprep.subr.mxu0 %v2713
        %2988 = vmatpush1.msra.mxu0 %v2712
        %2989 = vmatprep.subr.mxu0 %v2715
        %2990 = vmatpush1.msra.mxu0 %v2714
        %2991 = vmatprep.subr.mxu0 %v2717
        %2992 = vmatpush1.msra.mxu0 %v2716
        %2993 = vmatprep.subr.mxu0 %v2719
        %2994 = vmatpush1.msra.mxu0 %v2718
        %2995 = vmatprep.subr.mxu0 %v2721
        %2996 = vmatpush1.msra.mxu0 %v2720
        %2997 = vmatprep.subr.mxu0 %v2723
        %2998 = vmatpush1.msra.mxu0 %v2722
        %2999 = vmatprep.subr.mxu0 %v2725
        %3000 = vmatpush1.msra.mxu0 %v2724
        %3001 = vmatprep.subr.mxu0 %v2727
        %3002 = vmatpush1.msra.mxu0 %v2726
        %3003 = vmatprep.subr.mxu0 %v2729
        %3004 = vmatpush1.msra.mxu0 %v2728
        %3005 = vmatprep.subr.mxu0 %v2731
        %3006 = vmatpush1.msra.mxu0 %v2730
        %3007 = vmatprep.subr.mxu0 %v2733
        %3008 = vmatpush1.msra.mxu0 %v2732
        %3009 = vmatprep.subr.mxu0 %v2735
        %3010 = vmatpush1.msra.mxu0 %v2734
        %3011 = vmatprep.subr.mxu0 %v2737
        %3012 = vmatpush1.msra.mxu0 %v2736
        %3013 = vmatprep.subr.mxu0 %v2739
        %3014 = vmatpush1.msra.mxu0 %v2738
        %3015 = vmatprep.subr.mxu0 %v2741
        %3016 = vmatpush1.msra.mxu0 %v2740
        %3017 = vmatprep.mubr.f32.mxu0 %v2609
        %3018 = vmatmul.mubr.f32.gmra.mrb[0].mxu0 %v2608
        %v3019 = vpop.f32.mrb[0].mxu0
        %v3020 = vadd.f32 %v2949, %v3019
        %v3021 = vpop.f32.mrb[0].mxu0
        %v3022 = vadd.f32 %v2951, %v3021
        %3023 = vdwg.mxu0
        %3024 = vmatprep.subr.mxu0 %v2743
        %3025 = vmatpush1.msra.mxu0 %v2742
        %3026 = vmatprep.subr.mxu0 %v2745
        %3027 = vmatpush1.msra.mxu0 %v2744
        %3028 = vmatprep.subr.mxu0 %v2747
        %3029 = vmatpush1.msra.mxu0 %v2746
        %3030 = vmatprep.subr.mxu0 %v2749
        %3031 = vmatpush1.msra.mxu0 %v2748
        %3032 = vmatprep.subr.mxu0 %v2751
        %3033 = vmatpush1.msra.mxu0 %v2750
        %3034 = vmatprep.subr.mxu0 %v2753
        %3035 = vmatpush1.msra.mxu0 %v2752
        %3036 = vmatprep.subr.mxu0 %v2755
        %3037 = vmatpush1.msra.mxu0 %v2754
        %3038 = vmatprep.subr.mxu0 %v2757
        %3039 = vmatpush1.msra.mxu0 %v2756
        %3040 = vmatprep.subr.mxu0 %v2759
        %3041 = vmatpush1.msra.mxu0 %v2758
        %3042 = vmatprep.subr.mxu0 %v2761
        %3043 = vmatpush1.msra.mxu0 %v2760
        %3044 = vmatprep.subr.mxu0 %v2763
        %3045 = vmatpush1.msra.mxu0 %v2762
        %3046 = vmatprep.subr.mxu0 %v2765
        %3047 = vmatpush1.msra.mxu0 %v2764
        %3048 = vmatprep.subr.mxu0 %v2767
        %3049 = vmatpush1.msra.mxu0 %v2766
        %3050 = vmatprep.subr.mxu0 %v2769
        %3051 = vmatpush1.msra.mxu0 %v2768
        %3052 = vmatprep.subr.mxu0 %v2771
        %3053 = vmatpush1.msra.mxu0 %v2770
        %3054 = vmatprep.subr.mxu0 %v2773
        %3055 = vmatpush1.msra.mxu0 %v2772
        %3056 = vmatprep.subr.mxu0 %v2775
        %3057 = vmatpush1.msra.mxu0 %v2774
        %3058 = vmatprep.subr.mxu0 %v2777
        %3059 = vmatpush1.msra.mxu0 %v2776
        %3060 = vmatprep.subr.mxu0 %v2779
        %3061 = vmatpush1.msra.mxu0 %v2778
        %3062 = vmatprep.subr.mxu0 %v2781
        %3063 = vmatpush1.msra.mxu0 %v2780
        %3064 = vmatprep.subr.mxu0 %v2783
        %3065 = vmatpush1.msra.mxu0 %v2782
        %3066 = vmatprep.subr.mxu0 %v2785
        %3067 = vmatpush1.msra.mxu0 %v2784
        %3068 = vmatprep.subr.mxu0 %v2787
        %3069 = vmatpush1.msra.mxu0 %v2786
        %3070 = vmatprep.subr.mxu0 %v2789
        %3071 = vmatpush1.msra.mxu0 %v2788
        %3072 = vmatprep.subr.mxu0 %v2791
        %3073 = vmatpush1.msra.mxu0 %v2790
        %3074 = vmatprep.subr.mxu0 %v2793
        %3075 = vmatpush1.msra.mxu0 %v2792
        %3076 = vmatprep.subr.mxu0 %v2795
        %3077 = vmatpush1.msra.mxu0 %v2794
        %3078 = vmatprep.subr.mxu0 %v2797
        %3079 = vmatpush1.msra.mxu0 %v2796
        %3080 = vmatprep.subr.mxu0 %v2799
        %3081 = vmatpush1.msra.mxu0 %v2798
        %3082 = vmatprep.subr.mxu0 %v2801
        %3083 = vmatpush1.msra.mxu0 %v2800
        %3084 = vmatprep.subr.mxu0 %v2803
        %3085 = vmatpush1.msra.mxu0 %v2802
        %3086 = vmatprep.subr.mxu0 %v2805
        %3087 = vmatpush1.msra.mxu0 %v2804
        %3088 = vmatprep.mubr.f32.mxu0 %v2611
        %3089 = vmatmul.mubr.f32.gmra.mrb[0].mxu0 %v2610
        %v3090 = vpop.f32.mrb[0].mxu0
        %v3091 = vadd.f32 %v3020, %v3090
        %v3092 = vpop.f32.mrb[0].mxu0
        %v3093 = vadd.f32 %v3022, %v3092
        %3094 = vdwg.mxu0
        %3095 = vmatprep.subr.mxu0 %v2807
        %3096 = vmatpush1.msra.mxu0 %v2806
        %3097 = vmatprep.subr.mxu0 %v2809
        %3098 = vmatpush1.msra.mxu0 %v2808
        %3099 = vmatprep.subr.mxu0 %v2811
        %3100 = vmatpush1.msra.mxu0 %v2810
        %3101 = vmatprep.subr.mxu0 %v2813
        %3102 = vmatpush1.msra.mxu0 %v2812
        %3103 = vmatprep.subr.mxu0 %v2815
        %3104 = vmatpush1.msra.mxu0 %v2814
        %3105 = vmatprep.subr.mxu0 %v2817
        %3106 = vmatpush1.msra.mxu0 %v2816
        %3107 = vmatprep.subr.mxu0 %v2819
        %3108 = vmatpush1.msra.mxu0 %v2818
        %3109 = vmatprep.subr.mxu0 %v2821
        %3110 = vmatpush1.msra.mxu0 %v2820
        %3111 = vmatprep.subr.mxu0 %v2823
        %3112 = vmatpush1.msra.mxu0 %v2822
        %3113 = vmatprep.subr.mxu0 %v2825
        %3114 = vmatpush1.msra.mxu0 %v2824
        %3115 = vmatprep.subr.mxu0 %v2827
        %3116 = vmatpush1.msra.mxu0 %v2826
        %3117 = vmatprep.subr.mxu0 %v2829
        %3118 = vmatpush1.msra.mxu0 %v2828
        %3119 = vmatprep.subr.mxu0 %v2831
        %3120 = vmatpush1.msra.mxu0 %v2830
        %3121 = vmatprep.subr.mxu0 %v2833
        %3122 = vmatpush1.msra.mxu0 %v2832
        %3123 = vmatprep.subr.mxu0 %v2835
        %3124 = vmatpush1.msra.mxu0 %v2834
        %3125 = vmatprep.subr.mxu0 %v2837
        %3126 = vmatpush1.msra.mxu0 %v2836
        %3127 = vmatprep.subr.mxu0 %v2839
        %3128 = vmatpush1.msra.mxu0 %v2838
        %3129 = vmatprep.subr.mxu0 %v2841
        %3130 = vmatpush1.msra.mxu0 %v2840
        %3131 = vmatprep.subr.mxu0 %v2843
        %3132 = vmatpush1.msra.mxu0 %v2842
        %3133 = vmatprep.subr.mxu0 %v2845
        %3134 = vmatpush1.msra.mxu0 %v2844
        %3135 = vmatprep.subr.mxu0 %v2847
        %3136 = vmatpush1.msra.mxu0 %v2846
        %3137 = vmatprep.subr.mxu0 %v2849
        %3138 = vmatpush1.msra.mxu0 %v2848
        %3139 = vmatprep.subr.mxu0 %v2851
        %3140 = vmatpush1.msra.mxu0 %v2850
        %3141 = vmatprep.subr.mxu0 %v2853
        %3142 = vmatpush1.msra.mxu0 %v2852
        %3143 = vmatprep.subr.mxu0 %v2855
        %3144 = vmatpush1.msra.mxu0 %v2854
        %3145 = vmatprep.subr.mxu0 %v2857
        %3146 = vmatpush1.msra.mxu0 %v2856
        %3147 = vmatprep.subr.mxu0 %v2859
        %3148 = vmatpush1.msra.mxu0 %v2858
        %3149 = vmatprep.subr.mxu0 %v2861
        %3150 = vmatpush1.msra.mxu0 %v2860
        %3151 = vmatprep.subr.mxu0 %v2863
        %3152 = vmatpush1.msra.mxu0 %v2862
        %3153 = vmatprep.subr.mxu0 %v2865
        %3154 = vmatpush1.msra.mxu0 %v2864
        %3155 = vmatprep.subr.mxu0 %v2867
        %3156 = vmatpush1.msra.mxu0 %v2866
        %3157 = vmatprep.subr.mxu0 %v2869
        %3158 = vmatpush1.msra.mxu0 %v2868
        %3159 = vmatprep.mubr.f32.mxu0 %v2613
        %3160 = vmatmul.mubr.f32.gmra.mrb[0].mxu0 %v2612
        %v3161 = vpop.f32.mrb[0].mxu0
        %v3162 = vadd.f32 %v3091, %v3161
        %v3163 = vpop.f32.mrb[0].mxu0
        %v3164 = vadd.f32 %v3093, %v3163
        %3165 = vdwg.mxu0
        %v3166 = vadd.f32 %v1978, %v3162
        %v3167 = vadd.f32 %v1979, %v3164
        %3168 = vst [vmem:[%s487] sm:$0xff] %v3166
        %3169 = vst [vmem:[%s487 + $0x8] sm:$0xff] %v3167
        %s3170 = sand.u32 %s296, 1
        %s3171 = scalar_lea.sflag [#allocation4], %s3170
        %s3172 = sand.u32 %s296, 1
        %s3173 = smul.addr %s3172, 16
        %s3174 = scalar_lea.vmem [#allocation11], %s3173
        // Predicated region
        $region89: #{tpu_custom_call.1} parent=67 // pred_check
          %p3175 = pneg %p306
        $region90: #{tpu_custom_call.1} parent=67 // pred_check_branch
          %3177 = sbr.rel (%p3175) target = $region92
        $region91: #{tpu_custom_call.1} parent=67 // pred_region
          %s3179 = ssub.s32 256, 256
          %3180 = vsyncadd %s3171, %s3179
          %s3181 = smul.addr %s31, 2
          %s3182 = smul.addr %s3181, 128
          %s3183 = scalar_lea.hbm %s12, %s3182
          %s3185 = sshll.u32 %s3174, 4
          %s3186 = int_to_ptr.vmem [resolvable:$true] %s3185
          %3188 = dma.vmem_to_hbm [thread:$0]  %s3186, 256, %s3183, %s3171
        $region92: #{tpu_custom_call.1} parent=67 // pred_fallthru
          _
      $region68: #{tpu_custom_call.1} parent=5 // pred_fallthru
        _
      %p3189 = scmp.le.s32.totalorder 2, %s26
      // Predicated region
      $region93: #{tpu_custom_call.1} parent=5 // pred_check
        %p3190 = pneg %p3189
      $region94: #{tpu_custom_call.1} parent=5 // pred_check_branch
        %3192 = sbr.rel (%p3190) target = $region96
      $region95: #{tpu_custom_call.1} parent=5 // pred_region
        %s3193 = ssub.s32 %s26, 2
        // Predicated region
        $region97: #{tpu_custom_call.1} parent=95 // pred_check
          %p3194 = pneg %p312
        $region98: #{tpu_custom_call.1} parent=95 // pred_check_branch
          %3196 = sbr.rel (%p3194) target = $region100
        $region99: #{tpu_custom_call.1} parent=95 // pred_region
          %s3197 = sand.u32 %s297, 1
          %s3198 = scalar_lea.sflag [#allocation4], %s3197
          %s3199 = sand.u32 %s297, 1
          %s3200 = smul.addr %s3199, 16
          %s3201 = scalar_lea.vmem [#allocation11], %s3200
          %3202 = dma.done %s3198, 256
        $region100: #{tpu_custom_call.1} parent=95 // pred_fallthru
          _
      $region96: #{tpu_custom_call.1} parent=5 // pred_fallthru
        _
    $region6: #{tpu_custom_call.1} parent=1 // loop_footer
      %s30 = sadd.s32 1, %s26
    $region7: #{tpu_custom_call.1} parent=1 // loop_footer_branch
      %25 = sbr.rel target = $region3
    $region8: #{tpu_custom_call.1} parent=1 // loop_exit
      _
    %3203 = vsyncpa [#allocation3], 1
    %s3204 = scalar_lea.sflag [#allocation3], 1
    %3205 = vsyncpa %s3204, 1
    %3206 = vsyncpa [#allocation6], 1
    %3207 = vsyncpa [#allocation9], 1
    %3208 = vsyncpa [#allocation4], 1
    %s3209 = scalar_lea.sflag [#allocation4], 1
    %3210 = vsyncpa %s3209, 1

</llo_original>
